<compile_context>
chip_gen: v6e
topology: v6e:2x2x1
jax: 0.10.0
libtpu: 0.0.40
codegen_flags: <defaults>
</compile_context>

<pallas_src>
import numpy as np
import jax
import jax.numpy as jnp
from jax.experimental import pallas as pl
from jax.experimental.pallas import tpu as pltpu

PH = 13             # pooled height
PW = 13             # pooled width
CO = 16             # conv output channels
NP = 256            # lane width per pool-phase block (>= PW*CO = 208, lane-tile aligned)
NPHASE = 4          # 2 (conv-row offset inside pool window) x 2 (conv-col parity)
KIN = 28            # input image width (columns)
KPAD = 128          # merged tap slab K (4*28 = 112 zero-padded to 128 lanes)
NOUT = 128          # padded fc2 output lanes (only first 10 are real)


# ----------------------------- fused kernel -----------------------------
def fused_cnn_kernel(xt_ref, wb_ref, cb_ref, w1_ref, b1_ref, w2_ref, b2_ref, o_ref):
    # xt_ref : (13, BB, 128) bf16   tap slab, xt[ph, b, r*28+j] = x[b, 2*ph+r, j]
    # wb_ref : (128, 1024)   bf16   merged banded conv weight (one matmul)
    # cb_ref : (1, 256)      f32    conv bias per (pw, channel) lane
    # w1_ref : (13, 256, 64) bf16   fc1 weight regrouped per pooled row ph
    # b1_ref : (1, 64) f32, w2_ref : (64, 128) bf16, b2_ref : (1, 128) f32
    # o_ref  : (BB, 128)     f32    lane-dense output block (cols 10.. are padding)
    BB = o_ref.shape[0]
    M = PH * BB

    xt = xt_ref[...].reshape(M, KPAD)                                   # (M, 128) bf16

    # conv3x3 over both pool phases as ONE MXU matmul, f32 accumulation
    y = jnp.dot(xt, wb_ref[...], preferred_element_type=jnp.float32)   # (M, 1024)

    # 2x2 max-pool = max over the 4 lane-aligned phase blocks; bias + ReLU AFTER the max
    pooled = jnp.maximum(jnp.maximum(y[:, 0:NP], y[:, NP:2 * NP]),
                         jnp.maximum(y[:, 2 * NP:3 * NP], y[:, 3 * NP:4 * NP]))
    pooled = jnp.maximum(pooled + cb_ref[...], 0.0).astype(jnp.bfloat16)  # (M, 256)

    # fc1: 13 per-pooled-row matmuls against pre-permuted (channel-major flatten) weights;
    # row slices are sublane-aligned (BB % 16 == 0). Init with ph=0 dot (no zeros+add).
    h = jnp.dot(pooled[0:BB, :], w1_ref[0], preferred_element_type=jnp.float32)
    for ph in range(1, PH):
        h = h + jnp.dot(pooled[ph * BB:(ph + 1) * BB, :], w1_ref[ph],
                        preferred_element_type=jnp.float32)
    h = jnp.maximum(h + b1_ref[...], 0.0).astype(jnp.bfloat16)            # (BB, 64)

    # fc2 into a lane-dense 128-wide block (unmasked stores)
    o_ref[...] = jnp.dot(h, w2_ref[...],
                         preferred_element_type=jnp.float32) + b2_ref[...]


# ----------------------------- one-time weight preparation -----------------------------
def prepare_params(params):
    """Hoisted weight relayout (pay once at load time, not per forward call)."""
    w = np.asarray(params["conv_w"], np.float32)[:, 0]        # (16, 3, 3)
    cb = np.asarray(params["conv_b"], np.float32)             # (16,)
    fc1_w = np.asarray(params["fc1_w"], np.float32)           # (64, 2704)
    fc1_b = np.asarray(params["fc1_b"], np.float32)           # (64,)
    fc2_w = np.asarray(params["fc2_w"], np.float32)           # (10, 64)
    fc2_b = np.asarray(params["fc2_b"], np.float32)           # (10,)

    # merged banded conv weight: wband[r*28 + j_in, p*256 + pw*16 + c] = w[c, r-rr, j_in-2pw-wc]
    # with p = rr*2 + wc; zero-padded from K=112 to K=128.
    wband = np.zeros((4, KIN, NPHASE, NP), np.float32)
    for rr in range(2):
        for wc in range(2):
            p = rr * 2 + wc
            for pw in range(PW):
                for di in range(3):
                    for dj in range(3):
                        r = rr + di
                        j_in = 2 * pw + wc + dj
                        wband[r, j_in, p, pw * CO:(pw + 1) * CO] = w[:, di, dj]
    wband = wband.reshape(4 * KIN, NPHASE * NP)                # (112, 1024)
    wband = np.pad(wband, ((0, KPAD - 4 * KIN), (0, 0)))       # (128, 1024)

    # conv bias for the pooled tensor (applied after the phase max): (1, 256)
    cbrow = np.zeros((1, NP), np.float32)
    for pw in range(PW):
        cbrow[0, pw * CO:(pw + 1) * CO] = cb

    # fc1 weight regrouped per pooled row; torch flatten index is c*169 + ph*13 + pw
    w1blk = np.zeros((PH, NP, 64), np.float32)
    for ph in range(PH):
        for pw in range(PW):
            for c in range(CO):
                w1blk[ph, pw * CO + c, :] = fc1_w[:, c * PH * PW + ph * PW + pw]

    # fc2 padded to 128 output lanes (lane-dense output stores)
    w2p = np.zeros((64, NOUT), np.float32)
    w2p[:, :10] = fc2_w.T
    b2p = np.zeros((1, NOUT), np.float32)
    b2p[0, :10] = fc2_b

    return dict(
        wband=jnp.asarray(wband, jnp.bfloat16),
        cbrow=jnp.asarray(cbrow, jnp.float32),
        w1blk=jnp.asarray(w1blk, jnp.bfloat16),
        b1=jnp.asarray(fc1_b.reshape(1, 64), jnp.float32),
        w2=jnp.asarray(w2p, jnp.bfloat16),
        b2=jnp.asarray(b2p, jnp.float32),
    )


# ----------------------------- batch-tile selection -----------------------------
def _round_up(n, m):
    return m * ((n + m - 1) // m)


def _choose_bb(B, bb_max=128):
    """Images per grid step: multiple of 16 (bf16 sublane packing), capped at bb_max;
    moderate batches are split into >=2 grid steps so both v7x TensorCores get work."""
    Bp = _round_up(B, 16)
    if Bp <= 16:
        return 16
    if Bp <= bb_max:
        return _round_up((Bp + 1) // 2, 16)
    return bb_max


# ----------------------------- forward wrapper -----------------------------
def cnn_forward(x, prep, bb_max=128):
    B = x.shape[0]
    BB = _choose_bb(B, bb_max)
    Bp = ((B + BB - 1) // BB) * BB

    x2 = x.reshape(B, 28, 28).astype(jnp.bfloat16)
    if Bp != B:
        x2 = jnp.pad(x2, ((0, Bp - B), (0, 0), (0, 0)))

    # single tap slab: xt[ph, b, r*28 + j] = x[b, 2*ph + r, j]; 112 cols zero-padded to 128
    xt = jnp.stack([x2[:, 2 * ph:2 * ph + 4, :] for ph in range(PH)], axis=0)  # (13, Bp, 4, 28)
    xt = xt.reshape(PH, Bp, 4 * KIN)
    xt = jnp.pad(xt, ((0, 0), (0, 0), (0, KPAD - 4 * KIN)))                    # (13, Bp, 128)

    N = NPHASE * NP
    out = pl.pallas_call(
        fused_cnn_kernel,
        out_shape=jax.ShapeDtypeStruct((Bp, NOUT), jnp.float32),
        grid=(Bp // BB,),
        in_specs=[
            pl.BlockSpec((PH, BB, KPAD), lambda t: (0, t, 0)),   # tap slab (per-step tile)
            pl.BlockSpec((KPAD, N), lambda t: (0, 0)),           # resident weights below
            pl.BlockSpec((1, NP), lambda t: (0, 0)),
            pl.BlockSpec((PH, NP, 64), lambda t: (0, 0, 0)),
            pl.BlockSpec((1, 64), lambda t: (0, 0)),
            pl.BlockSpec((64, NOUT), lambda t: (0, 0)),
            pl.BlockSpec((1, NOUT), lambda t: (0, 0)),
        ],
        out_specs=pl.BlockSpec((BB, NOUT), lambda t: (t, 0)),
        compiler_params=pltpu.CompilerParams(
            dimension_semantics=("parallel",),
            vmem_limit_bytes=32 * 1024 * 1024,
        ),
    )(xt, prep["wband"], prep["cbrow"], prep["w1blk"],
      prep["b1"], prep["w2"], prep["b2"])
    return out[:B, :10]


# ----------------------------- pure-JAX reference -----------------------------
def reference_forward(x, params):
    B = x.shape[0]
    W = params["conv_w"]                                 # (16, 1, 3, 3)
    xs = x[:, 0]                                         # (B, 28, 28)
    conv = jnp.zeros((B, 16, 26, 26), jnp.float32)
    for di in range(3):
        for dj in range(3):
            conv = conv + xs[:, None, di:di + 26, dj:dj + 26] * \
                W[None, :, 0, di, dj][..., None, None]
    conv = conv + params["conv_b"][None, :, None, None]
    conv = jnp.maximum(conv, 0.0)
    pooled = conv.reshape(B, 16, 13, 2, 13, 2).max(axis=(3, 5))
    flat = pooled.reshape(B, -1)
    h = jnp.maximum(
        jnp.dot(flat, params["fc1_w"].T, precision=jax.lax.Precision.HIGHEST)
        + params["fc1_b"], 0.0)
    return jnp.dot(h, params["fc2_w"].T, precision=jax.lax.Precision.HIGHEST) \
        + params["fc2_b"]


if __name__ == "__main__":
    key = jax.random.PRNGKey(0)
    k1, k2, k3, k4, k5, k6, kx = jax.random.split(key, 7)
    params = {
        "conv_w": 0.1 * jax.random.normal(k1, (16, 1, 3, 3), jnp.float32),
        "conv_b": 0.1 * jax.random.normal(k2, (16,), jnp.float32),
        "fc1_w": 0.05 * jax.random.normal(k3, (64, 16 * 13 * 13), jnp.float32),
        "fc1_b": 0.05 * jax.random.normal(k4, (64,), jnp.float32),
        "fc2_w": 0.1 * jax.random.normal(k5, (10, 64), jnp.float32),
        "fc2_b": 0.1 * jax.random.normal(k6, (10,), jnp.float32),
    }
    # batch=2, NCHW input — 28x28 is forced by the 16*13*13 fc1 input size.
    x = jax.random.normal(kx, (2, 1, 28, 28), jnp.float32)

    prep = prepare_params(params)
    fwd = jax.jit(cnn_forward)
    out = jax.block_until_ready(fwd(x, prep))

    ref = jax.block_until_ready(reference_forward(x, params))
    max_diff = float(jnp.max(jnp.abs(out - ref)))
    assert out.shape == (2, 10) and out.dtype == jnp.float32
    # bf16 MXU inputs (f32 accumulation): slightly looser tolerance than pure f32
    assert max_diff < 2e-2, f"mismatch vs reference: {max_diff}"

    print("KERNEL_OK")
</pallas_src>

<mosaic_0001>
module attributes {stable_mosaic.version = 11 : i64} {
  func.func @fused_cnn_kernel(%arg0: i32, %arg1: memref<13x16x128xbf16, #tpu.memory_space<vmem>>, %arg2: memref<128x1024xbf16, #tpu.memory_space<vmem>>, %arg3: memref<1x256xf32, #tpu.memory_space<vmem>>, %arg4: memref<13x256x64xbf16, #tpu.memory_space<vmem>>, %arg5: memref<1x64xf32, #tpu.memory_space<vmem>>, %arg6: memref<64x128xbf16, #tpu.memory_space<vmem>>, %arg7: memref<1x128xf32, #tpu.memory_space<vmem>>, %arg8: memref<16x128xf32, #tpu.memory_space<vmem>>) attributes {dimension_semantics = [#tpu.dimension_semantics<parallel>], iteration_bounds = array<i64: 1>, scalar_prefetch = 0 : i64, scratch_operands = 0 : i64, tpu.core_type = #tpu.core_type<tc>, window_params = [{transform_indices = @transform_0, window_bounds = array<i64: 13, 16, 128>}, {pipeline_mode = #tpu.pipeline_mode<synchronous>, transform_indices = @transform_1, window_bounds = array<i64: 128, 1024>}, {pipeline_mode = #tpu.pipeline_mode<synchronous>, transform_indices = @transform_2, window_bounds = array<i64: 1, 256>}, {pipeline_mode = #tpu.pipeline_mode<synchronous>, transform_indices = @transform_3, window_bounds = array<i64: 13, 256, 64>}, {pipeline_mode = #tpu.pipeline_mode<synchronous>, transform_indices = @transform_4, window_bounds = array<i64: 1, 64>}, {pipeline_mode = #tpu.pipeline_mode<synchronous>, transform_indices = @transform_5, window_bounds = array<i64: 64, 128>}, {pipeline_mode = #tpu.pipeline_mode<synchronous>, transform_indices = @transform_6, window_bounds = array<i64: 1, 128>}, {transform_indices = @transform_7, window_bounds = array<i64: 16, 128>}]} {
    %c0 = arith.constant 0 : index
    %c0_0 = arith.constant 0 : index
    %c0_1 = arith.constant 0 : index
    %0 = vector.load %arg1[%c0, %c0_0, %c0_1] : memref<13x16x128xbf16, #tpu.memory_space<vmem>>, vector<13x16x128xbf16>
    %1 = vector.shape_cast %0 : vector<13x16x128xbf16> to vector<208x128xbf16>
    %c0_2 = arith.constant 0 : index
    %c0_3 = arith.constant 0 : index
    %2 = vector.load %arg2[%c0_2, %c0_3] : memref<128x1024xbf16, #tpu.memory_space<vmem>>, vector<128x1024xbf16>
    %cst = arith.constant dense<0.000000e+00> : vector<208x1024xf32>
    %3 = tpu.matmul %1, %2, %cst {dimension_numbers = #tpu.dot_dimension_numbers<[1], [0], [0], [1], [0, 0, 1, 1], [], []>} : vector<208x128xbf16>, vector<128x1024xbf16>, vector<208x1024xf32> -> vector<208x1024xf32>
    %4 = vector.extract_strided_slice %3 {offsets = [0, 0], sizes = [208, 256], strides = [1, 1]} : vector<208x1024xf32> to vector<208x256xf32>
    %5 = vector.extract_strided_slice %3 {offsets = [0, 256], sizes = [208, 256], strides = [1, 1]} : vector<208x1024xf32> to vector<208x256xf32>
    %6 = arith.maximumf %4, %5 : vector<208x256xf32>
    %7 = vector.extract_strided_slice %3 {offsets = [0, 512], sizes = [208, 256], strides = [1, 1]} : vector<208x1024xf32> to vector<208x256xf32>
    %8 = vector.extract_strided_slice %3 {offsets = [0, 768], sizes = [208, 256], strides = [1, 1]} : vector<208x1024xf32> to vector<208x256xf32>
    %9 = arith.maximumf %7, %8 : vector<208x256xf32>
    %10 = arith.maximumf %6, %9 : vector<208x256xf32>
    %c0_4 = arith.constant 0 : index
    %c0_5 = arith.constant 0 : index
    %11 = vector.load %arg3[%c0_4, %c0_5] : memref<1x256xf32, #tpu.memory_space<vmem>>, vector<1x256xf32>
    %12 = vector.broadcast %11 : vector<1x256xf32> to vector<208x256xf32>
    %13 = arith.addf %10, %12 : vector<208x256xf32>
    %cst_6 = arith.constant 0.000000e+00 : f32
    %14 = vector.broadcast %cst_6 : f32 to vector<208x256xf32>
    %15 = arith.maximumf %13, %14 : vector<208x256xf32>
    %16 = arith.truncf %15 : vector<208x256xf32> to vector<208x256xbf16>
    %17 = vector.extract_strided_slice %16 {offsets = [0, 0], sizes = [16, 256], strides = [1, 1]} : vector<208x256xbf16> to vector<16x256xbf16>
    %c0_7 = arith.constant 0 : index
    %c0_8 = arith.constant 0 : index
    %c0_9 = arith.constant 0 : index
    %18 = vector.load %arg4[%c0_7, %c0_8, %c0_9] : memref<13x256x64xbf16, #tpu.memory_space<vmem>>, vector<1x256x64xbf16>
    %19 = vector.shape_cast %18 : vector<1x256x64xbf16> to vector<256x64xbf16>
    %cst_10 = arith.constant dense<0.000000e+00> : vector<16x64xf32>
    %20 = tpu.matmul %17, %19, %cst_10 {dimension_numbers = #tpu.dot_dimension_numbers<[1], [0], [0], [1], [0, 0, 1, 1], [], []>} : vector<16x256xbf16>, vector<256x64xbf16>, vector<16x64xf32> -> vector<16x64xf32>
    %21 = vector.extract_strided_slice %16 {offsets = [16, 0], sizes = [16, 256], strides = [1, 1]} : vector<208x256xbf16> to vector<16x256xbf16>
    %c1 = arith.constant 1 : index
    %c0_11 = arith.constant 0 : index
    %c0_12 = arith.constant 0 : index
    %22 = vector.load %arg4[%c1, %c0_11, %c0_12] : memref<13x256x64xbf16, #tpu.memory_space<vmem>>, vector<1x256x64xbf16>
    %23 = vector.shape_cast %22 : vector<1x256x64xbf16> to vector<256x64xbf16>
    %cst_13 = arith.constant dense<0.000000e+00> : vector<16x64xf32>
    %24 = tpu.matmul %21, %23, %cst_13 {dimension_numbers = #tpu.dot_dimension_numbers<[1], [0], [0], [1], [0, 0, 1, 1], [], []>} : vector<16x256xbf16>, vector<256x64xbf16>, vector<16x64xf32> -> vector<16x64xf32>
    %25 = arith.addf %20, %24 : vector<16x64xf32>
    %26 = vector.extract_strided_slice %16 {offsets = [32, 0], sizes = [16, 256], strides = [1, 1]} : vector<208x256xbf16> to vector<16x256xbf16>
    %c2 = arith.constant 2 : index
    %c0_14 = arith.constant 0 : index
    %c0_15 = arith.constant 0 : index
    %27 = vector.load %arg4[%c2, %c0_14, %c0_15] : memref<13x256x64xbf16, #tpu.memory_space<vmem>>, vector<1x256x64xbf16>
    %28 = vector.shape_cast %27 : vector<1x256x64xbf16> to vector<256x64xbf16>
    %cst_16 = arith.constant dense<0.000000e+00> : vector<16x64xf32>
    %29 = tpu.matmul %26, %28, %cst_16 {dimension_numbers = #tpu.dot_dimension_numbers<[1], [0], [0], [1], [0, 0, 1, 1], [], []>} : vector<16x256xbf16>, vector<256x64xbf16>, vector<16x64xf32> -> vector<16x64xf32>
    %30 = arith.addf %25, %29 : vector<16x64xf32>
    %31 = vector.extract_strided_slice %16 {offsets = [48, 0], sizes = [16, 256], strides = [1, 1]} : vector<208x256xbf16> to vector<16x256xbf16>
    %c3 = arith.constant 3 : index
    %c0_17 = arith.constant 0 : index
    %c0_18 = arith.constant 0 : index
    %32 = vector.load %arg4[%c3, %c0_17, %c0_18] : memref<13x256x64xbf16, #tpu.memory_space<vmem>>, vector<1x256x64xbf16>
    %33 = vector.shape_cast %32 : vector<1x256x64xbf16> to vector<256x64xbf16>
    %cst_19 = arith.constant dense<0.000000e+00> : vector<16x64xf32>
    %34 = tpu.matmul %31, %33, %cst_19 {dimension_numbers = #tpu.dot_dimension_numbers<[1], [0], [0], [1], [0, 0, 1, 1], [], []>} : vector<16x256xbf16>, vector<256x64xbf16>, vector<16x64xf32> -> vector<16x64xf32>
    %35 = arith.addf %30, %34 : vector<16x64xf32>
    %36 = vector.extract_strided_slice %16 {offsets = [64, 0], sizes = [16, 256], strides = [1, 1]} : vector<208x256xbf16> to vector<16x256xbf16>
    %c4 = arith.constant 4 : index
    %c0_20 = arith.constant 0 : index
    %c0_21 = arith.constant 0 : index
    %37 = vector.load %arg4[%c4, %c0_20, %c0_21] : memref<13x256x64xbf16, #tpu.memory_space<vmem>>, vector<1x256x64xbf16>
    %38 = vector.shape_cast %37 : vector<1x256x64xbf16> to vector<256x64xbf16>
    %cst_22 = arith.constant dense<0.000000e+00> : vector<16x64xf32>
    %39 = tpu.matmul %36, %38, %cst_22 {dimension_numbers = #tpu.dot_dimension_numbers<[1], [0], [0], [1], [0, 0, 1, 1], [], []>} : vector<16x256xbf16>, vector<256x64xbf16>, vector<16x64xf32> -> vector<16x64xf32>
    %40 = arith.addf %35, %39 : vector<16x64xf32>
    %41 = vector.extract_strided_slice %16 {offsets = [80, 0], sizes = [16, 256], strides = [1, 1]} : vector<208x256xbf16> to vector<16x256xbf16>
    %c5 = arith.constant 5 : index
    %c0_23 = arith.constant 0 : index
    %c0_24 = arith.constant 0 : index
    %42 = vector.load %arg4[%c5, %c0_23, %c0_24] : memref<13x256x64xbf16, #tpu.memory_space<vmem>>, vector<1x256x64xbf16>
    %43 = vector.shape_cast %42 : vector<1x256x64xbf16> to vector<256x64xbf16>
    %cst_25 = arith.constant dense<0.000000e+00> : vector<16x64xf32>
    %44 = tpu.matmul %41, %43, %cst_25 {dimension_numbers = #tpu.dot_dimension_numbers<[1], [0], [0], [1], [0, 0, 1, 1], [], []>} : vector<16x256xbf16>, vector<256x64xbf16>, vector<16x64xf32> -> vector<16x64xf32>
    %45 = arith.addf %40, %44 : vector<16x64xf32>
    %46 = vector.extract_strided_slice %16 {offsets = [96, 0], sizes = [16, 256], strides = [1, 1]} : vector<208x256xbf16> to vector<16x256xbf16>
    %c6 = arith.constant 6 : index
    %c0_26 = arith.constant 0 : index
    %c0_27 = arith.constant 0 : index
    %47 = vector.load %arg4[%c6, %c0_26, %c0_27] : memref<13x256x64xbf16, #tpu.memory_space<vmem>>, vector<1x256x64xbf16>
    %48 = vector.shape_cast %47 : vector<1x256x64xbf16> to vector<256x64xbf16>
    %cst_28 = arith.constant dense<0.000000e+00> : vector<16x64xf32>
    %49 = tpu.matmul %46, %48, %cst_28 {dimension_numbers = #tpu.dot_dimension_numbers<[1], [0], [0], [1], [0, 0, 1, 1], [], []>} : vector<16x256xbf16>, vector<256x64xbf16>, vector<16x64xf32> -> vector<16x64xf32>
    %50 = arith.addf %45, %49 : vector<16x64xf32>
    %51 = vector.extract_strided_slice %16 {offsets = [112, 0], sizes = [16, 256], strides = [1, 1]} : vector<208x256xbf16> to vector<16x256xbf16>
    %c7 = arith.constant 7 : index
    %c0_29 = arith.constant 0 : index
    %c0_30 = arith.constant 0 : index
    %52 = vector.load %arg4[%c7, %c0_29, %c0_30] : memref<13x256x64xbf16, #tpu.memory_space<vmem>>, vector<1x256x64xbf16>
    %53 = vector.shape_cast %52 : vector<1x256x64xbf16> to vector<256x64xbf16>
    %cst_31 = arith.constant dense<0.000000e+00> : vector<16x64xf32>
    %54 = tpu.matmul %51, %53, %cst_31 {dimension_numbers = #tpu.dot_dimension_numbers<[1], [0], [0], [1], [0, 0, 1, 1], [], []>} : vector<16x256xbf16>, vector<256x64xbf16>, vector<16x64xf32> -> vector<16x64xf32>
    %55 = arith.addf %50, %54 : vector<16x64xf32>
    %56 = vector.extract_strided_slice %16 {offsets = [128, 0], sizes = [16, 256], strides = [1, 1]} : vector<208x256xbf16> to vector<16x256xbf16>
    %c8 = arith.constant 8 : index
    %c0_32 = arith.constant 0 : index
    %c0_33 = arith.constant 0 : index
    %57 = vector.load %arg4[%c8, %c0_32, %c0_33] : memref<13x256x64xbf16, #tpu.memory_space<vmem>>, vector<1x256x64xbf16>
    %58 = vector.shape_cast %57 : vector<1x256x64xbf16> to vector<256x64xbf16>
    %cst_34 = arith.constant dense<0.000000e+00> : vector<16x64xf32>
    %59 = tpu.matmul %56, %58, %cst_34 {dimension_numbers = #tpu.dot_dimension_numbers<[1], [0], [0], [1], [0, 0, 1, 1], [], []>} : vector<16x256xbf16>, vector<256x64xbf16>, vector<16x64xf32> -> vector<16x64xf32>
    %60 = arith.addf %55, %59 : vector<16x64xf32>
    %61 = vector.extract_strided_slice %16 {offsets = [144, 0], sizes = [16, 256], strides = [1, 1]} : vector<208x256xbf16> to vector<16x256xbf16>
    %c9 = arith.constant 9 : index
    %c0_35 = arith.constant 0 : index
    %c0_36 = arith.constant 0 : index
    %62 = vector.load %arg4[%c9, %c0_35, %c0_36] : memref<13x256x64xbf16, #tpu.memory_space<vmem>>, vector<1x256x64xbf16>
    %63 = vector.shape_cast %62 : vector<1x256x64xbf16> to vector<256x64xbf16>
    %cst_37 = arith.constant dense<0.000000e+00> : vector<16x64xf32>
    %64 = tpu.matmul %61, %63, %cst_37 {dimension_numbers = #tpu.dot_dimension_numbers<[1], [0], [0], [1], [0, 0, 1, 1], [], []>} : vector<16x256xbf16>, vector<256x64xbf16>, vector<16x64xf32> -> vector<16x64xf32>
    %65 = arith.addf %60, %64 : vector<16x64xf32>
    %66 = vector.extract_strided_slice %16 {offsets = [160, 0], sizes = [16, 256], strides = [1, 1]} : vector<208x256xbf16> to vector<16x256xbf16>
    %c10 = arith.constant 10 : index
    %c0_38 = arith.constant 0 : index
    %c0_39 = arith.constant 0 : index
    %67 = vector.load %arg4[%c10, %c0_38, %c0_39] : memref<13x256x64xbf16, #tpu.memory_space<vmem>>, vector<1x256x64xbf16>
    %68 = vector.shape_cast %67 : vector<1x256x64xbf16> to vector<256x64xbf16>
    %cst_40 = arith.constant dense<0.000000e+00> : vector<16x64xf32>
    %69 = tpu.matmul %66, %68, %cst_40 {dimension_numbers = #tpu.dot_dimension_numbers<[1], [0], [0], [1], [0, 0, 1, 1], [], []>} : vector<16x256xbf16>, vector<256x64xbf16>, vector<16x64xf32> -> vector<16x64xf32>
    %70 = arith.addf %65, %69 : vector<16x64xf32>
    %71 = vector.extract_strided_slice %16 {offsets = [176, 0], sizes = [16, 256], strides = [1, 1]} : vector<208x256xbf16> to vector<16x256xbf16>
    %c11 = arith.constant 11 : index
    %c0_41 = arith.constant 0 : index
    %c0_42 = arith.constant 0 : index
    %72 = vector.load %arg4[%c11, %c0_41, %c0_42] : memref<13x256x64xbf16, #tpu.memory_space<vmem>>, vector<1x256x64xbf16>
    %73 = vector.shape_cast %72 : vector<1x256x64xbf16> to vector<256x64xbf16>
    %cst_43 = arith.constant dense<0.000000e+00> : vector<16x64xf32>
    %74 = tpu.matmul %71, %73, %cst_43 {dimension_numbers = #tpu.dot_dimension_numbers<[1], [0], [0], [1], [0, 0, 1, 1], [], []>} : vector<16x256xbf16>, vector<256x64xbf16>, vector<16x64xf32> -> vector<16x64xf32>
    %75 = arith.addf %70, %74 : vector<16x64xf32>
    %76 = vector.extract_strided_slice %16 {offsets = [192, 0], sizes = [16, 256], strides = [1, 1]} : vector<208x256xbf16> to vector<16x256xbf16>
    %c12 = arith.constant 12 : index
    %c0_44 = arith.constant 0 : index
    %c0_45 = arith.constant 0 : index
    %77 = vector.load %arg4[%c12, %c0_44, %c0_45] : memref<13x256x64xbf16, #tpu.memory_space<vmem>>, vector<1x256x64xbf16>
    %78 = vector.shape_cast %77 : vector<1x256x64xbf16> to vector<256x64xbf16>
    %cst_46 = arith.constant dense<0.000000e+00> : vector<16x64xf32>
    %79 = tpu.matmul %76, %78, %cst_46 {dimension_numbers = #tpu.dot_dimension_numbers<[1], [0], [0], [1], [0, 0, 1, 1], [], []>} : vector<16x256xbf16>, vector<256x64xbf16>, vector<16x64xf32> -> vector<16x64xf32>
    %80 = arith.addf %75, %79 : vector<16x64xf32>
    %c0_47 = arith.constant 0 : index
    %c0_48 = arith.constant 0 : index
    %81 = vector.load %arg5[%c0_47, %c0_48] : memref<1x64xf32, #tpu.memory_space<vmem>>, vector<1x64xf32>
    %82 = vector.broadcast %81 : vector<1x64xf32> to vector<16x64xf32>
    %83 = arith.addf %80, %82 : vector<16x64xf32>
    %cst_49 = arith.constant 0.000000e+00 : f32
    %84 = vector.broadcast %cst_49 : f32 to vector<16x64xf32>
    %85 = arith.maximumf %83, %84 : vector<16x64xf32>
    %86 = arith.truncf %85 : vector<16x64xf32> to vector<16x64xbf16>
    %c0_50 = arith.constant 0 : index
    %c0_51 = arith.constant 0 : index
    %87 = vector.load %arg6[%c0_50, %c0_51] : memref<64x128xbf16, #tpu.memory_space<vmem>>, vector<64x128xbf16>
    %cst_52 = arith.constant dense<0.000000e+00> : vector<16x128xf32>
    %88 = tpu.matmul %86, %87, %cst_52 {dimension_numbers = #tpu.dot_dimension_numbers<[1], [0], [0], [1], [0, 0, 1, 1], [], []>} : vector<16x64xbf16>, vector<64x128xbf16>, vector<16x128xf32> -> vector<16x128xf32>
    %c0_53 = arith.constant 0 : index
    %c0_54 = arith.constant 0 : index
    %89 = vector.load %arg7[%c0_53, %c0_54] : memref<1x128xf32, #tpu.memory_space<vmem>>, vector<1x128xf32>
    %90 = vector.broadcast %89 : vector<1x128xf32> to vector<16x128xf32>
    %91 = arith.addf %88, %90 : vector<16x128xf32>
    %c0_55 = arith.constant 0 : index
    %c0_56 = arith.constant 0 : index
    %92 = vector.load %arg8[%c0_55, %c0_56] : memref<16x128xf32, #tpu.memory_space<vmem>>, vector<16x128xf32>
    tpu.vector_store %arg8[%c0_55, %c0_56], %91 {strides = array<i32>} : memref<16x128xf32, #tpu.memory_space<vmem>>, vector<16x128xf32>,
    return
  }
  func.func @transform_0(%arg0: i32) -> (i32, i32, i32) {
    %c0_i32 = arith.constant 0 : i32
    %c0_i32_0 = arith.constant 0 : i32
    %c0_i32_1 = arith.constant 0 : i32
    return %c0_i32, %arg0, %c0_i32_0 : i32, i32, i32
  }
  func.func @transform_1(%arg0: i32) -> (i32, i32) {
    %c0_i32 = arith.constant 0 : i32
    %c0_i32_0 = arith.constant 0 : i32
    %c0_i32_1 = arith.constant 0 : i32
    return %c0_i32, %c0_i32_0 : i32, i32
  }
  func.func @transform_2(%arg0: i32) -> (i32, i32) {
    %c0_i32 = arith.constant 0 : i32
    %c0_i32_0 = arith.constant 0 : i32
    %c0_i32_1 = arith.constant 0 : i32
    return %c0_i32, %c0_i32_0 : i32, i32
  }
  func.func @transform_3(%arg0: i32) -> (i32, i32, i32) {
    %c0_i32 = arith.constant 0 : i32
    %c0_i32_0 = arith.constant 0 : i32
    %c0_i32_1 = arith.constant 0 : i32
    %c0_i32_2 = arith.constant 0 : i32
    return %c0_i32, %c0_i32_0, %c0_i32_1 : i32, i32, i32
  }
  func.func @transform_4(%arg0: i32) -> (i32, i32) {
    %c0_i32 = arith.constant 0 : i32
    %c0_i32_0 = arith.constant 0 : i32
    %c0_i32_1 = arith.constant 0 : i32
    return %c0_i32, %c0_i32_0 : i32, i32
  }
  func.func @transform_5(%arg0: i32) -> (i32, i32) {
    %c0_i32 = arith.constant 0 : i32
    %c0_i32_0 = arith.constant 0 : i32
    %c0_i32_1 = arith.constant 0 : i32
    return %c0_i32, %c0_i32_0 : i32, i32
  }
  func.func @transform_6(%arg0: i32) -> (i32, i32) {
    %c0_i32 = arith.constant 0 : i32
    %c0_i32_0 = arith.constant 0 : i32
    %c0_i32_1 = arith.constant 0 : i32
    return %c0_i32, %c0_i32_0 : i32, i32
  }
  func.func @transform_7(%arg0: i32) -> (i32, i32) {
    %c0_i32 = arith.constant 0 : i32
    %c0_i32_0 = arith.constant 0 : i32
    return %arg0, %c0_i32 : i32, i32
  }
}

</mosaic_0001>

<llo_original>
// kernel: cnn_forward.1
$region0: #{cnn_forward.1}
  #allocation0 [shape = 'u32[]', space=smem, size = 0x4, offset = 0x4, fixed_abs, tag = 'smem constant byte address 0x4 - core index']
  #allocation1 [shape = 'u32[144,128]{1,0:T(1,128)}', space=vmem, size = 0x12000, scoped, tag = 'internal scratch']
  %s0 = inlined_call_operand.vmem [shape: bf16[13,16,128], index: 0, kind: input, shape index: {}]
  %s1 = inlined_call_operand.vmem [shape: bf16[128,1024], index: 1, kind: input, shape index: {}]
  %s2 = inlined_call_operand.vmem [shape: f32[1,256], index: 2, kind: input, shape index: {}]
  %s3 = inlined_call_operand.vmem [shape: bf16[13,256,64], index: 3, kind: input, shape index: {}]
  %s4 = inlined_call_operand.vmem [shape: f32[1,64], index: 4, kind: input, shape index: {}]
  %s5 = inlined_call_operand.vmem [shape: bf16[64,128], index: 5, kind: input, shape index: {}]
  %s6 = inlined_call_operand.vmem [shape: f32[1,128], index: 6, kind: input, shape index: {}]
  %s7 = inlined_call_operand.vmem [shape: f32[16,128], index: 7, kind: output, shape index: {}]
  %s8 = sld [smem:[#allocation0]]
  $region38: #{cnn_forward.1} parent=0
    _
  %s10 = ssub.s32 1, %s8
  %s11 = scalar_select 0, %s10, %s8
  // Predicated region
  $region2: #{cnn_forward.1} parent=0 // pred_check
    _
  $region3: #{cnn_forward.1} parent=0 // pred_check_branch
    %13 = sbr.rel (0) target = $region5
  $region4: #{cnn_forward.1} parent=0 // pred_region
    _
  $region5: #{cnn_forward.1} parent=0 // pred_fallthru
    _
  // Predicated region
  $region6: #{cnn_forward.1} parent=0 // pred_check
    _
  $region7: #{cnn_forward.1} parent=0 // pred_check_branch
    %15 = sbr.rel (0) target = $region9
  $region8: #{cnn_forward.1} parent=0 // pred_region
    _
  $region9: #{cnn_forward.1} parent=0 // pred_fallthru
    _
  // Predicated region
  $region10: #{cnn_forward.1} parent=0 // pred_check
    _
  $region11: #{cnn_forward.1} parent=0 // pred_check_branch
    %17 = sbr.rel (0) target = $region13
  $region12: #{cnn_forward.1} parent=0 // pred_region
    _
  $region13: #{cnn_forward.1} parent=0 // pred_fallthru
    _
  // Predicated region
  $region14: #{cnn_forward.1} parent=0 // pred_check
    _
  $region15: #{cnn_forward.1} parent=0 // pred_check_branch
    %19 = sbr.rel (0) target = $region17
  $region16: #{cnn_forward.1} parent=0 // pred_region
    _
  $region17: #{cnn_forward.1} parent=0 // pred_fallthru
    _
  // Predicated region
  $region18: #{cnn_forward.1} parent=0 // pred_check
    _
  $region19: #{cnn_forward.1} parent=0 // pred_check_branch
    %21 = sbr.rel (0) target = $region21
  $region20: #{cnn_forward.1} parent=0 // pred_region
    _
  $region21: #{cnn_forward.1} parent=0 // pred_fallthru
    _
  // Predicated region
  $region22: #{cnn_forward.1} parent=0 // pred_check
    _
  $region23: #{cnn_forward.1} parent=0 // pred_check_branch
    %23 = sbr.rel (0) target = $region25
  $region24: #{cnn_forward.1} parent=0 // pred_region
    _
  $region25: #{cnn_forward.1} parent=0 // pred_fallthru
    _
  // Predicated region
  $region26: #{cnn_forward.1} parent=0 // pred_check
    _
  $region27: #{cnn_forward.1} parent=0 // pred_check_branch
    %25 = sbr.rel (0) target = $region29
  $region28: #{cnn_forward.1} parent=0 // pred_region
    _
  $region29: #{cnn_forward.1} parent=0 // pred_fallthru
    _
  %v27 = vld [vmem:[%s0] sm:$0xf]
  %v28 = vld [vmem:[%s0 + $0x4] sm:$0xf]
  %v29 = vld [vmem:[%s0 + $0x8] sm:$0xf]
  %v30 = vld [vmem:[%s0 + $0xc] sm:$0xf]
  %v31 = vld [vmem:[%s0 + $0x10] sm:$0xf]
  %v32 = vld [vmem:[%s0 + $0x14] sm:$0xf]
  %v33 = vld [vmem:[%s0 + $0x18] sm:$0xf]
  %v34 = vld [vmem:[%s0 + $0x1c] sm:$0xf]
  %v35 = vld [vmem:[%s0 + $0x20] sm:$0xf]
  %v36 = vld [vmem:[%s0 + $0x24] sm:$0xf]
  %v37 = vld [vmem:[%s0 + $0x28] sm:$0xf]
  %v38 = vld [vmem:[%s0 + $0x2c] sm:$0xf]
  %v39 = vld [vmem:[%s0 + $0x30] sm:$0xf]
  %v40 = vld [vmem:[%s0 + $0x34] sm:$0xf]
  %v41 = vld [vmem:[%s0 + $0x38] sm:$0xf]
  %v42 = vld [vmem:[%s0 + $0x3c] sm:$0xf]
  %v43 = vld [vmem:[%s0 + $0x40] sm:$0xf]
  %v44 = vld [vmem:[%s0 + $0x44] sm:$0xf]
  %v45 = vld [vmem:[%s0 + $0x48] sm:$0xf]
  %v46 = vld [vmem:[%s0 + $0x4c] sm:$0xf]
  %v47 = vld [vmem:[%s0 + $0x50] sm:$0xf]
  %v48 = vld [vmem:[%s0 + $0x54] sm:$0xf]
  %v49 = vld [vmem:[%s0 + $0x58] sm:$0xf]
  %v50 = vld [vmem:[%s0 + $0x5c] sm:$0xf]
  %v51 = vld [vmem:[%s0 + $0x60] sm:$0xf]
  %v52 = vld [vmem:[%s0 + $0x64] sm:$0xf]
  %v53 = vld [vmem:[%s1] sm:$0xff]
  %v54 = vld [vmem:[%s1 + $0x8] sm:$0xff]
  %v55 = vld [vmem:[%s1 + $0x10] sm:$0xff]
  %v56 = vld [vmem:[%s1 + $0x18] sm:$0xff]
  %v57 = vld [vmem:[%s1 + $0x20] sm:$0xff]
  %v58 = vld [vmem:[%s1 + $0x28] sm:$0xff]
  %v59 = vld [vmem:[%s1 + $0x30] sm:$0xff]
  %v60 = vld [vmem:[%s1 + $0x38] sm:$0xff]
  %v61 = vld [vmem:[%s1 + $0x40] sm:$0xff]
  %v62 = vld [vmem:[%s1 + $0x48] sm:$0xff]
  %v63 = vld [vmem:[%s1 + $0x50] sm:$0xff]
  %v64 = vld [vmem:[%s1 + $0x58] sm:$0xff]
  %v65 = vld [vmem:[%s1 + $0x60] sm:$0xff]
  %v66 = vld [vmem:[%s1 + $0x68] sm:$0xff]
  %v67 = vld [vmem:[%s1 + $0x70] sm:$0xff]
  %v68 = vld [vmem:[%s1 + $0x78] sm:$0xff]
  %v69 = vld [vmem:[%s1 + $0x80] sm:$0xff]
  %v70 = vld [vmem:[%s1 + $0x88] sm:$0xff]
  %v71 = vld [vmem:[%s1 + $0x90] sm:$0xff]
  %v72 = vld [vmem:[%s1 + $0x98] sm:$0xff]
  %v73 = vld [vmem:[%s1 + $0xa0] sm:$0xff]
  %v74 = vld [vmem:[%s1 + $0xa8] sm:$0xff]
  %v75 = vld [vmem:[%s1 + $0xb0] sm:$0xff]
  %v76 = vld [vmem:[%s1 + $0xb8] sm:$0xff]
  %v77 = vld [vmem:[%s1 + $0xc0] sm:$0xff]
  %v78 = vld [vmem:[%s1 + $0xc8] sm:$0xff]
  %v79 = vld [vmem:[%s1 + $0xd0] sm:$0xff]
  %v80 = vld [vmem:[%s1 + $0xd8] sm:$0xff]
  %v81 = vld [vmem:[%s1 + $0xe0] sm:$0xff]
  %v82 = vld [vmem:[%s1 + $0xe8] sm:$0xff]
  %v83 = vld [vmem:[%s1 + $0xf0] sm:$0xff]
  %v84 = vld [vmem:[%s1 + $0xf8] sm:$0xff]
  %v85 = vld [vmem:[%s1 + $0x100] sm:$0xff]
  %v86 = vld [vmem:[%s1 + $0x108] sm:$0xff]
  %v87 = vld [vmem:[%s1 + $0x110] sm:$0xff]
  %v88 = vld [vmem:[%s1 + $0x118] sm:$0xff]
  %v89 = vld [vmem:[%s1 + $0x120] sm:$0xff]
  %v90 = vld [vmem:[%s1 + $0x128] sm:$0xff]
  %v91 = vld [vmem:[%s1 + $0x130] sm:$0xff]
  %v92 = vld [vmem:[%s1 + $0x138] sm:$0xff]
  %v93 = vld [vmem:[%s1 + $0x140] sm:$0xff]
  %v94 = vld [vmem:[%s1 + $0x148] sm:$0xff]
  %v95 = vld [vmem:[%s1 + $0x150] sm:$0xff]
  %v96 = vld [vmem:[%s1 + $0x158] sm:$0xff]
  %v97 = vld [vmem:[%s1 + $0x160] sm:$0xff]
  %v98 = vld [vmem:[%s1 + $0x168] sm:$0xff]
  %v99 = vld [vmem:[%s1 + $0x170] sm:$0xff]
  %v100 = vld [vmem:[%s1 + $0x178] sm:$0xff]
  %v101 = vld [vmem:[%s1 + $0x180] sm:$0xff]
  %v102 = vld [vmem:[%s1 + $0x188] sm:$0xff]
  %v103 = vld [vmem:[%s1 + $0x190] sm:$0xff]
  %v104 = vld [vmem:[%s1 + $0x198] sm:$0xff]
  %v105 = vld [vmem:[%s1 + $0x1a0] sm:$0xff]
  %v106 = vld [vmem:[%s1 + $0x1a8] sm:$0xff]
  %v107 = vld [vmem:[%s1 + $0x1b0] sm:$0xff]
  %v108 = vld [vmem:[%s1 + $0x1b8] sm:$0xff]
  %v109 = vld [vmem:[%s1 + $0x1c0] sm:$0xff]
  %v110 = vld [vmem:[%s1 + $0x1c8] sm:$0xff]
  %v111 = vld [vmem:[%s1 + $0x1d0] sm:$0xff]
  %v112 = vld [vmem:[%s1 + $0x1d8] sm:$0xff]
  %v113 = vld [vmem:[%s1 + $0x1e0] sm:$0xff]
  %v114 = vld [vmem:[%s1 + $0x1e8] sm:$0xff]
  %v115 = vld [vmem:[%s1 + $0x1f0] sm:$0xff]
  %v116 = vld [vmem:[%s1 + $0x1f8] sm:$0xff]
  %v143 = vunpack.c.l.b16 %v27
  %v144 = vunpack.c.l.b16 %v28
  %v145 = vunpack.c.l.b16 %v29
  %v146 = vunpack.c.l.b16 %v30
  %v147 = vunpack.c.l.b16 %v31
  %v148 = vunpack.c.l.b16 %v32
  %v149 = vunpack.c.l.b16 %v33
  %v150 = vunpack.c.l.b16 %v34
  %v151 = vunpack.c.l.b16 %v35
  %v152 = vunpack.c.l.b16 %v36
  %v153 = vunpack.c.l.b16 %v37
  %v154 = vunpack.c.l.b16 %v38
  %v155 = vunpack.c.l.b16 %v39
  %v156 = vunpack.c.l.b16 %v40
  %v157 = vunpack.c.l.b16 %v41
  %v158 = vunpack.c.l.b16 %v42
  %v159 = vunpack.c.l.b16 %v43
  %v160 = vunpack.c.l.b16 %v44
  %v161 = vunpack.c.l.b16 %v45
  %v162 = vunpack.c.l.b16 %v46
  %v163 = vunpack.c.l.b16 %v47
  %v164 = vunpack.c.l.b16 %v48
  %v165 = vunpack.c.l.b16 %v49
  %v166 = vunpack.c.l.b16 %v50
  %v167 = vunpack.c.l.b16 %v51
  %v168 = vunpack.c.l.b16 %v52
  %v169 = vpack.c.b16 %v144, %v143
  %v170 = vpack.c.b16 %v146, %v145
  %v171 = vpack.c.b16 %v148, %v147
  %v172 = vpack.c.b16 %v150, %v149
  %v173 = vpack.c.b16 %v152, %v151
  %v174 = vpack.c.b16 %v154, %v153
  %v175 = vpack.c.b16 %v156, %v155
  %v176 = vpack.c.b16 %v158, %v157
  %v177 = vpack.c.b16 %v160, %v159
  %v178 = vpack.c.b16 %v162, %v161
  %v179 = vpack.c.b16 %v164, %v163
  %v180 = vpack.c.b16 %v166, %v165
  %v181 = vpack.c.b16 %v168, %v167
  %v259 = vunpack.c.l.b16 %v53
  %v260 = vunpack.c.h.b16 %v53
  %v261 = vunpack.c.l.b16 %v54
  %v262 = vunpack.c.h.b16 %v54
  %v263 = vunpack.c.l.b16 %v55
  %v264 = vunpack.c.h.b16 %v55
  %v265 = vunpack.c.l.b16 %v56
  %v266 = vunpack.c.h.b16 %v56
  %v267 = vunpack.c.l.b16 %v57
  %v268 = vunpack.c.h.b16 %v57
  %v269 = vunpack.c.l.b16 %v58
  %v270 = vunpack.c.h.b16 %v58
  %v271 = vunpack.c.l.b16 %v59
  %v272 = vunpack.c.h.b16 %v59
  %v273 = vunpack.c.l.b16 %v60
  %v274 = vunpack.c.h.b16 %v60
  %v275 = vunpack.c.l.b16 %v61
  %v276 = vunpack.c.h.b16 %v61
  %v277 = vunpack.c.l.b16 %v62
  %v278 = vunpack.c.h.b16 %v62
  %v279 = vunpack.c.l.b16 %v63
  %v280 = vunpack.c.h.b16 %v63
  %v281 = vunpack.c.l.b16 %v64
  %v282 = vunpack.c.h.b16 %v64
  %v283 = vunpack.c.l.b16 %v65
  %v284 = vunpack.c.h.b16 %v65
  %v285 = vunpack.c.l.b16 %v66
  %v286 = vunpack.c.h.b16 %v66
  %v287 = vunpack.c.l.b16 %v67
  %v288 = vunpack.c.h.b16 %v67
  %v289 = vunpack.c.l.b16 %v68
  %v290 = vunpack.c.h.b16 %v68
  %v291 = vunpack.c.l.b16 %v69
  %v292 = vunpack.c.h.b16 %v69
  %v293 = vunpack.c.l.b16 %v70
  %v294 = vunpack.c.h.b16 %v70
  %v295 = vunpack.c.l.b16 %v71
  %v296 = vunpack.c.h.b16 %v71
  %v297 = vunpack.c.l.b16 %v72
  %v298 = vunpack.c.h.b16 %v72
  %v299 = vunpack.c.l.b16 %v73
  %v300 = vunpack.c.h.b16 %v73
  %v301 = vunpack.c.l.b16 %v74
  %v302 = vunpack.c.h.b16 %v74
  %v303 = vunpack.c.l.b16 %v75
  %v304 = vunpack.c.h.b16 %v75
  %v305 = vunpack.c.l.b16 %v76
  %v306 = vunpack.c.h.b16 %v76
  %v307 = vunpack.c.l.b16 %v77
  %v308 = vunpack.c.h.b16 %v77
  %v309 = vunpack.c.l.b16 %v78
  %v310 = vunpack.c.h.b16 %v78
  %v311 = vunpack.c.l.b16 %v79
  %v312 = vunpack.c.h.b16 %v79
  %v313 = vunpack.c.l.b16 %v80
  %v314 = vunpack.c.h.b16 %v80
  %v315 = vunpack.c.l.b16 %v81
  %v316 = vunpack.c.h.b16 %v81
  %v317 = vunpack.c.l.b16 %v82
  %v318 = vunpack.c.h.b16 %v82
  %v319 = vunpack.c.l.b16 %v83
  %v320 = vunpack.c.h.b16 %v83
  %v321 = vunpack.c.l.b16 %v84
  %v322 = vunpack.c.h.b16 %v84
  %v323 = vunpack.c.l.b16 %v85
  %v324 = vunpack.c.h.b16 %v85
  %v325 = vunpack.c.l.b16 %v86
  %v326 = vunpack.c.h.b16 %v86
  %v327 = vunpack.c.l.b16 %v87
  %v328 = vunpack.c.h.b16 %v87
  %v329 = vunpack.c.l.b16 %v88
  %v330 = vunpack.c.h.b16 %v88
  %v331 = vunpack.c.l.b16 %v89
  %v332 = vunpack.c.h.b16 %v89
  %v333 = vunpack.c.l.b16 %v90
  %v334 = vunpack.c.h.b16 %v90
  %v335 = vunpack.c.l.b16 %v91
  %v336 = vunpack.c.h.b16 %v91
  %v337 = vunpack.c.l.b16 %v92
  %v338 = vunpack.c.h.b16 %v92
  %v339 = vunpack.c.l.b16 %v93
  %v340 = vunpack.c.h.b16 %v93
  %v341 = vunpack.c.l.b16 %v94
  %v342 = vunpack.c.h.b16 %v94
  %v343 = vunpack.c.l.b16 %v95
  %v344 = vunpack.c.h.b16 %v95
  %v345 = vunpack.c.l.b16 %v96
  %v346 = vunpack.c.h.b16 %v96
  %v347 = vunpack.c.l.b16 %v97
  %v348 = vunpack.c.h.b16 %v97
  %v349 = vunpack.c.l.b16 %v98
  %v350 = vunpack.c.h.b16 %v98
  %v351 = vunpack.c.l.b16 %v99
  %v352 = vunpack.c.h.b16 %v99
  %v353 = vunpack.c.l.b16 %v100
  %v354 = vunpack.c.h.b16 %v100
  %v355 = vunpack.c.l.b16 %v101
  %v356 = vunpack.c.h.b16 %v101
  %v357 = vunpack.c.l.b16 %v102
  %v358 = vunpack.c.h.b16 %v102
  %v359 = vunpack.c.l.b16 %v103
  %v360 = vunpack.c.h.b16 %v103
  %v361 = vunpack.c.l.b16 %v104
  %v362 = vunpack.c.h.b16 %v104
  %v363 = vunpack.c.l.b16 %v105
  %v364 = vunpack.c.h.b16 %v105
  %v365 = vunpack.c.l.b16 %v106
  %v366 = vunpack.c.h.b16 %v106
  %v367 = vunpack.c.l.b16 %v107
  %v368 = vunpack.c.h.b16 %v107
  %v369 = vunpack.c.l.b16 %v108
  %v370 = vunpack.c.h.b16 %v108
  %v371 = vunpack.c.l.b16 %v109
  %v372 = vunpack.c.h.b16 %v109
  %v373 = vunpack.c.l.b16 %v110
  %v374 = vunpack.c.h.b16 %v110
  %v375 = vunpack.c.l.b16 %v111
  %v376 = vunpack.c.h.b16 %v111
  %v377 = vunpack.c.l.b16 %v112
  %v378 = vunpack.c.h.b16 %v112
  %v379 = vunpack.c.l.b16 %v113
  %v380 = vunpack.c.h.b16 %v113
  %v381 = vunpack.c.l.b16 %v114
  %v382 = vunpack.c.h.b16 %v114
  %v383 = vunpack.c.l.b16 %v115
  %v384 = vunpack.c.h.b16 %v115
  %v385 = vunpack.c.l.b16 %v116
  %v386 = vunpack.c.h.b16 %v116
  %v387 = vpack.c.b16 %v267, %v259
  %v388 = vpack.c.b16 %v268, %v260
  %v389 = vpack.c.b16 %v269, %v261
  %v390 = vpack.c.b16 %v270, %v262
  %v391 = vpack.c.b16 %v271, %v263
  %v392 = vpack.c.b16 %v272, %v264
  %v393 = vpack.c.b16 %v273, %v265
  %v394 = vpack.c.b16 %v274, %v266
  %v395 = vpack.c.b16 %v283, %v275
  %v396 = vpack.c.b16 %v284, %v276
  %v397 = vpack.c.b16 %v285, %v277
  %v398 = vpack.c.b16 %v286, %v278
  %v399 = vpack.c.b16 %v287, %v279
  %v400 = vpack.c.b16 %v288, %v280
  %v401 = vpack.c.b16 %v289, %v281
  %v402 = vpack.c.b16 %v290, %v282
  %v403 = vpack.c.b16 %v299, %v291
  %v404 = vpack.c.b16 %v300, %v292
  %v405 = vpack.c.b16 %v301, %v293
  %v406 = vpack.c.b16 %v302, %v294
  %v407 = vpack.c.b16 %v303, %v295
  %v408 = vpack.c.b16 %v304, %v296
  %v409 = vpack.c.b16 %v305, %v297
  %v410 = vpack.c.b16 %v306, %v298
  %v411 = vpack.c.b16 %v315, %v307
  %v412 = vpack.c.b16 %v316, %v308
  %v413 = vpack.c.b16 %v317, %v309
  %v414 = vpack.c.b16 %v318, %v310
  %v415 = vpack.c.b16 %v319, %v311
  %v416 = vpack.c.b16 %v320, %v312
  %v417 = vpack.c.b16 %v321, %v313
  %v418 = vpack.c.b16 %v322, %v314
  %v419 = vpack.c.b16 %v331, %v323
  %v420 = vpack.c.b16 %v332, %v324
  %v421 = vpack.c.b16 %v333, %v325
  %v422 = vpack.c.b16 %v334, %v326
  %v423 = vpack.c.b16 %v335, %v327
  %v424 = vpack.c.b16 %v336, %v328
  %v425 = vpack.c.b16 %v337, %v329
  %v426 = vpack.c.b16 %v338, %v330
  %v427 = vpack.c.b16 %v347, %v339
  %v428 = vpack.c.b16 %v348, %v340
  %v429 = vpack.c.b16 %v349, %v341
  %v430 = vpack.c.b16 %v350, %v342
  %v431 = vpack.c.b16 %v351, %v343
  %v432 = vpack.c.b16 %v352, %v344
  %v433 = vpack.c.b16 %v353, %v345
  %v434 = vpack.c.b16 %v354, %v346
  %v435 = vpack.c.b16 %v363, %v355
  %v436 = vpack.c.b16 %v364, %v356
  %v437 = vpack.c.b16 %v365, %v357
  %v438 = vpack.c.b16 %v366, %v358
  %v439 = vpack.c.b16 %v367, %v359
  %v440 = vpack.c.b16 %v368, %v360
  %v441 = vpack.c.b16 %v369, %v361
  %v442 = vpack.c.b16 %v370, %v362
  %v443 = vpack.c.b16 %v379, %v371
  %v444 = vpack.c.b16 %v380, %v372
  %v445 = vpack.c.b16 %v381, %v373
  %v446 = vpack.c.b16 %v382, %v374
  %v447 = vpack.c.b16 %v383, %v375
  %v448 = vpack.c.b16 %v384, %v376
  %v449 = vpack.c.b16 %v385, %v377
  %v450 = vpack.c.b16 %v386, %v378
  %515 = vmatprep.subr.bf16.mxu0 %v444
  %516 = vmatpush1.bf16.msra.mxu0 %v443
  %517 = vmatprep.subr.bf16.mxu0 %v436
  %518 = vmatpush1.bf16.msra.mxu0 %v435
  %519 = vmatprep.subr.bf16.mxu0 %v428
  %520 = vmatpush1.bf16.msra.mxu0 %v427
  %521 = vmatprep.subr.bf16.mxu0 %v420
  %522 = vmatpush1.bf16.msra.mxu0 %v419
  %523 = vmatprep.subr.bf16.mxu0 %v412
  %524 = vmatpush1.bf16.msra.mxu0 %v411
  %525 = vmatprep.subr.bf16.mxu0 %v404
  %526 = vmatpush1.bf16.msra.mxu0 %v403
  %527 = vmatprep.subr.bf16.mxu0 %v396
  %528 = vmatpush1.bf16.msra.mxu0 %v395
  %529 = vmatprep.subr.bf16.mxu0 %v388
  %530 = vmatpush1.bf16.msra.mxu0 %v387
  %531 = vmatprep.subr.bf16.mxu0 0
  %532 = vmatpush2.bf16.msra.mxu0 0
  %533 = vmatprep.subr.bf16.mxu0 0
  %534 = vmatpush2.bf16.msra.mxu0 0
  %535 = vmatprep.subr.bf16.mxu0 0
  %536 = vmatpush2.bf16.msra.mxu0 0
  %537 = vmatprep.subr.bf16.mxu0 0
  %538 = vmatpush2.bf16.msra.mxu0 0
  %539 = vmatprep.subr.bf16.mxu0 0
  %540 = vmatpush2.bf16.msra.mxu0 0
  %541 = vmatprep.subr.bf16.mxu0 0
  %542 = vmatpush2.bf16.msra.mxu0 0
  %543 = vmatprep.subr.bf16.mxu0 0
  %544 = vmatpush2.bf16.msra.mxu0 0
  %545 = vmatprep.subr.bf16.mxu0 0
  %546 = vmatpush2.bf16.msra.mxu0 0
  %547 = vmatprep.mubr.bf16.mxu0 0
  %548 = vmatmul.mubr.bf16.gmra.mxu0 %v169
  %v549 = vpop.f32.mrf.mxu0
  %v550 = vadd.f32 0.0, %v549
  %v551 = vpop.f32.mrf.mxu0
  %v552 = vadd.f32 0.0, %v551
  %v553 = vpop.f32.mrf.mxu0
  %v554 = vadd.f32 0.0, %v553
  %v555 = vpop.f32.mrf.mxu0
  %v556 = vadd.f32 0.0, %v555
  %557 = vmatprep.mubr.bf16.mxu0 0
  %558 = vmatmul.mubr.bf16.gmra.mxu0 %v170
  %v559 = vpop.f32.mrf.mxu0
  %v560 = vadd.f32 0.0, %v559
  %v561 = vpop.f32.mrf.mxu0
  %v562 = vadd.f32 0.0, %v561
  %v563 = vpop.f32.mrf.mxu0
  %v564 = vadd.f32 0.0, %v563
  %v565 = vpop.f32.mrf.mxu0
  %v566 = vadd.f32 0.0, %v565
  %567 = vmatprep.mubr.bf16.mxu0 0
  %568 = vmatmul.mubr.bf16.gmra.mxu0 %v171
  %v569 = vpop.f32.mrf.mxu0
  %v570 = vadd.f32 0.0, %v569
  %v571 = vpop.f32.mrf.mxu0
  %v572 = vadd.f32 0.0, %v571
  %v573 = vpop.f32.mrf.mxu0
  %v574 = vadd.f32 0.0, %v573
  %v575 = vpop.f32.mrf.mxu0
  %v576 = vadd.f32 0.0, %v575
  %577 = vmatprep.mubr.bf16.mxu0 0
  %578 = vmatmul.mubr.bf16.gmra.mxu0 %v172
  %v579 = vpop.f32.mrf.mxu0
  %v580 = vadd.f32 0.0, %v579
  %v581 = vpop.f32.mrf.mxu0
  %v582 = vadd.f32 0.0, %v581
  %v583 = vpop.f32.mrf.mxu0
  %v584 = vadd.f32 0.0, %v583
  %v585 = vpop.f32.mrf.mxu0
  %v586 = vadd.f32 0.0, %v585
  %587 = vmatprep.mubr.bf16.mxu0 0
  %588 = vmatmul.mubr.bf16.gmra.mxu0 %v173
  %v589 = vpop.f32.mrf.mxu0
  %v590 = vadd.f32 0.0, %v589
  %v591 = vpop.f32.mrf.mxu0
  %v592 = vadd.f32 0.0, %v591
  %v593 = vpop.f32.mrf.mxu0
  %v594 = vadd.f32 0.0, %v593
  %v595 = vpop.f32.mrf.mxu0
  %v596 = vadd.f32 0.0, %v595
  %597 = vmatprep.mubr.bf16.mxu0 0
  %598 = vmatmul.mubr.bf16.gmra.mxu0 %v174
  %v599 = vpop.f32.mrf.mxu0
  %v600 = vadd.f32 0.0, %v599
  %v601 = vpop.f32.mrf.mxu0
  %v602 = vadd.f32 0.0, %v601
  %v603 = vpop.f32.mrf.mxu0
  %v604 = vadd.f32 0.0, %v603
  %v605 = vpop.f32.mrf.mxu0
  %v606 = vadd.f32 0.0, %v605
  %607 = vmatprep.mubr.bf16.mxu0 0
  %608 = vmatmul.mubr.bf16.gmra.mxu0 %v175
  %v609 = vpop.f32.mrf.mxu0
  %v610 = vadd.f32 0.0, %v609
  %v611 = vpop.f32.mrf.mxu0
  %v612 = vadd.f32 0.0, %v611
  %v613 = vpop.f32.mrf.mxu0
  %v614 = vadd.f32 0.0, %v613
  %v615 = vpop.f32.mrf.mxu0
  %v616 = vadd.f32 0.0, %v615
  %617 = vmatprep.mubr.bf16.mxu0 0
  %618 = vmatmul.mubr.bf16.gmra.mxu0 %v176
  %v619 = vpop.f32.mrf.mxu0
  %v620 = vadd.f32 0.0, %v619
  %v621 = vpop.f32.mrf.mxu0
  %v622 = vadd.f32 0.0, %v621
  %v623 = vpop.f32.mrf.mxu0
  %v624 = vadd.f32 0.0, %v623
  %v625 = vpop.f32.mrf.mxu0
  %v626 = vadd.f32 0.0, %v625
  %627 = vmatprep.mubr.bf16.mxu0 0
  %628 = vmatmul.mubr.bf16.gmra.mxu0 %v177
  %v629 = vpop.f32.mrf.mxu0
  %v630 = vadd.f32 0.0, %v629
  %v631 = vpop.f32.mrf.mxu0
  %v632 = vadd.f32 0.0, %v631
  %v633 = vpop.f32.mrf.mxu0
  %v634 = vadd.f32 0.0, %v633
  %v635 = vpop.f32.mrf.mxu0
  %v636 = vadd.f32 0.0, %v635
  %637 = vmatprep.mubr.bf16.mxu0 0
  %638 = vmatmul.mubr.bf16.gmra.mxu0 %v178
  %v639 = vpop.f32.mrf.mxu0
  %v640 = vadd.f32 0.0, %v639
  %v641 = vpop.f32.mrf.mxu0
  %v642 = vadd.f32 0.0, %v641
  %v643 = vpop.f32.mrf.mxu0
  %v644 = vadd.f32 0.0, %v643
  %v645 = vpop.f32.mrf.mxu0
  %v646 = vadd.f32 0.0, %v645
  %647 = vmatprep.mubr.bf16.mxu0 0
  %648 = vmatmul.mubr.bf16.gmra.mxu0 %v179
  %v649 = vpop.f32.mrf.mxu0
  %v650 = vadd.f32 0.0, %v649
  %v651 = vpop.f32.mrf.mxu0
  %v652 = vadd.f32 0.0, %v651
  %v653 = vpop.f32.mrf.mxu0
  %v654 = vadd.f32 0.0, %v653
  %v655 = vpop.f32.mrf.mxu0
  %v656 = vadd.f32 0.0, %v655
  %657 = vmatprep.mubr.bf16.mxu0 0
  %658 = vmatmul.mubr.bf16.gmra.mxu0 %v180
  %v659 = vpop.f32.mrf.mxu0
  %v660 = vadd.f32 0.0, %v659
  %v661 = vpop.f32.mrf.mxu0
  %v662 = vadd.f32 0.0, %v661
  %v663 = vpop.f32.mrf.mxu0
  %v664 = vadd.f32 0.0, %v663
  %v665 = vpop.f32.mrf.mxu0
  %v666 = vadd.f32 0.0, %v665
  %667 = vmatprep.mubr.bf16.mxu0 0
  %668 = vmatmul.mubr.bf16.gmra.mxu0 %v181
  %v669 = vpop.f32.mrf.mxu0
  %v670 = vadd.f32 0.0, %v669
  %v671 = vpop.f32.mrf.mxu0
  %v672 = vadd.f32 0.0, %v671
  %v673 = vpop.f32.mrf.mxu0
  %v674 = vadd.f32 0.0, %v673
  %v675 = vpop.f32.mrf.mxu0
  %v676 = vadd.f32 0.0, %v675
  %677 = vdwg.mxu0
  %678 = vmatprep.subr.bf16.mxu0 %v446
  %679 = vmatpush1.bf16.msra.mxu0 %v445
  %680 = vmatprep.subr.bf16.mxu0 %v438
  %681 = vmatpush1.bf16.msra.mxu0 %v437
  %682 = vmatprep.subr.bf16.mxu0 %v430
  %683 = vmatpush1.bf16.msra.mxu0 %v429
  %684 = vmatprep.subr.bf16.mxu0 %v422
  %685 = vmatpush1.bf16.msra.mxu0 %v421
  %686 = vmatprep.subr.bf16.mxu0 %v414
  %687 = vmatpush1.bf16.msra.mxu0 %v413
  %688 = vmatprep.subr.bf16.mxu0 %v406
  %689 = vmatpush1.bf16.msra.mxu0 %v405
  %690 = vmatprep.subr.bf16.mxu0 %v398
  %691 = vmatpush1.bf16.msra.mxu0 %v397
  %692 = vmatprep.subr.bf16.mxu0 %v390
  %693 = vmatpush1.bf16.msra.mxu0 %v389
  %694 = vmatprep.subr.bf16.mxu0 0
  %695 = vmatpush2.bf16.msra.mxu0 0
  %696 = vmatprep.subr.bf16.mxu0 0
  %697 = vmatpush2.bf16.msra.mxu0 0
  %698 = vmatprep.subr.bf16.mxu0 0
  %699 = vmatpush2.bf16.msra.mxu0 0
  %700 = vmatprep.subr.bf16.mxu0 0
  %701 = vmatpush2.bf16.msra.mxu0 0
  %702 = vmatprep.subr.bf16.mxu0 0
  %703 = vmatpush2.bf16.msra.mxu0 0
  %704 = vmatprep.subr.bf16.mxu0 0
  %705 = vmatpush2.bf16.msra.mxu0 0
  %706 = vmatprep.subr.bf16.mxu0 0
  %707 = vmatpush2.bf16.msra.mxu0 0
  %708 = vmatprep.subr.bf16.mxu0 0
  %709 = vmatpush2.bf16.msra.mxu0 0
  %710 = vmatprep.mubr.bf16.mxu0 0
  %711 = vmatmul.mubr.bf16.gmra.mxu0 %v169
  %v712 = vpop.f32.mrf.mxu0
  %v713 = vadd.f32 0.0, %v712
  %v714 = vpop.f32.mrf.mxu0
  %v715 = vadd.f32 0.0, %v714
  %v716 = vpop.f32.mrf.mxu0
  %v717 = vadd.f32 0.0, %v716
  %v718 = vpop.f32.mrf.mxu0
  %v719 = vadd.f32 0.0, %v718
  %720 = vmatprep.mubr.bf16.mxu0 0
  %721 = vmatmul.mubr.bf16.gmra.mxu0 %v170
  %v722 = vpop.f32.mrf.mxu0
  %v723 = vadd.f32 0.0, %v722
  %v724 = vpop.f32.mrf.mxu0
  %v725 = vadd.f32 0.0, %v724
  %v726 = vpop.f32.mrf.mxu0
  %v727 = vadd.f32 0.0, %v726
  %v728 = vpop.f32.mrf.mxu0
  %v729 = vadd.f32 0.0, %v728
  %730 = vmatprep.mubr.bf16.mxu0 0
  %731 = vmatmul.mubr.bf16.gmra.mxu0 %v171
  %v732 = vpop.f32.mrf.mxu0
  %v733 = vadd.f32 0.0, %v732
  %v734 = vpop.f32.mrf.mxu0
  %v735 = vadd.f32 0.0, %v734
  %v736 = vpop.f32.mrf.mxu0
  %v737 = vadd.f32 0.0, %v736
  %v738 = vpop.f32.mrf.mxu0
  %v739 = vadd.f32 0.0, %v738
  %740 = vmatprep.mubr.bf16.mxu0 0
  %741 = vmatmul.mubr.bf16.gmra.mxu0 %v172
  %v742 = vpop.f32.mrf.mxu0
  %v743 = vadd.f32 0.0, %v742
  %v744 = vpop.f32.mrf.mxu0
  %v745 = vadd.f32 0.0, %v744
  %v746 = vpop.f32.mrf.mxu0
  %v747 = vadd.f32 0.0, %v746
  %v748 = vpop.f32.mrf.mxu0
  %v749 = vadd.f32 0.0, %v748
  %750 = vmatprep.mubr.bf16.mxu0 0
  %751 = vmatmul.mubr.bf16.gmra.mxu0 %v173
  %v752 = vpop.f32.mrf.mxu0
  %v753 = vadd.f32 0.0, %v752
  %v754 = vpop.f32.mrf.mxu0
  %v755 = vadd.f32 0.0, %v754
  %v756 = vpop.f32.mrf.mxu0
  %v757 = vadd.f32 0.0, %v756
  %v758 = vpop.f32.mrf.mxu0
  %v759 = vadd.f32 0.0, %v758
  %760 = vmatprep.mubr.bf16.mxu0 0
  %761 = vmatmul.mubr.bf16.gmra.mxu0 %v174
  %v762 = vpop.f32.mrf.mxu0
  %v763 = vadd.f32 0.0, %v762
  %v764 = vpop.f32.mrf.mxu0
  %v765 = vadd.f32 0.0, %v764
  %v766 = vpop.f32.mrf.mxu0
  %v767 = vadd.f32 0.0, %v766
  %v768 = vpop.f32.mrf.mxu0
  %v769 = vadd.f32 0.0, %v768
  %770 = vmatprep.mubr.bf16.mxu0 0
  %771 = vmatmul.mubr.bf16.gmra.mxu0 %v175
  %v772 = vpop.f32.mrf.mxu0
  %v773 = vadd.f32 0.0, %v772
  %v774 = vpop.f32.mrf.mxu0
  %v775 = vadd.f32 0.0, %v774
  %v776 = vpop.f32.mrf.mxu0
  %v777 = vadd.f32 0.0, %v776
  %v778 = vpop.f32.mrf.mxu0
  %v779 = vadd.f32 0.0, %v778
  %780 = vmatprep.mubr.bf16.mxu0 0
  %781 = vmatmul.mubr.bf16.gmra.mxu0 %v176
  %v782 = vpop.f32.mrf.mxu0
  %v783 = vadd.f32 0.0, %v782
  %v784 = vpop.f32.mrf.mxu0
  %v785 = vadd.f32 0.0, %v784
  %v786 = vpop.f32.mrf.mxu0
  %v787 = vadd.f32 0.0, %v786
  %v788 = vpop.f32.mrf.mxu0
  %v789 = vadd.f32 0.0, %v788
  %790 = vmatprep.mubr.bf16.mxu0 0
  %791 = vmatmul.mubr.bf16.gmra.mxu0 %v177
  %v792 = vpop.f32.mrf.mxu0
  %v793 = vadd.f32 0.0, %v792
  %v794 = vpop.f32.mrf.mxu0
  %v795 = vadd.f32 0.0, %v794
  %v796 = vpop.f32.mrf.mxu0
  %v797 = vadd.f32 0.0, %v796
  %v798 = vpop.f32.mrf.mxu0
  %v799 = vadd.f32 0.0, %v798
  %800 = vmatprep.mubr.bf16.mxu0 0
  %801 = vmatmul.mubr.bf16.gmra.mxu0 %v178
  %v802 = vpop.f32.mrf.mxu0
  %v803 = vadd.f32 0.0, %v802
  %v804 = vpop.f32.mrf.mxu0
  %v805 = vadd.f32 0.0, %v804
  %v806 = vpop.f32.mrf.mxu0
  %v807 = vadd.f32 0.0, %v806
  %v808 = vpop.f32.mrf.mxu0
  %v809 = vadd.f32 0.0, %v808
  %810 = vmatprep.mubr.bf16.mxu0 0
  %811 = vmatmul.mubr.bf16.gmra.mxu0 %v179
  %v812 = vpop.f32.mrf.mxu0
  %v813 = vadd.f32 0.0, %v812
  %v814 = vpop.f32.mrf.mxu0
  %v815 = vadd.f32 0.0, %v814
  %v816 = vpop.f32.mrf.mxu0
  %v817 = vadd.f32 0.0, %v816
  %v818 = vpop.f32.mrf.mxu0
  %v819 = vadd.f32 0.0, %v818
  %820 = vmatprep.mubr.bf16.mxu0 0
  %821 = vmatmul.mubr.bf16.gmra.mxu0 %v180
  %v822 = vpop.f32.mrf.mxu0
  %v823 = vadd.f32 0.0, %v822
  %v824 = vpop.f32.mrf.mxu0
  %v825 = vadd.f32 0.0, %v824
  %v826 = vpop.f32.mrf.mxu0
  %v827 = vadd.f32 0.0, %v826
  %v828 = vpop.f32.mrf.mxu0
  %v829 = vadd.f32 0.0, %v828
  %830 = vmatprep.mubr.bf16.mxu0 0
  %831 = vmatmul.mubr.bf16.gmra.mxu0 %v181
  %v832 = vpop.f32.mrf.mxu0
  %v833 = vadd.f32 0.0, %v832
  %v834 = vpop.f32.mrf.mxu0
  %v835 = vadd.f32 0.0, %v834
  %v836 = vpop.f32.mrf.mxu0
  %v837 = vadd.f32 0.0, %v836
  %v838 = vpop.f32.mrf.mxu0
  %v839 = vadd.f32 0.0, %v838
  %840 = vdwg.mxu0
  %841 = vmatprep.subr.bf16.mxu0 %v448
  %842 = vmatpush1.bf16.msra.mxu0 %v447
  %843 = vmatprep.subr.bf16.mxu0 %v440
  %844 = vmatpush1.bf16.msra.mxu0 %v439
  %845 = vmatprep.subr.bf16.mxu0 %v432
  %846 = vmatpush1.bf16.msra.mxu0 %v431
  %847 = vmatprep.subr.bf16.mxu0 %v424
  %848 = vmatpush1.bf16.msra.mxu0 %v423
  %849 = vmatprep.subr.bf16.mxu0 %v416
  %850 = vmatpush1.bf16.msra.mxu0 %v415
  %851 = vmatprep.subr.bf16.mxu0 %v408
  %852 = vmatpush1.bf16.msra.mxu0 %v407
  %853 = vmatprep.subr.bf16.mxu0 %v400
  %854 = vmatpush1.bf16.msra.mxu0 %v399
  %855 = vmatprep.subr.bf16.mxu0 %v392
  %856 = vmatpush1.bf16.msra.mxu0 %v391
  %857 = vmatprep.subr.bf16.mxu0 0
  %858 = vmatpush2.bf16.msra.mxu0 0
  %859 = vmatprep.subr.bf16.mxu0 0
  %860 = vmatpush2.bf16.msra.mxu0 0
  %861 = vmatprep.subr.bf16.mxu0 0
  %862 = vmatpush2.bf16.msra.mxu0 0
  %863 = vmatprep.subr.bf16.mxu0 0
  %864 = vmatpush2.bf16.msra.mxu0 0
  %865 = vmatprep.subr.bf16.mxu0 0
  %866 = vmatpush2.bf16.msra.mxu0 0
  %867 = vmatprep.subr.bf16.mxu0 0
  %868 = vmatpush2.bf16.msra.mxu0 0
  %869 = vmatprep.subr.bf16.mxu0 0
  %870 = vmatpush2.bf16.msra.mxu0 0
  %871 = vmatprep.subr.bf16.mxu0 0
  %872 = vmatpush2.bf16.msra.mxu0 0
  %873 = vmatprep.mubr.bf16.mxu0 0
  %874 = vmatmul.mubr.bf16.gmra.mxu0 %v169
  %v875 = vpop.f32.mrf.mxu0
  %v876 = vadd.f32 0.0, %v875
  %v877 = vpop.f32.mrf.mxu0
  %v878 = vadd.f32 0.0, %v877
  %v879 = vpop.f32.mrf.mxu0
  %v880 = vadd.f32 0.0, %v879
  %v881 = vpop.f32.mrf.mxu0
  %v882 = vadd.f32 0.0, %v881
  %883 = vmatprep.mubr.bf16.mxu0 0
  %884 = vmatmul.mubr.bf16.gmra.mxu0 %v170
  %v885 = vpop.f32.mrf.mxu0
  %v886 = vadd.f32 0.0, %v885
  %v887 = vpop.f32.mrf.mxu0
  %v888 = vadd.f32 0.0, %v887
  %v889 = vpop.f32.mrf.mxu0
  %v890 = vadd.f32 0.0, %v889
  %v891 = vpop.f32.mrf.mxu0
  %v892 = vadd.f32 0.0, %v891
  %893 = vmatprep.mubr.bf16.mxu0 0
  %894 = vmatmul.mubr.bf16.gmra.mxu0 %v171
  %v895 = vpop.f32.mrf.mxu0
  %v896 = vadd.f32 0.0, %v895
  %v897 = vpop.f32.mrf.mxu0
  %v898 = vadd.f32 0.0, %v897
  %v899 = vpop.f32.mrf.mxu0
  %v900 = vadd.f32 0.0, %v899
  %v901 = vpop.f32.mrf.mxu0
  %v902 = vadd.f32 0.0, %v901
  %903 = vmatprep.mubr.bf16.mxu0 0
  %904 = vmatmul.mubr.bf16.gmra.mxu0 %v172
  %v905 = vpop.f32.mrf.mxu0
  %v906 = vadd.f32 0.0, %v905
  %v907 = vpop.f32.mrf.mxu0
  %v908 = vadd.f32 0.0, %v907
  %v909 = vpop.f32.mrf.mxu0
  %v910 = vadd.f32 0.0, %v909
  %v911 = vpop.f32.mrf.mxu0
  %v912 = vadd.f32 0.0, %v911
  %913 = vmatprep.mubr.bf16.mxu0 0
  %914 = vmatmul.mubr.bf16.gmra.mxu0 %v173
  %v915 = vpop.f32.mrf.mxu0
  %v916 = vadd.f32 0.0, %v915
  %v917 = vpop.f32.mrf.mxu0
  %v918 = vadd.f32 0.0, %v917
  %v919 = vpop.f32.mrf.mxu0
  %v920 = vadd.f32 0.0, %v919
  %v921 = vpop.f32.mrf.mxu0
  %v922 = vadd.f32 0.0, %v921
  %923 = vmatprep.mubr.bf16.mxu0 0
  %924 = vmatmul.mubr.bf16.gmra.mxu0 %v174
  %v925 = vpop.f32.mrf.mxu0
  %v926 = vadd.f32 0.0, %v925
  %v927 = vpop.f32.mrf.mxu0
  %v928 = vadd.f32 0.0, %v927
  %v929 = vpop.f32.mrf.mxu0
  %v930 = vadd.f32 0.0, %v929
  %v931 = vpop.f32.mrf.mxu0
  %v932 = vadd.f32 0.0, %v931
  %933 = vmatprep.mubr.bf16.mxu0 0
  %934 = vmatmul.mubr.bf16.gmra.mxu0 %v175
  %v935 = vpop.f32.mrf.mxu0
  %v936 = vadd.f32 0.0, %v935
  %v937 = vpop.f32.mrf.mxu0
  %v938 = vadd.f32 0.0, %v937
  %v939 = vpop.f32.mrf.mxu0
  %v940 = vadd.f32 0.0, %v939
  %v941 = vpop.f32.mrf.mxu0
  %v942 = vadd.f32 0.0, %v941
  %943 = vmatprep.mubr.bf16.mxu0 0
  %944 = vmatmul.mubr.bf16.gmra.mxu0 %v176
  %v945 = vpop.f32.mrf.mxu0
  %v946 = vadd.f32 0.0, %v945
  %v947 = vpop.f32.mrf.mxu0
  %v948 = vadd.f32 0.0, %v947
  %v949 = vpop.f32.mrf.mxu0
  %v950 = vadd.f32 0.0, %v949
  %v951 = vpop.f32.mrf.mxu0
  %v952 = vadd.f32 0.0, %v951
  %953 = vmatprep.mubr.bf16.mxu0 0
  %954 = vmatmul.mubr.bf16.gmra.mxu0 %v177
  %v955 = vpop.f32.mrf.mxu0
  %v956 = vadd.f32 0.0, %v955
  %v957 = vpop.f32.mrf.mxu0
  %v958 = vadd.f32 0.0, %v957
  %v959 = vpop.f32.mrf.mxu0
  %v960 = vadd.f32 0.0, %v959
  %v961 = vpop.f32.mrf.mxu0
  %v962 = vadd.f32 0.0, %v961
  %963 = vmatprep.mubr.bf16.mxu0 0
  %964 = vmatmul.mubr.bf16.gmra.mxu0 %v178
  %v965 = vpop.f32.mrf.mxu0
  %v966 = vadd.f32 0.0, %v965
  %v967 = vpop.f32.mrf.mxu0
  %v968 = vadd.f32 0.0, %v967
  %v969 = vpop.f32.mrf.mxu0
  %v970 = vadd.f32 0.0, %v969
  %v971 = vpop.f32.mrf.mxu0
  %v972 = vadd.f32 0.0, %v971
  %973 = vmatprep.mubr.bf16.mxu0 0
  %974 = vmatmul.mubr.bf16.gmra.mxu0 %v179
  %v975 = vpop.f32.mrf.mxu0
  %v976 = vadd.f32 0.0, %v975
  %v977 = vpop.f32.mrf.mxu0
  %v978 = vadd.f32 0.0, %v977
  %v979 = vpop.f32.mrf.mxu0
  %v980 = vadd.f32 0.0, %v979
  %v981 = vpop.f32.mrf.mxu0
  %v982 = vadd.f32 0.0, %v981
  %983 = vmatprep.mubr.bf16.mxu0 0
  %984 = vmatmul.mubr.bf16.gmra.mxu0 %v180
  %v985 = vpop.f32.mrf.mxu0
  %v986 = vadd.f32 0.0, %v985
  %v987 = vpop.f32.mrf.mxu0
  %v988 = vadd.f32 0.0, %v987
  %v989 = vpop.f32.mrf.mxu0
  %v990 = vadd.f32 0.0, %v989
  %v991 = vpop.f32.mrf.mxu0
  %v992 = vadd.f32 0.0, %v991
  %993 = vmatprep.mubr.bf16.mxu0 0
  %994 = vmatmul.mubr.bf16.gmra.mxu0 %v181
  %v995 = vpop.f32.mrf.mxu0
  %v996 = vadd.f32 0.0, %v995
  %v997 = vpop.f32.mrf.mxu0
  %v998 = vadd.f32 0.0, %v997
  %v999 = vpop.f32.mrf.mxu0
  %v1000 = vadd.f32 0.0, %v999
  %v1001 = vpop.f32.mrf.mxu0
  %v1002 = vadd.f32 0.0, %v1001
  %1003 = vdwg.mxu0
  %1004 = vmatprep.subr.bf16.mxu0 %v450
  %1005 = vmatpush1.bf16.msra.mxu0 %v449
  %1006 = vmatprep.subr.bf16.mxu0 %v442
  %1007 = vmatpush1.bf16.msra.mxu0 %v441
  %1008 = vmatprep.subr.bf16.mxu0 %v434
  %1009 = vmatpush1.bf16.msra.mxu0 %v433
  %1010 = vmatprep.subr.bf16.mxu0 %v426
  %1011 = vmatpush1.bf16.msra.mxu0 %v425
  %1012 = vmatprep.subr.bf16.mxu0 %v418
  %1013 = vmatpush1.bf16.msra.mxu0 %v417
  %1014 = vmatprep.subr.bf16.mxu0 %v410
  %1015 = vmatpush1.bf16.msra.mxu0 %v409
  %1016 = vmatprep.subr.bf16.mxu0 %v402
  %1017 = vmatpush1.bf16.msra.mxu0 %v401
  %1018 = vmatprep.subr.bf16.mxu0 %v394
  %1019 = vmatpush1.bf16.msra.mxu0 %v393
  %1020 = vmatprep.subr.bf16.mxu0 0
  %1021 = vmatpush2.bf16.msra.mxu0 0
  %1022 = vmatprep.subr.bf16.mxu0 0
  %1023 = vmatpush2.bf16.msra.mxu0 0
  %1024 = vmatprep.subr.bf16.mxu0 0
  %1025 = vmatpush2.bf16.msra.mxu0 0
  %1026 = vmatprep.subr.bf16.mxu0 0
  %1027 = vmatpush2.bf16.msra.mxu0 0
  %1028 = vmatprep.subr.bf16.mxu0 0
  %1029 = vmatpush2.bf16.msra.mxu0 0
  %1030 = vmatprep.subr.bf16.mxu0 0
  %1031 = vmatpush2.bf16.msra.mxu0 0
  %1032 = vmatprep.subr.bf16.mxu0 0
  %1033 = vmatpush2.bf16.msra.mxu0 0
  %1034 = vmatprep.subr.bf16.mxu0 0
  %1035 = vmatpush2.bf16.msra.mxu0 0
  %1036 = vmatprep.mubr.bf16.mxu0 0
  %1037 = vmatmul.mubr.bf16.gmra.mxu0 %v169
  %v1038 = vpop.f32.mrf.mxu0
  %v1039 = vadd.f32 0.0, %v1038
  %v1040 = vpop.f32.mrf.mxu0
  %v1041 = vadd.f32 0.0, %v1040
  %v1042 = vpop.f32.mrf.mxu0
  %v1043 = vadd.f32 0.0, %v1042
  %v1044 = vpop.f32.mrf.mxu0
  %v1045 = vadd.f32 0.0, %v1044
  %1046 = vmatprep.mubr.bf16.mxu0 0
  %1047 = vmatmul.mubr.bf16.gmra.mxu0 %v170
  %v1048 = vpop.f32.mrf.mxu0
  %v1049 = vadd.f32 0.0, %v1048
  %v1050 = vpop.f32.mrf.mxu0
  %v1051 = vadd.f32 0.0, %v1050
  %v1052 = vpop.f32.mrf.mxu0
  %v1053 = vadd.f32 0.0, %v1052
  %v1054 = vpop.f32.mrf.mxu0
  %v1055 = vadd.f32 0.0, %v1054
  %1056 = vmatprep.mubr.bf16.mxu0 0
  %1057 = vmatmul.mubr.bf16.gmra.mxu0 %v171
  %v1058 = vpop.f32.mrf.mxu0
  %v1059 = vadd.f32 0.0, %v1058
  %v1060 = vpop.f32.mrf.mxu0
  %v1061 = vadd.f32 0.0, %v1060
  %v1062 = vpop.f32.mrf.mxu0
  %v1063 = vadd.f32 0.0, %v1062
  %v1064 = vpop.f32.mrf.mxu0
  %v1065 = vadd.f32 0.0, %v1064
  %1066 = vmatprep.mubr.bf16.mxu0 0
  %1067 = vmatmul.mubr.bf16.gmra.mxu0 %v172
  %v1068 = vpop.f32.mrf.mxu0
  %v1069 = vadd.f32 0.0, %v1068
  %v1070 = vpop.f32.mrf.mxu0
  %v1071 = vadd.f32 0.0, %v1070
  %v1072 = vpop.f32.mrf.mxu0
  %v1073 = vadd.f32 0.0, %v1072
  %v1074 = vpop.f32.mrf.mxu0
  %v1075 = vadd.f32 0.0, %v1074
  %1076 = vmatprep.mubr.bf16.mxu0 0
  %1077 = vmatmul.mubr.bf16.gmra.mxu0 %v173
  %v1078 = vpop.f32.mrf.mxu0
  %v1079 = vadd.f32 0.0, %v1078
  %v1080 = vpop.f32.mrf.mxu0
  %v1081 = vadd.f32 0.0, %v1080
  %v1082 = vpop.f32.mrf.mxu0
  %v1083 = vadd.f32 0.0, %v1082
  %v1084 = vpop.f32.mrf.mxu0
  %v1085 = vadd.f32 0.0, %v1084
  %1086 = vmatprep.mubr.bf16.mxu0 0
  %1087 = vmatmul.mubr.bf16.gmra.mxu0 %v174
  %v1088 = vpop.f32.mrf.mxu0
  %v1089 = vadd.f32 0.0, %v1088
  %v1090 = vpop.f32.mrf.mxu0
  %v1091 = vadd.f32 0.0, %v1090
  %v1092 = vpop.f32.mrf.mxu0
  %v1093 = vadd.f32 0.0, %v1092
  %v1094 = vpop.f32.mrf.mxu0
  %v1095 = vadd.f32 0.0, %v1094
  %1096 = vmatprep.mubr.bf16.mxu0 0
  %1097 = vmatmul.mubr.bf16.gmra.mxu0 %v175
  %v1098 = vpop.f32.mrf.mxu0
  %v1099 = vadd.f32 0.0, %v1098
  %v1100 = vpop.f32.mrf.mxu0
  %v1101 = vadd.f32 0.0, %v1100
  %v1102 = vpop.f32.mrf.mxu0
  %v1103 = vadd.f32 0.0, %v1102
  %v1104 = vpop.f32.mrf.mxu0
  %v1105 = vadd.f32 0.0, %v1104
  %1106 = vmatprep.mubr.bf16.mxu0 0
  %1107 = vmatmul.mubr.bf16.gmra.mxu0 %v176
  %v1108 = vpop.f32.mrf.mxu0
  %v1109 = vadd.f32 0.0, %v1108
  %v1110 = vpop.f32.mrf.mxu0
  %v1111 = vadd.f32 0.0, %v1110
  %v1112 = vpop.f32.mrf.mxu0
  %v1113 = vadd.f32 0.0, %v1112
  %v1114 = vpop.f32.mrf.mxu0
  %v1115 = vadd.f32 0.0, %v1114
  %1116 = vmatprep.mubr.bf16.mxu0 0
  %1117 = vmatmul.mubr.bf16.gmra.mxu0 %v177
  %v1118 = vpop.f32.mrf.mxu0
  %v1119 = vadd.f32 0.0, %v1118
  %v1120 = vpop.f32.mrf.mxu0
  %v1121 = vadd.f32 0.0, %v1120
  %v1122 = vpop.f32.mrf.mxu0
  %v1123 = vadd.f32 0.0, %v1122
  %v1124 = vpop.f32.mrf.mxu0
  %v1125 = vadd.f32 0.0, %v1124
  %1126 = vmatprep.mubr.bf16.mxu0 0
  %1127 = vmatmul.mubr.bf16.gmra.mxu0 %v178
  %v1128 = vpop.f32.mrf.mxu0
  %v1129 = vadd.f32 0.0, %v1128
  %v1130 = vpop.f32.mrf.mxu0
  %v1131 = vadd.f32 0.0, %v1130
  %v1132 = vpop.f32.mrf.mxu0
  %v1133 = vadd.f32 0.0, %v1132
  %v1134 = vpop.f32.mrf.mxu0
  %v1135 = vadd.f32 0.0, %v1134
  %1136 = vmatprep.mubr.bf16.mxu0 0
  %1137 = vmatmul.mubr.bf16.gmra.mxu0 %v179
  %v1138 = vpop.f32.mrf.mxu0
  %v1139 = vadd.f32 0.0, %v1138
  %v1140 = vpop.f32.mrf.mxu0
  %v1141 = vadd.f32 0.0, %v1140
  %v1142 = vpop.f32.mrf.mxu0
  %v1143 = vadd.f32 0.0, %v1142
  %v1144 = vpop.f32.mrf.mxu0
  %v1145 = vadd.f32 0.0, %v1144
  %1146 = vmatprep.mubr.bf16.mxu0 0
  %1147 = vmatmul.mubr.bf16.gmra.mxu0 %v180
  %v1148 = vpop.f32.mrf.mxu0
  %v1149 = vadd.f32 0.0, %v1148
  %v1150 = vpop.f32.mrf.mxu0
  %v1151 = vadd.f32 0.0, %v1150
  %v1152 = vpop.f32.mrf.mxu0
  %v1153 = vadd.f32 0.0, %v1152
  %v1154 = vpop.f32.mrf.mxu0
  %v1155 = vadd.f32 0.0, %v1154
  %1156 = vmatprep.mubr.bf16.mxu0 0
  %1157 = vmatmul.mubr.bf16.gmra.mxu0 %v181
  %v1158 = vpop.f32.mrf.mxu0
  %v1159 = vadd.f32 0.0, %v1158
  %v1160 = vpop.f32.mrf.mxu0
  %v1161 = vadd.f32 0.0, %v1160
  %v1162 = vpop.f32.mrf.mxu0
  %v1163 = vadd.f32 0.0, %v1162
  %v1164 = vpop.f32.mrf.mxu0
  %v1165 = vadd.f32 0.0, %v1164
  %1166 = vdwg.mxu0
  %v1167 = vmax.f32 %v550, %v713
  %v1168 = vmax.f32 %v552, %v715
  %v1169 = vmax.f32 %v554, %v717
  %v1170 = vmax.f32 %v556, %v719
  %v1171 = vmax.f32 %v560, %v723
  %v1172 = vmax.f32 %v562, %v725
  %v1173 = vmax.f32 %v564, %v727
  %v1174 = vmax.f32 %v566, %v729
  %v1175 = vmax.f32 %v570, %v733
  %v1176 = vmax.f32 %v572, %v735
  %v1177 = vmax.f32 %v574, %v737
  %v1178 = vmax.f32 %v576, %v739
  %v1179 = vmax.f32 %v580, %v743
  %v1180 = vmax.f32 %v582, %v745
  %v1181 = vmax.f32 %v584, %v747
  %v1182 = vmax.f32 %v586, %v749
  %v1183 = vmax.f32 %v590, %v753
  %v1184 = vmax.f32 %v592, %v755
  %v1185 = vmax.f32 %v594, %v757
  %v1186 = vmax.f32 %v596, %v759
  %v1187 = vmax.f32 %v600, %v763
  %v1188 = vmax.f32 %v602, %v765
  %v1189 = vmax.f32 %v604, %v767
  %v1190 = vmax.f32 %v606, %v769
  %v1191 = vmax.f32 %v610, %v773
  %v1192 = vmax.f32 %v612, %v775
  %v1193 = vmax.f32 %v614, %v777
  %v1194 = vmax.f32 %v616, %v779
  %v1195 = vmax.f32 %v620, %v783
  %v1196 = vmax.f32 %v622, %v785
  %v1197 = vmax.f32 %v624, %v787
  %v1198 = vmax.f32 %v626, %v789
  %v1199 = vmax.f32 %v630, %v793
  %v1200 = vmax.f32 %v632, %v795
  %v1201 = vmax.f32 %v634, %v797
  %v1202 = vmax.f32 %v636, %v799
  %v1203 = vmax.f32 %v640, %v803
  %v1204 = vmax.f32 %v642, %v805
  %v1205 = vmax.f32 %v644, %v807
  %v1206 = vmax.f32 %v646, %v809
  %v1207 = vmax.f32 %v650, %v813
  %v1208 = vmax.f32 %v652, %v815
  %v1209 = vmax.f32 %v654, %v817
  %v1210 = vmax.f32 %v656, %v819
  %v1211 = vmax.f32 %v660, %v823
  %v1212 = vmax.f32 %v662, %v825
  %v1213 = vmax.f32 %v664, %v827
  %v1214 = vmax.f32 %v666, %v829
  %v1215 = vmax.f32 %v670, %v833
  %v1216 = vmax.f32 %v672, %v835
  %v1217 = vmax.f32 %v674, %v837
  %v1218 = vmax.f32 %v676, %v839
  %v1219 = vmax.f32 %v876, %v1039
  %v1220 = vmax.f32 %v878, %v1041
  %v1221 = vmax.f32 %v880, %v1043
  %v1222 = vmax.f32 %v882, %v1045
  %v1223 = vmax.f32 %v886, %v1049
  %v1224 = vmax.f32 %v888, %v1051
  %v1225 = vmax.f32 %v890, %v1053
  %v1226 = vmax.f32 %v892, %v1055
  %v1227 = vmax.f32 %v896, %v1059
  %v1228 = vmax.f32 %v898, %v1061
  %v1229 = vmax.f32 %v900, %v1063
  %v1230 = vmax.f32 %v902, %v1065
  %v1231 = vmax.f32 %v906, %v1069
  %v1232 = vmax.f32 %v908, %v1071
  %v1233 = vmax.f32 %v910, %v1073
  %v1234 = vmax.f32 %v912, %v1075
  %v1235 = vmax.f32 %v916, %v1079
  %v1236 = vmax.f32 %v918, %v1081
  %v1237 = vmax.f32 %v920, %v1083
  %v1238 = vmax.f32 %v922, %v1085
  %v1239 = vmax.f32 %v926, %v1089
  %v1240 = vmax.f32 %v928, %v1091
  %v1241 = vmax.f32 %v930, %v1093
  %v1242 = vmax.f32 %v932, %v1095
  %v1243 = vmax.f32 %v936, %v1099
  %v1244 = vmax.f32 %v938, %v1101
  %v1245 = vmax.f32 %v940, %v1103
  %v1246 = vmax.f32 %v942, %v1105
  %v1247 = vmax.f32 %v946, %v1109
  %v1248 = vmax.f32 %v948, %v1111
  %v1249 = vmax.f32 %v950, %v1113
  %v1250 = vmax.f32 %v952, %v1115
  %v1251 = vmax.f32 %v956, %v1119
  %v1252 = vmax.f32 %v958, %v1121
  %v1253 = vmax.f32 %v960, %v1123
  %v1254 = vmax.f32 %v962, %v1125
  %v1255 = vmax.f32 %v966, %v1129
  %v1256 = vmax.f32 %v968, %v1131
  %v1257 = vmax.f32 %v970, %v1133
  %v1258 = vmax.f32 %v972, %v1135
  %v1259 = vmax.f32 %v976, %v1139
  %v1260 = vmax.f32 %v978, %v1141
  %v1261 = vmax.f32 %v980, %v1143
  %v1262 = vmax.f32 %v982, %v1145
  %v1263 = vmax.f32 %v986, %v1149
  %v1264 = vmax.f32 %v988, %v1151
  %v1265 = vmax.f32 %v990, %v1153
  %v1266 = vmax.f32 %v992, %v1155
  %v1267 = vmax.f32 %v996, %v1159
  %v1268 = vmax.f32 %v998, %v1161
  %v1269 = vmax.f32 %v1000, %v1163
  %v1270 = vmax.f32 %v1002, %v1165
  %v1271 = vmax.f32 %v1167, %v1219
  %v1272 = vmax.f32 %v1168, %v1220
  %v1273 = vmax.f32 %v1169, %v1221
  %v1274 = vmax.f32 %v1170, %v1222
  %v1275 = vmax.f32 %v1171, %v1223
  %v1276 = vmax.f32 %v1172, %v1224
  %v1277 = vmax.f32 %v1173, %v1225
  %v1278 = vmax.f32 %v1174, %v1226
  %v1279 = vmax.f32 %v1175, %v1227
  %v1280 = vmax.f32 %v1176, %v1228
  %v1281 = vmax.f32 %v1177, %v1229
  %v1282 = vmax.f32 %v1178, %v1230
  %v1283 = vmax.f32 %v1179, %v1231
  %v1284 = vmax.f32 %v1180, %v1232
  %v1285 = vmax.f32 %v1181, %v1233
  %v1286 = vmax.f32 %v1182, %v1234
  %v1287 = vmax.f32 %v1183, %v1235
  %v1288 = vmax.f32 %v1184, %v1236
  %v1289 = vmax.f32 %v1185, %v1237
  %v1290 = vmax.f32 %v1186, %v1238
  %v1291 = vmax.f32 %v1187, %v1239
  %v1292 = vmax.f32 %v1188, %v1240
  %v1293 = vmax.f32 %v1189, %v1241
  %v1294 = vmax.f32 %v1190, %v1242
  %v1295 = vmax.f32 %v1191, %v1243
  %v1296 = vmax.f32 %v1192, %v1244
  %v1297 = vmax.f32 %v1193, %v1245
  %v1298 = vmax.f32 %v1194, %v1246
  %v1299 = vmax.f32 %v1195, %v1247
  %v1300 = vmax.f32 %v1196, %v1248
  %v1301 = vmax.f32 %v1197, %v1249
  %v1302 = vmax.f32 %v1198, %v1250
  %v1303 = vmax.f32 %v1199, %v1251
  %v1304 = vmax.f32 %v1200, %v1252
  %v1305 = vmax.f32 %v1201, %v1253
  %v1306 = vmax.f32 %v1202, %v1254
  %v1307 = vmax.f32 %v1203, %v1255
  %v1308 = vmax.f32 %v1204, %v1256
  %v1309 = vmax.f32 %v1205, %v1257
  %v1310 = vmax.f32 %v1206, %v1258
  %v1311 = vmax.f32 %v1207, %v1259
  %v1312 = vmax.f32 %v1208, %v1260
  %v1313 = vmax.f32 %v1209, %v1261
  %v1314 = vmax.f32 %v1210, %v1262
  %v1315 = vmax.f32 %v1211, %v1263
  %v1316 = vmax.f32 %v1212, %v1264
  %v1317 = vmax.f32 %v1213, %v1265
  %v1318 = vmax.f32 %v1214, %v1266
  %v1319 = vmax.f32 %v1215, %v1267
  %v1320 = vmax.f32 %v1216, %v1268
  %v1321 = vmax.f32 %v1217, %v1269
  %v1322 = vmax.f32 %v1218, %v1270
  %v1323 = vld [vmem:[%s2] sm:$0x3]
  %v1325 = vlaneseq
  %v1326 = vshrl.u32 %v1325, 7
  %v1327 = vsub.s32 0, %v1326
  %v1328 = vrot.slane %v1323, %v1327
  %v1329 = vlaneseq
  %v1330 = vshrl.u32 %v1329, 7
  %v1331 = vsub.s32 1, %v1330
  %v1332 = vrot.slane %v1323, %v1331
  %v1335 = vadd.f32 %v1271, %v1328
  %v1336 = vadd.f32 %v1272, %v1332
  %v1337 = vadd.f32 %v1273, %v1328
  %v1338 = vadd.f32 %v1274, %v1332
  %v1339 = vadd.f32 %v1275, %v1328
  %v1340 = vadd.f32 %v1276, %v1332
  %v1341 = vadd.f32 %v1277, %v1328
  %v1342 = vadd.f32 %v1278, %v1332
  %v1343 = vadd.f32 %v1279, %v1328
  %v1344 = vadd.f32 %v1280, %v1332
  %v1345 = vadd.f32 %v1281, %v1328
  %v1346 = vadd.f32 %v1282, %v1332
  %v1347 = vadd.f32 %v1283, %v1328
  %v1348 = vadd.f32 %v1284, %v1332
  %v1349 = vadd.f32 %v1285, %v1328
  %v1350 = vadd.f32 %v1286, %v1332
  %v1351 = vadd.f32 %v1287, %v1328
  %v1352 = vadd.f32 %v1288, %v1332
  %v1353 = vadd.f32 %v1289, %v1328
  %v1354 = vadd.f32 %v1290, %v1332
  %v1355 = vadd.f32 %v1291, %v1328
  %v1356 = vadd.f32 %v1292, %v1332
  %v1357 = vadd.f32 %v1293, %v1328
  %v1358 = vadd.f32 %v1294, %v1332
  %v1359 = vadd.f32 %v1295, %v1328
  %v1360 = vadd.f32 %v1296, %v1332
  %v1361 = vadd.f32 %v1297, %v1328
  %v1362 = vadd.f32 %v1298, %v1332
  %v1363 = vadd.f32 %v1299, %v1328
  %v1364 = vadd.f32 %v1300, %v1332
  %v1365 = vadd.f32 %v1301, %v1328
  %v1366 = vadd.f32 %v1302, %v1332
  %v1367 = vadd.f32 %v1303, %v1328
  %v1368 = vadd.f32 %v1304, %v1332
  %v1369 = vadd.f32 %v1305, %v1328
  %v1370 = vadd.f32 %v1306, %v1332
  %v1371 = vadd.f32 %v1307, %v1328
  %v1372 = vadd.f32 %v1308, %v1332
  %v1373 = vadd.f32 %v1309, %v1328
  %v1374 = vadd.f32 %v1310, %v1332
  %v1375 = vadd.f32 %v1311, %v1328
  %v1376 = vadd.f32 %v1312, %v1332
  %v1377 = vadd.f32 %v1313, %v1328
  %v1378 = vadd.f32 %v1314, %v1332
  %v1379 = vadd.f32 %v1315, %v1328
  %v1380 = vadd.f32 %v1316, %v1332
  %v1381 = vadd.f32 %v1317, %v1328
  %v1382 = vadd.f32 %v1318, %v1332
  %v1383 = vadd.f32 %v1319, %v1328
  %v1384 = vadd.f32 %v1320, %v1332
  %v1385 = vadd.f32 %v1321, %v1328
  %v1386 = vadd.f32 %v1322, %v1332
  %v1387 = vmax.f32 %v1335, 0.0
  %v1388 = vmax.f32 %v1336, 0.0
  %v1389 = vmax.f32 %v1337, 0.0
  %v1390 = vmax.f32 %v1338, 0.0
  %v1391 = vmax.f32 %v1339, 0.0
  %v1392 = vmax.f32 %v1340, 0.0
  %v1393 = vmax.f32 %v1341, 0.0
  %v1394 = vmax.f32 %v1342, 0.0
  %v1395 = vmax.f32 %v1343, 0.0
  %v1396 = vmax.f32 %v1344, 0.0
  %v1397 = vmax.f32 %v1345, 0.0
  %v1398 = vmax.f32 %v1346, 0.0
  %v1399 = vmax.f32 %v1347, 0.0
  %v1400 = vmax.f32 %v1348, 0.0
  %v1401 = vmax.f32 %v1349, 0.0
  %v1402 = vmax.f32 %v1350, 0.0
  %v1403 = vmax.f32 %v1351, 0.0
  %v1404 = vmax.f32 %v1352, 0.0
  %v1405 = vmax.f32 %v1353, 0.0
  %v1406 = vmax.f32 %v1354, 0.0
  %v1407 = vmax.f32 %v1355, 0.0
  %v1408 = vmax.f32 %v1356, 0.0
  %v1409 = vmax.f32 %v1357, 0.0
  %v1410 = vmax.f32 %v1358, 0.0
  %v1411 = vmax.f32 %v1359, 0.0
  %v1412 = vmax.f32 %v1360, 0.0
  %v1413 = vmax.f32 %v1361, 0.0
  %v1414 = vmax.f32 %v1362, 0.0
  %v1415 = vmax.f32 %v1363, 0.0
  %v1416 = vmax.f32 %v1364, 0.0
  %v1417 = vmax.f32 %v1365, 0.0
  %v1418 = vmax.f32 %v1366, 0.0
  %v1419 = vmax.f32 %v1367, 0.0
  %v1420 = vmax.f32 %v1368, 0.0
  %v1421 = vmax.f32 %v1369, 0.0
  %v1422 = vmax.f32 %v1370, 0.0
  %v1423 = vmax.f32 %v1371, 0.0
  %v1424 = vmax.f32 %v1372, 0.0
  %v1425 = vmax.f32 %v1373, 0.0
  %v1426 = vmax.f32 %v1374, 0.0
  %v1427 = vmax.f32 %v1375, 0.0
  %v1428 = vmax.f32 %v1376, 0.0
  %v1429 = vmax.f32 %v1377, 0.0
  %v1430 = vmax.f32 %v1378, 0.0
  %v1431 = vmax.f32 %v1379, 0.0
  %v1432 = vmax.f32 %v1380, 0.0
  %v1433 = vmax.f32 %v1381, 0.0
  %v1434 = vmax.f32 %v1382, 0.0
  %v1435 = vmax.f32 %v1383, 0.0
  %v1436 = vmax.f32 %v1384, 0.0
  %v1437 = vmax.f32 %v1385, 0.0
  %v1438 = vmax.f32 %v1386, 0.0
  %v1439 = vpack.c.bf16 %v1389, %v1387
  %v1440 = vpack.c.bf16 %v1390, %v1388
  %v1441 = vpack.c.bf16 %v1393, %v1391
  %v1442 = vpack.c.bf16 %v1394, %v1392
  %v1443 = vpack.c.bf16 %v1397, %v1395
  %v1444 = vpack.c.bf16 %v1398, %v1396
  %v1445 = vpack.c.bf16 %v1401, %v1399
  %v1446 = vpack.c.bf16 %v1402, %v1400
  %v1447 = vpack.c.bf16 %v1405, %v1403
  %v1448 = vpack.c.bf16 %v1406, %v1404
  %v1449 = vpack.c.bf16 %v1409, %v1407
  %v1450 = vpack.c.bf16 %v1410, %v1408
  %v1451 = vpack.c.bf16 %v1413, %v1411
  %v1452 = vpack.c.bf16 %v1414, %v1412
  %v1453 = vpack.c.bf16 %v1417, %v1415
  %v1454 = vpack.c.bf16 %v1418, %v1416
  %v1455 = vpack.c.bf16 %v1421, %v1419
  %v1456 = vpack.c.bf16 %v1422, %v1420
  %v1457 = vpack.c.bf16 %v1425, %v1423
  %v1458 = vpack.c.bf16 %v1426, %v1424
  %v1459 = vpack.c.bf16 %v1429, %v1427
  %v1460 = vpack.c.bf16 %v1430, %v1428
  %v1461 = vpack.c.bf16 %v1433, %v1431
  %v1462 = vpack.c.bf16 %v1434, %v1432
  %v1463 = vpack.c.bf16 %v1437, %v1435
  %v1464 = vpack.c.bf16 %v1438, %v1436
  %v1465 = vld [vmem:[%s3] sm:$0xf]
  %v1466 = vld [vmem:[%s3 + $0x4] sm:$0xf]
  %v1467 = vld [vmem:[%s3 + $0x8] sm:$0xf]
  %v1468 = vld [vmem:[%s3 + $0xc] sm:$0xf]
  %v1469 = vld [vmem:[%s3 + $0x10] sm:$0xf]
  %v1470 = vld [vmem:[%s3 + $0x14] sm:$0xf]
  %v1471 = vld [vmem:[%s3 + $0x18] sm:$0xf]
  %v1472 = vld [vmem:[%s3 + $0x1c] sm:$0xf]
  %v1473 = vld [vmem:[%s3 + $0x20] sm:$0xf]
  %v1474 = vld [vmem:[%s3 + $0x24] sm:$0xf]
  %v1475 = vld [vmem:[%s3 + $0x28] sm:$0xf]
  %v1476 = vld [vmem:[%s3 + $0x2c] sm:$0xf]
  %v1477 = vld [vmem:[%s3 + $0x30] sm:$0xf]
  %v1478 = vld [vmem:[%s3 + $0x34] sm:$0xf]
  %v1479 = vld [vmem:[%s3 + $0x38] sm:$0xf]
  %v1480 = vld [vmem:[%s3 + $0x3c] sm:$0xf]
  %v1481 = vld [vmem:[%s3 + $0x40] sm:$0xf]
  %v1482 = vld [vmem:[%s3 + $0x44] sm:$0xf]
  %v1483 = vld [vmem:[%s3 + $0x48] sm:$0xf]
  %v1484 = vld [vmem:[%s3 + $0x4c] sm:$0xf]
  %v1485 = vld [vmem:[%s3 + $0x50] sm:$0xf]
  %v1486 = vld [vmem:[%s3 + $0x54] sm:$0xf]
  %v1487 = vld [vmem:[%s3 + $0x58] sm:$0xf]
  %v1488 = vld [vmem:[%s3 + $0x5c] sm:$0xf]
  %v1489 = vld [vmem:[%s3 + $0x60] sm:$0xf]
  %v1490 = vld [vmem:[%s3 + $0x64] sm:$0xf]
  %v1491 = vld [vmem:[%s3 + $0x68] sm:$0xf]
  %v1492 = vld [vmem:[%s3 + $0x6c] sm:$0xf]
  %v1493 = vld [vmem:[%s3 + $0x70] sm:$0xf]
  %v1494 = vld [vmem:[%s3 + $0x74] sm:$0xf]
  %v1495 = vld [vmem:[%s3 + $0x78] sm:$0xf]
  %v1496 = vld [vmem:[%s3 + $0x7c] sm:$0xf]
  %s1497 = scalar_lea.vmem %s3, 128
  %v1498 = vld [vmem:[%s1497] sm:$0xf]
  %v1499 = vld [vmem:[%s1497 + $0x4] sm:$0xf]
  %v1500 = vld [vmem:[%s1497 + $0x8] sm:$0xf]
  %v1501 = vld [vmem:[%s1497 + $0xc] sm:$0xf]
  %v1502 = vld [vmem:[%s1497 + $0x10] sm:$0xf]
  %v1503 = vld [vmem:[%s1497 + $0x14] sm:$0xf]
  %v1504 = vld [vmem:[%s1497 + $0x18] sm:$0xf]
  %v1505 = vld [vmem:[%s1497 + $0x1c] sm:$0xf]
  %v1506 = vld [vmem:[%s1497 + $0x20] sm:$0xf]
  %v1507 = vld [vmem:[%s1497 + $0x24] sm:$0xf]
  %v1508 = vld [vmem:[%s1497 + $0x28] sm:$0xf]
  %v1509 = vld [vmem:[%s1497 + $0x2c] sm:$0xf]
  %v1510 = vld [vmem:[%s1497 + $0x30] sm:$0xf]
  %v1511 = vld [vmem:[%s1497 + $0x34] sm:$0xf]
  %v1512 = vld [vmem:[%s1497 + $0x38] sm:$0xf]
  %v1513 = vld [vmem:[%s1497 + $0x3c] sm:$0xf]
  %v1514 = vld [vmem:[%s1497 + $0x40] sm:$0xf]
  %v1515 = vld [vmem:[%s1497 + $0x44] sm:$0xf]
  %v1516 = vld [vmem:[%s1497 + $0x48] sm:$0xf]
  %v1517 = vld [vmem:[%s1497 + $0x4c] sm:$0xf]
  %v1518 = vld [vmem:[%s1497 + $0x50] sm:$0xf]
  %v1519 = vld [vmem:[%s1497 + $0x54] sm:$0xf]
  %v1520 = vld [vmem:[%s1497 + $0x58] sm:$0xf]
  %v1521 = vld [vmem:[%s1497 + $0x5c] sm:$0xf]
  %v1522 = vld [vmem:[%s1497 + $0x60] sm:$0xf]
  %v1523 = vld [vmem:[%s1497 + $0x64] sm:$0xf]
  %v1524 = vld [vmem:[%s1497 + $0x68] sm:$0xf]
  %v1525 = vld [vmem:[%s1497 + $0x6c] sm:$0xf]
  %v1526 = vld [vmem:[%s1497 + $0x70] sm:$0xf]
  %v1527 = vld [vmem:[%s1497 + $0x74] sm:$0xf]
  %v1528 = vld [vmem:[%s1497 + $0x78] sm:$0xf]
  %v1529 = vld [vmem:[%s1497 + $0x7c] sm:$0xf]
  %v1562 = vunpack.c.l.b16 %v1498
  %v1563 = vunpack.c.l.b16 %v1499
  %v1564 = vunpack.c.l.b16 %v1500
  %v1565 = vunpack.c.l.b16 %v1501
  %v1566 = vunpack.c.l.b16 %v1502
  %v1567 = vunpack.c.l.b16 %v1503
  %v1568 = vunpack.c.l.b16 %v1504
  %v1569 = vunpack.c.l.b16 %v1505
  %v1570 = vunpack.c.l.b16 %v1506
  %v1571 = vunpack.c.l.b16 %v1507
  %v1572 = vunpack.c.l.b16 %v1508
  %v1573 = vunpack.c.l.b16 %v1509
  %v1574 = vunpack.c.l.b16 %v1510
  %v1575 = vunpack.c.l.b16 %v1511
  %v1576 = vunpack.c.l.b16 %v1512
  %v1577 = vunpack.c.l.b16 %v1513
  %v1578 = vunpack.c.l.b16 %v1514
  %v1579 = vunpack.c.l.b16 %v1515
  %v1580 = vunpack.c.l.b16 %v1516
  %v1581 = vunpack.c.l.b16 %v1517
  %v1582 = vunpack.c.l.b16 %v1518
  %v1583 = vunpack.c.l.b16 %v1519
  %v1584 = vunpack.c.l.b16 %v1520
  %v1585 = vunpack.c.l.b16 %v1521
  %v1586 = vunpack.c.l.b16 %v1522
  %v1587 = vunpack.c.l.b16 %v1523
  %v1588 = vunpack.c.l.b16 %v1524
  %v1589 = vunpack.c.l.b16 %v1525
  %v1590 = vunpack.c.l.b16 %v1526
  %v1591 = vunpack.c.l.b16 %v1527
  %v1592 = vunpack.c.l.b16 %v1528
  %v1593 = vunpack.c.l.b16 %v1529
  %v1594 = vpack.c.b16 %v1563, %v1562
  %v1595 = vpack.c.b16 %v1565, %v1564
  %v1596 = vpack.c.b16 %v1567, %v1566
  %v1597 = vpack.c.b16 %v1569, %v1568
  %v1598 = vpack.c.b16 %v1571, %v1570
  %v1599 = vpack.c.b16 %v1573, %v1572
  %v1600 = vpack.c.b16 %v1575, %v1574
  %v1601 = vpack.c.b16 %v1577, %v1576
  %v1602 = vpack.c.b16 %v1579, %v1578
  %v1603 = vpack.c.b16 %v1581, %v1580
  %v1604 = vpack.c.b16 %v1583, %v1582
  %v1605 = vpack.c.b16 %v1585, %v1584
  %v1606 = vpack.c.b16 %v1587, %v1586
  %v1607 = vpack.c.b16 %v1589, %v1588
  %v1608 = vpack.c.b16 %v1591, %v1590
  %v1609 = vpack.c.b16 %v1593, %v1592
  %1626 = vmatprep.subr.bf16.mxu0 0
  %1627 = vmatpush1.bf16.msra.mxu0 %v1601
  %1628 = vmatprep.subr.bf16.mxu0 0
  %1629 = vmatpush1.bf16.msra.mxu0 %v1600
  %1630 = vmatprep.subr.bf16.mxu0 0
  %1631 = vmatpush1.bf16.msra.mxu0 %v1599
  %1632 = vmatprep.subr.bf16.mxu0 0
  %1633 = vmatpush1.bf16.msra.mxu0 %v1598
  %1634 = vmatprep.subr.bf16.mxu0 0
  %1635 = vmatpush1.bf16.msra.mxu0 %v1597
  %1636 = vmatprep.subr.bf16.mxu0 0
  %1637 = vmatpush1.bf16.msra.mxu0 %v1596
  %1638 = vmatprep.subr.bf16.mxu0 0
  %1639 = vmatpush1.bf16.msra.mxu0 %v1595
  %1640 = vmatprep.subr.bf16.mxu0 0
  %1641 = vmatpush1.bf16.msra.mxu0 %v1594
  %1642 = vmatprep.subr.bf16.mxu0 0
  %1643 = vmatpush2.bf16.msra.mxu0 %v1609
  %1644 = vmatprep.subr.bf16.mxu0 0
  %1645 = vmatpush2.bf16.msra.mxu0 %v1608
  %1646 = vmatprep.subr.bf16.mxu0 0
  %1647 = vmatpush2.bf16.msra.mxu0 %v1607
  %1648 = vmatprep.subr.bf16.mxu0 0
  %1649 = vmatpush2.bf16.msra.mxu0 %v1606
  %1650 = vmatprep.subr.bf16.mxu0 0
  %1651 = vmatpush2.bf16.msra.mxu0 %v1605
  %1652 = vmatprep.subr.bf16.mxu0 0
  %1653 = vmatpush2.bf16.msra.mxu0 %v1604
  %1654 = vmatprep.subr.bf16.mxu0 0
  %1655 = vmatpush2.bf16.msra.mxu0 %v1603
  %1656 = vmatprep.subr.bf16.mxu0 0
  %1657 = vmatpush2.bf16.msra.mxu0 %v1602
  %1658 = vmatprep.mubr.bf16.mxu0 %v1442
  %1659 = vmatmul.mubr.bf16.gmra.mxu0 %v1441
  %v1660 = vpop.f32.mrf.mxu0
  %v1661 = vadd.f32 0.0, %v1660
  %v1662 = vpop.f32.mrf.mxu0
  %v1663 = vpop.f32.mrf.mxu0
  %v1664 = vadd.f32 0.0, %v1663
  %v1665 = vpop.f32.mrf.mxu0
  %1666 = vdwg.mxu0
  %v1699 = vunpack.c.l.b16 %v1465
  %v1700 = vunpack.c.l.b16 %v1466
  %v1701 = vunpack.c.l.b16 %v1467
  %v1702 = vunpack.c.l.b16 %v1468
  %v1703 = vunpack.c.l.b16 %v1469
  %v1704 = vunpack.c.l.b16 %v1470
  %v1705 = vunpack.c.l.b16 %v1471
  %v1706 = vunpack.c.l.b16 %v1472
  %v1707 = vunpack.c.l.b16 %v1473
  %v1708 = vunpack.c.l.b16 %v1474
  %v1709 = vunpack.c.l.b16 %v1475
  %v1710 = vunpack.c.l.b16 %v1476
  %v1711 = vunpack.c.l.b16 %v1477
  %v1712 = vunpack.c.l.b16 %v1478
  %v1713 = vunpack.c.l.b16 %v1479
  %v1714 = vunpack.c.l.b16 %v1480
  %v1715 = vunpack.c.l.b16 %v1481
  %v1716 = vunpack.c.l.b16 %v1482
  %v1717 = vunpack.c.l.b16 %v1483
  %v1718 = vunpack.c.l.b16 %v1484
  %v1719 = vunpack.c.l.b16 %v1485
  %v1720 = vunpack.c.l.b16 %v1486
  %v1721 = vunpack.c.l.b16 %v1487
  %v1722 = vunpack.c.l.b16 %v1488
  %v1723 = vunpack.c.l.b16 %v1489
  %v1724 = vunpack.c.l.b16 %v1490
  %v1725 = vunpack.c.l.b16 %v1491
  %v1726 = vunpack.c.l.b16 %v1492
  %v1727 = vunpack.c.l.b16 %v1493
  %v1728 = vunpack.c.l.b16 %v1494
  %v1729 = vunpack.c.l.b16 %v1495
  %v1730 = vunpack.c.l.b16 %v1496
  %v1731 = vpack.c.b16 %v1700, %v1699
  %v1732 = vpack.c.b16 %v1702, %v1701
  %v1733 = vpack.c.b16 %v1704, %v1703
  %v1734 = vpack.c.b16 %v1706, %v1705
  %v1735 = vpack.c.b16 %v1708, %v1707
  %v1736 = vpack.c.b16 %v1710, %v1709
  %v1737 = vpack.c.b16 %v1712, %v1711
  %v1738 = vpack.c.b16 %v1714, %v1713
  %v1739 = vpack.c.b16 %v1716, %v1715
  %v1740 = vpack.c.b16 %v1718, %v1717
  %v1741 = vpack.c.b16 %v1720, %v1719
  %v1742 = vpack.c.b16 %v1722, %v1721
  %v1743 = vpack.c.b16 %v1724, %v1723
  %v1744 = vpack.c.b16 %v1726, %v1725
  %v1745 = vpack.c.b16 %v1728, %v1727
  %v1746 = vpack.c.b16 %v1730, %v1729
  %1763 = vmatprep.subr.bf16.mxu0 0
  %1764 = vmatpush1.bf16.msra.mxu0 %v1738
  %1765 = vmatprep.subr.bf16.mxu0 0
  %1766 = vmatpush1.bf16.msra.mxu0 %v1737
  %1767 = vmatprep.subr.bf16.mxu0 0
  %1768 = vmatpush1.bf16.msra.mxu0 %v1736
  %1769 = vmatprep.subr.bf16.mxu0 0
  %1770 = vmatpush1.bf16.msra.mxu0 %v1735
  %1771 = vmatprep.subr.bf16.mxu0 0
  %1772 = vmatpush1.bf16.msra.mxu0 %v1734
  %1773 = vmatprep.subr.bf16.mxu0 0
  %1774 = vmatpush1.bf16.msra.mxu0 %v1733
  %1775 = vmatprep.subr.bf16.mxu0 0
  %1776 = vmatpush1.bf16.msra.mxu0 %v1732
  %1777 = vmatprep.subr.bf16.mxu0 0
  %1778 = vmatpush1.bf16.msra.mxu0 %v1731
  %1779 = vmatprep.subr.bf16.mxu0 0
  %1780 = vmatpush2.bf16.msra.mxu0 %v1746
  %1781 = vmatprep.subr.bf16.mxu0 0
  %1782 = vmatpush2.bf16.msra.mxu0 %v1745
  %1783 = vmatprep.subr.bf16.mxu0 0
  %1784 = vmatpush2.bf16.msra.mxu0 %v1744
  %1785 = vmatprep.subr.bf16.mxu0 0
  %1786 = vmatpush2.bf16.msra.mxu0 %v1743
  %1787 = vmatprep.subr.bf16.mxu0 0
  %1788 = vmatpush2.bf16.msra.mxu0 %v1742
  %1789 = vmatprep.subr.bf16.mxu0 0
  %1790 = vmatpush2.bf16.msra.mxu0 %v1741
  %1791 = vmatprep.subr.bf16.mxu0 0
  %1792 = vmatpush2.bf16.msra.mxu0 %v1740
  %1793 = vmatprep.subr.bf16.mxu0 0
  %1794 = vmatpush2.bf16.msra.mxu0 %v1739
  %1795 = vmatprep.mubr.bf16.mxu0 %v1440
  %1796 = vmatmul.mubr.bf16.gmra.mxu0 %v1439
  %v1797 = vpop.f32.mrf.mxu0
  %v1798 = vadd.f32 %v1661, %v1797
  %v1799 = vpop.f32.mrf.mxu0
  %v1800 = vpop.f32.mrf.mxu0
  %v1801 = vadd.f32 %v1664, %v1800
  %v1802 = vpop.f32.mrf.mxu0
  %1803 = vdwg.mxu0
  %s1804 = scalar_lea.vmem %s3, 256
  %v1805 = vld [vmem:[%s1804] sm:$0xf]
  %v1806 = vld [vmem:[%s1804 + $0x4] sm:$0xf]
  %v1807 = vld [vmem:[%s1804 + $0x8] sm:$0xf]
  %v1808 = vld [vmem:[%s1804 + $0xc] sm:$0xf]
  %v1809 = vld [vmem:[%s1804 + $0x10] sm:$0xf]
  %v1810 = vld [vmem:[%s1804 + $0x14] sm:$0xf]
  %v1811 = vld [vmem:[%s1804 + $0x18] sm:$0xf]
  %v1812 = vld [vmem:[%s1804 + $0x1c] sm:$0xf]
  %v1813 = vld [vmem:[%s1804 + $0x20] sm:$0xf]
  %v1814 = vld [vmem:[%s1804 + $0x24] sm:$0xf]
  %v1815 = vld [vmem:[%s1804 + $0x28] sm:$0xf]
  %v1816 = vld [vmem:[%s1804 + $0x2c] sm:$0xf]
  %v1817 = vld [vmem:[%s1804 + $0x30] sm:$0xf]
  %v1818 = vld [vmem:[%s1804 + $0x34] sm:$0xf]
  %v1819 = vld [vmem:[%s1804 + $0x38] sm:$0xf]
  %v1820 = vld [vmem:[%s1804 + $0x3c] sm:$0xf]
  %v1821 = vld [vmem:[%s1804 + $0x40] sm:$0xf]
  %v1822 = vld [vmem:[%s1804 + $0x44] sm:$0xf]
  %v1823 = vld [vmem:[%s1804 + $0x48] sm:$0xf]
  %v1824 = vld [vmem:[%s1804 + $0x4c] sm:$0xf]
  %v1825 = vld [vmem:[%s1804 + $0x50] sm:$0xf]
  %v1826 = vld [vmem:[%s1804 + $0x54] sm:$0xf]
  %v1827 = vld [vmem:[%s1804 + $0x58] sm:$0xf]
  %v1828 = vld [vmem:[%s1804 + $0x5c] sm:$0xf]
  %v1829 = vld [vmem:[%s1804 + $0x60] sm:$0xf]
  %v1830 = vld [vmem:[%s1804 + $0x64] sm:$0xf]
  %v1831 = vld [vmem:[%s1804 + $0x68] sm:$0xf]
  %v1832 = vld [vmem:[%s1804 + $0x6c] sm:$0xf]
  %v1833 = vld [vmem:[%s1804 + $0x70] sm:$0xf]
  %v1834 = vld [vmem:[%s1804 + $0x74] sm:$0xf]
  %v1835 = vld [vmem:[%s1804 + $0x78] sm:$0xf]
  %v1836 = vld [vmem:[%s1804 + $0x7c] sm:$0xf]
  %v1869 = vunpack.c.l.b16 %v1805
  %v1870 = vunpack.c.l.b16 %v1806
  %v1871 = vunpack.c.l.b16 %v1807
  %v1872 = vunpack.c.l.b16 %v1808
  %v1873 = vunpack.c.l.b16 %v1809
  %v1874 = vunpack.c.l.b16 %v1810
  %v1875 = vunpack.c.l.b16 %v1811
  %v1876 = vunpack.c.l.b16 %v1812
  %v1877 = vunpack.c.l.b16 %v1813
  %v1878 = vunpack.c.l.b16 %v1814
  %v1879 = vunpack.c.l.b16 %v1815
  %v1880 = vunpack.c.l.b16 %v1816
  %v1881 = vunpack.c.l.b16 %v1817
  %v1882 = vunpack.c.l.b16 %v1818
  %v1883 = vunpack.c.l.b16 %v1819
  %v1884 = vunpack.c.l.b16 %v1820
  %v1885 = vunpack.c.l.b16 %v1821
  %v1886 = vunpack.c.l.b16 %v1822
  %v1887 = vunpack.c.l.b16 %v1823
  %v1888 = vunpack.c.l.b16 %v1824
  %v1889 = vunpack.c.l.b16 %v1825
  %v1890 = vunpack.c.l.b16 %v1826
  %v1891 = vunpack.c.l.b16 %v1827
  %v1892 = vunpack.c.l.b16 %v1828
  %v1893 = vunpack.c.l.b16 %v1829
  %v1894 = vunpack.c.l.b16 %v1830
  %v1895 = vunpack.c.l.b16 %v1831
  %v1896 = vunpack.c.l.b16 %v1832
  %v1897 = vunpack.c.l.b16 %v1833
  %v1898 = vunpack.c.l.b16 %v1834
  %v1899 = vunpack.c.l.b16 %v1835
  %v1900 = vunpack.c.l.b16 %v1836
  %v1901 = vpack.c.b16 %v1870, %v1869
  %v1902 = vpack.c.b16 %v1872, %v1871
  %v1903 = vpack.c.b16 %v1874, %v1873
  %v1904 = vpack.c.b16 %v1876, %v1875
  %v1905 = vpack.c.b16 %v1878, %v1877
  %v1906 = vpack.c.b16 %v1880, %v1879
  %v1907 = vpack.c.b16 %v1882, %v1881
  %v1908 = vpack.c.b16 %v1884, %v1883
  %v1909 = vpack.c.b16 %v1886, %v1885
  %v1910 = vpack.c.b16 %v1888, %v1887
  %v1911 = vpack.c.b16 %v1890, %v1889
  %v1912 = vpack.c.b16 %v1892, %v1891
  %v1913 = vpack.c.b16 %v1894, %v1893
  %v1914 = vpack.c.b16 %v1896, %v1895
  %v1915 = vpack.c.b16 %v1898, %v1897
  %v1916 = vpack.c.b16 %v1900, %v1899
  %1933 = vmatprep.subr.bf16.mxu0 0
  %1934 = vmatpush1.bf16.msra.mxu0 %v1908
  %1935 = vmatprep.subr.bf16.mxu0 0
  %1936 = vmatpush1.bf16.msra.mxu0 %v1907
  %1937 = vmatprep.subr.bf16.mxu0 0
  %1938 = vmatpush1.bf16.msra.mxu0 %v1906
  %1939 = vmatprep.subr.bf16.mxu0 0
  %1940 = vmatpush1.bf16.msra.mxu0 %v1905
  %1941 = vmatprep.subr.bf16.mxu0 0
  %1942 = vmatpush1.bf16.msra.mxu0 %v1904
  %1943 = vmatprep.subr.bf16.mxu0 0
  %1944 = vmatpush1.bf16.msra.mxu0 %v1903
  %1945 = vmatprep.subr.bf16.mxu0 0
  %1946 = vmatpush1.bf16.msra.mxu0 %v1902
  %1947 = vmatprep.subr.bf16.mxu0 0
  %1948 = vmatpush1.bf16.msra.mxu0 %v1901
  %1949 = vmatprep.subr.bf16.mxu0 0
  %1950 = vmatpush2.bf16.msra.mxu0 %v1916
  %1951 = vmatprep.subr.bf16.mxu0 0
  %1952 = vmatpush2.bf16.msra.mxu0 %v1915
  %1953 = vmatprep.subr.bf16.mxu0 0
  %1954 = vmatpush2.bf16.msra.mxu0 %v1914
  %1955 = vmatprep.subr.bf16.mxu0 0
  %1956 = vmatpush2.bf16.msra.mxu0 %v1913
  %1957 = vmatprep.subr.bf16.mxu0 0
  %1958 = vmatpush2.bf16.msra.mxu0 %v1912
  %1959 = vmatprep.subr.bf16.mxu0 0
  %1960 = vmatpush2.bf16.msra.mxu0 %v1911
  %1961 = vmatprep.subr.bf16.mxu0 0
  %1962 = vmatpush2.bf16.msra.mxu0 %v1910
  %1963 = vmatprep.subr.bf16.mxu0 0
  %1964 = vmatpush2.bf16.msra.mxu0 %v1909
  %1965 = vmatprep.mubr.bf16.mxu0 %v1444
  %1966 = vmatmul.mubr.bf16.gmra.mxu0 %v1443
  %v1967 = vpop.f32.mrf.mxu0
  %v1968 = vadd.f32 0.0, %v1967
  %v1969 = vpop.f32.mrf.mxu0
  %v1970 = vpop.f32.mrf.mxu0
  %v1971 = vadd.f32 0.0, %v1970
  %v1972 = vpop.f32.mrf.mxu0
  %1973 = vdwg.mxu0
  %v1974 = vadd.f32 %v1798, %v1968
  %v1975 = vadd.f32 %v1801, %v1971
  %s1976 = scalar_lea.vmem %s3, 384
  %v1977 = vld [vmem:[%s1976] sm:$0xf]
  %v1978 = vld [vmem:[%s1976 + $0x4] sm:$0xf]
  %v1979 = vld [vmem:[%s1976 + $0x8] sm:$0xf]
  %v1980 = vld [vmem:[%s1976 + $0xc] sm:$0xf]
  %v1981 = vld [vmem:[%s1976 + $0x10] sm:$0xf]
  %v1982 = vld [vmem:[%s1976 + $0x14] sm:$0xf]
  %v1983 = vld [vmem:[%s1976 + $0x18] sm:$0xf]
  %v1984 = vld [vmem:[%s1976 + $0x1c] sm:$0xf]
  %v1985 = vld [vmem:[%s1976 + $0x20] sm:$0xf]
  %v1986 = vld [vmem:[%s1976 + $0x24] sm:$0xf]
  %v1987 = vld [vmem:[%s1976 + $0x28] sm:$0xf]
  %v1988 = vld [vmem:[%s1976 + $0x2c] sm:$0xf]
  %v1989 = vld [vmem:[%s1976 + $0x30] sm:$0xf]
  %v1990 = vld [vmem:[%s1976 + $0x34] sm:$0xf]
  %v1991 = vld [vmem:[%s1976 + $0x38] sm:$0xf]
  %v1992 = vld [vmem:[%s1976 + $0x3c] sm:$0xf]
  %v1993 = vld [vmem:[%s1976 + $0x40] sm:$0xf]
  %v1994 = vld [vmem:[%s1976 + $0x44] sm:$0xf]
  %v1995 = vld [vmem:[%s1976 + $0x48] sm:$0xf]
  %v1996 = vld [vmem:[%s1976 + $0x4c] sm:$0xf]
  %v1997 = vld [vmem:[%s1976 + $0x50] sm:$0xf]
  %v1998 = vld [vmem:[%s1976 + $0x54] sm:$0xf]
  %v1999 = vld [vmem:[%s1976 + $0x58] sm:$0xf]
  %v2000 = vld [vmem:[%s1976 + $0x5c] sm:$0xf]
  %v2001 = vld [vmem:[%s1976 + $0x60] sm:$0xf]
  %v2002 = vld [vmem:[%s1976 + $0x64] sm:$0xf]
  %v2003 = vld [vmem:[%s1976 + $0x68] sm:$0xf]
  %v2004 = vld [vmem:[%s1976 + $0x6c] sm:$0xf]
  %v2005 = vld [vmem:[%s1976 + $0x70] sm:$0xf]
  %v2006 = vld [vmem:[%s1976 + $0x74] sm:$0xf]
  %v2007 = vld [vmem:[%s1976 + $0x78] sm:$0xf]
  %v2008 = vld [vmem:[%s1976 + $0x7c] sm:$0xf]
  %v2041 = vunpack.c.l.b16 %v1977
  %v2042 = vunpack.c.l.b16 %v1978
  %v2043 = vunpack.c.l.b16 %v1979
  %v2044 = vunpack.c.l.b16 %v1980
  %v2045 = vunpack.c.l.b16 %v1981
  %v2046 = vunpack.c.l.b16 %v1982
  %v2047 = vunpack.c.l.b16 %v1983
  %v2048 = vunpack.c.l.b16 %v1984
  %v2049 = vunpack.c.l.b16 %v1985
  %v2050 = vunpack.c.l.b16 %v1986
  %v2051 = vunpack.c.l.b16 %v1987
  %v2052 = vunpack.c.l.b16 %v1988
  %v2053 = vunpack.c.l.b16 %v1989
  %v2054 = vunpack.c.l.b16 %v1990
  %v2055 = vunpack.c.l.b16 %v1991
  %v2056 = vunpack.c.l.b16 %v1992
  %v2057 = vunpack.c.l.b16 %v1993
  %v2058 = vunpack.c.l.b16 %v1994
  %v2059 = vunpack.c.l.b16 %v1995
  %v2060 = vunpack.c.l.b16 %v1996
  %v2061 = vunpack.c.l.b16 %v1997
  %v2062 = vunpack.c.l.b16 %v1998
  %v2063 = vunpack.c.l.b16 %v1999
  %v2064 = vunpack.c.l.b16 %v2000
  %v2065 = vunpack.c.l.b16 %v2001
  %v2066 = vunpack.c.l.b16 %v2002
  %v2067 = vunpack.c.l.b16 %v2003
  %v2068 = vunpack.c.l.b16 %v2004
  %v2069 = vunpack.c.l.b16 %v2005
  %v2070 = vunpack.c.l.b16 %v2006
  %v2071 = vunpack.c.l.b16 %v2007
  %v2072 = vunpack.c.l.b16 %v2008
  %v2073 = vpack.c.b16 %v2042, %v2041
  %v2074 = vpack.c.b16 %v2044, %v2043
  %v2075 = vpack.c.b16 %v2046, %v2045
  %v2076 = vpack.c.b16 %v2048, %v2047
  %v2077 = vpack.c.b16 %v2050, %v2049
  %v2078 = vpack.c.b16 %v2052, %v2051
  %v2079 = vpack.c.b16 %v2054, %v2053
  %v2080 = vpack.c.b16 %v2056, %v2055
  %v2081 = vpack.c.b16 %v2058, %v2057
  %v2082 = vpack.c.b16 %v2060, %v2059
  %v2083 = vpack.c.b16 %v2062, %v2061
  %v2084 = vpack.c.b16 %v2064, %v2063
  %v2085 = vpack.c.b16 %v2066, %v2065
  %v2086 = vpack.c.b16 %v2068, %v2067
  %v2087 = vpack.c.b16 %v2070, %v2069
  %v2088 = vpack.c.b16 %v2072, %v2071
  %2105 = vmatprep.subr.bf16.mxu0 0
  %2106 = vmatpush1.bf16.msra.mxu0 %v2080
  %2107 = vmatprep.subr.bf16.mxu0 0
  %2108 = vmatpush1.bf16.msra.mxu0 %v2079
  %2109 = vmatprep.subr.bf16.mxu0 0
  %2110 = vmatpush1.bf16.msra.mxu0 %v2078
  %2111 = vmatprep.subr.bf16.mxu0 0
  %2112 = vmatpush1.bf16.msra.mxu0 %v2077
  %2113 = vmatprep.subr.bf16.mxu0 0
  %2114 = vmatpush1.bf16.msra.mxu0 %v2076
  %2115 = vmatprep.subr.bf16.mxu0 0
  %2116 = vmatpush1.bf16.msra.mxu0 %v2075
  %2117 = vmatprep.subr.bf16.mxu0 0
  %2118 = vmatpush1.bf16.msra.mxu0 %v2074
  %2119 = vmatprep.subr.bf16.mxu0 0
  %2120 = vmatpush1.bf16.msra.mxu0 %v2073
  %2121 = vmatprep.subr.bf16.mxu0 0
  %2122 = vmatpush2.bf16.msra.mxu0 %v2088
  %2123 = vmatprep.subr.bf16.mxu0 0
  %2124 = vmatpush2.bf16.msra.mxu0 %v2087
  %2125 = vmatprep.subr.bf16.mxu0 0
  %2126 = vmatpush2.bf16.msra.mxu0 %v2086
  %2127 = vmatprep.subr.bf16.mxu0 0
  %2128 = vmatpush2.bf16.msra.mxu0 %v2085
  %2129 = vmatprep.subr.bf16.mxu0 0
  %2130 = vmatpush2.bf16.msra.mxu0 %v2084
  %2131 = vmatprep.subr.bf16.mxu0 0
  %2132 = vmatpush2.bf16.msra.mxu0 %v2083
  %2133 = vmatprep.subr.bf16.mxu0 0
  %2134 = vmatpush2.bf16.msra.mxu0 %v2082
  %2135 = vmatprep.subr.bf16.mxu0 0
  %2136 = vmatpush2.bf16.msra.mxu0 %v2081
  %2137 = vmatprep.mubr.bf16.mxu0 %v1446
  %2138 = vmatmul.mubr.bf16.gmra.mxu0 %v1445
  %v2139 = vpop.f32.mrf.mxu0
  %v2140 = vadd.f32 0.0, %v2139
  %v2141 = vpop.f32.mrf.mxu0
  %v2142 = vpop.f32.mrf.mxu0
  %v2143 = vadd.f32 0.0, %v2142
  %v2144 = vpop.f32.mrf.mxu0
  %2145 = vdwg.mxu0
  %v2146 = vadd.f32 %v1974, %v2140
  %v2147 = vadd.f32 %v1975, %v2143
  %s2148 = scalar_lea.vmem %s3, 512
  %v2149 = vld [vmem:[%s2148] sm:$0xf]
  %v2150 = vld [vmem:[%s2148 + $0x4] sm:$0xf]
  %v2151 = vld [vmem:[%s2148 + $0x8] sm:$0xf]
  %v2152 = vld [vmem:[%s2148 + $0xc] sm:$0xf]
  %v2153 = vld [vmem:[%s2148 + $0x10] sm:$0xf]
  %v2154 = vld [vmem:[%s2148 + $0x14] sm:$0xf]
  %v2155 = vld [vmem:[%s2148 + $0x18] sm:$0xf]
  %v2156 = vld [vmem:[%s2148 + $0x1c] sm:$0xf]
  %v2157 = vld [vmem:[%s2148 + $0x20] sm:$0xf]
  %v2158 = vld [vmem:[%s2148 + $0x24] sm:$0xf]
  %v2159 = vld [vmem:[%s2148 + $0x28] sm:$0xf]
  %v2160 = vld [vmem:[%s2148 + $0x2c] sm:$0xf]
  %v2161 = vld [vmem:[%s2148 + $0x30] sm:$0xf]
  %v2162 = vld [vmem:[%s2148 + $0x34] sm:$0xf]
  %v2163 = vld [vmem:[%s2148 + $0x38] sm:$0xf]
  %v2164 = vld [vmem:[%s2148 + $0x3c] sm:$0xf]
  %v2165 = vld [vmem:[%s2148 + $0x40] sm:$0xf]
  %v2166 = vld [vmem:[%s2148 + $0x44] sm:$0xf]
  %v2167 = vld [vmem:[%s2148 + $0x48] sm:$0xf]
  %v2168 = vld [vmem:[%s2148 + $0x4c] sm:$0xf]
  %v2169 = vld [vmem:[%s2148 + $0x50] sm:$0xf]
  %v2170 = vld [vmem:[%s2148 + $0x54] sm:$0xf]
  %v2171 = vld [vmem:[%s2148 + $0x58] sm:$0xf]
  %v2172 = vld [vmem:[%s2148 + $0x5c] sm:$0xf]
  %v2173 = vld [vmem:[%s2148 + $0x60] sm:$0xf]
  %v2174 = vld [vmem:[%s2148 + $0x64] sm:$0xf]
  %v2175 = vld [vmem:[%s2148 + $0x68] sm:$0xf]
  %v2176 = vld [vmem:[%s2148 + $0x6c] sm:$0xf]
  %v2177 = vld [vmem:[%s2148 + $0x70] sm:$0xf]
  %v2178 = vld [vmem:[%s2148 + $0x74] sm:$0xf]
  %v2179 = vld [vmem:[%s2148 + $0x78] sm:$0xf]
  %v2180 = vld [vmem:[%s2148 + $0x7c] sm:$0xf]
  %v2213 = vunpack.c.l.b16 %v2149
  %v2214 = vunpack.c.l.b16 %v2150
  %v2215 = vunpack.c.l.b16 %v2151
  %v2216 = vunpack.c.l.b16 %v2152
  %v2217 = vunpack.c.l.b16 %v2153
  %v2218 = vunpack.c.l.b16 %v2154
  %v2219 = vunpack.c.l.b16 %v2155
  %v2220 = vunpack.c.l.b16 %v2156
  %v2221 = vunpack.c.l.b16 %v2157
  %v2222 = vunpack.c.l.b16 %v2158
  %v2223 = vunpack.c.l.b16 %v2159
  %v2224 = vunpack.c.l.b16 %v2160
  %v2225 = vunpack.c.l.b16 %v2161
  %v2226 = vunpack.c.l.b16 %v2162
  %v2227 = vunpack.c.l.b16 %v2163
  %v2228 = vunpack.c.l.b16 %v2164
  %v2229 = vunpack.c.l.b16 %v2165
  %v2230 = vunpack.c.l.b16 %v2166
  %v2231 = vunpack.c.l.b16 %v2167
  %v2232 = vunpack.c.l.b16 %v2168
  %v2233 = vunpack.c.l.b16 %v2169
  %v2234 = vunpack.c.l.b16 %v2170
  %v2235 = vunpack.c.l.b16 %v2171
  %v2236 = vunpack.c.l.b16 %v2172
  %v2237 = vunpack.c.l.b16 %v2173
  %v2238 = vunpack.c.l.b16 %v2174
  %v2239 = vunpack.c.l.b16 %v2175
  %v2240 = vunpack.c.l.b16 %v2176
  %v2241 = vunpack.c.l.b16 %v2177
  %v2242 = vunpack.c.l.b16 %v2178
  %v2243 = vunpack.c.l.b16 %v2179
  %v2244 = vunpack.c.l.b16 %v2180
  %v2245 = vpack.c.b16 %v2214, %v2213
  %v2246 = vpack.c.b16 %v2216, %v2215
  %v2247 = vpack.c.b16 %v2218, %v2217
  %v2248 = vpack.c.b16 %v2220, %v2219
  %v2249 = vpack.c.b16 %v2222, %v2221
  %v2250 = vpack.c.b16 %v2224, %v2223
  %v2251 = vpack.c.b16 %v2226, %v2225
  %v2252 = vpack.c.b16 %v2228, %v2227
  %v2253 = vpack.c.b16 %v2230, %v2229
  %v2254 = vpack.c.b16 %v2232, %v2231
  %v2255 = vpack.c.b16 %v2234, %v2233
  %v2256 = vpack.c.b16 %v2236, %v2235
  %v2257 = vpack.c.b16 %v2238, %v2237
  %v2258 = vpack.c.b16 %v2240, %v2239
  %v2259 = vpack.c.b16 %v2242, %v2241
  %v2260 = vpack.c.b16 %v2244, %v2243
  %2277 = vmatprep.subr.bf16.mxu0 0
  %2278 = vmatpush1.bf16.msra.mxu0 %v2252
  %2279 = vmatprep.subr.bf16.mxu0 0
  %2280 = vmatpush1.bf16.msra.mxu0 %v2251
  %2281 = vmatprep.subr.bf16.mxu0 0
  %2282 = vmatpush1.bf16.msra.mxu0 %v2250
  %2283 = vmatprep.subr.bf16.mxu0 0
  %2284 = vmatpush1.bf16.msra.mxu0 %v2249
  %2285 = vmatprep.subr.bf16.mxu0 0
  %2286 = vmatpush1.bf16.msra.mxu0 %v2248
  %2287 = vmatprep.subr.bf16.mxu0 0
  %2288 = vmatpush1.bf16.msra.mxu0 %v2247
  %2289 = vmatprep.subr.bf16.mxu0 0
  %2290 = vmatpush1.bf16.msra.mxu0 %v2246
  %2291 = vmatprep.subr.bf16.mxu0 0
  %2292 = vmatpush1.bf16.msra.mxu0 %v2245
  %2293 = vmatprep.subr.bf16.mxu0 0
  %2294 = vmatpush2.bf16.msra.mxu0 %v2260
  %2295 = vmatprep.subr.bf16.mxu0 0
  %2296 = vmatpush2.bf16.msra.mxu0 %v2259
  %2297 = vmatprep.subr.bf16.mxu0 0
  %2298 = vmatpush2.bf16.msra.mxu0 %v2258
  %2299 = vmatprep.subr.bf16.mxu0 0
  %2300 = vmatpush2.bf16.msra.mxu0 %v2257
  %2301 = vmatprep.subr.bf16.mxu0 0
  %2302 = vmatpush2.bf16.msra.mxu0 %v2256
  %2303 = vmatprep.subr.bf16.mxu0 0
  %2304 = vmatpush2.bf16.msra.mxu0 %v2255
  %2305 = vmatprep.subr.bf16.mxu0 0
  %2306 = vmatpush2.bf16.msra.mxu0 %v2254
  %2307 = vmatprep.subr.bf16.mxu0 0
  %2308 = vmatpush2.bf16.msra.mxu0 %v2253
  %2309 = vmatprep.mubr.bf16.mxu0 %v1448
  %2310 = vmatmul.mubr.bf16.gmra.mxu0 %v1447
  %v2311 = vpop.f32.mrf.mxu0
  %v2312 = vadd.f32 0.0, %v2311
  %v2313 = vpop.f32.mrf.mxu0
  %v2314 = vpop.f32.mrf.mxu0
  %v2315 = vadd.f32 0.0, %v2314
  %v2316 = vpop.f32.mrf.mxu0
  %2317 = vdwg.mxu0
  %v2318 = vadd.f32 %v2146, %v2312
  %v2319 = vadd.f32 %v2147, %v2315
  %s2320 = scalar_lea.vmem %s3, 640
  %v2321 = vld [vmem:[%s2320] sm:$0xf]
  %v2322 = vld [vmem:[%s2320 + $0x4] sm:$0xf]
  %v2323 = vld [vmem:[%s2320 + $0x8] sm:$0xf]
  %v2324 = vld [vmem:[%s2320 + $0xc] sm:$0xf]
  %v2325 = vld [vmem:[%s2320 + $0x10] sm:$0xf]
  %v2326 = vld [vmem:[%s2320 + $0x14] sm:$0xf]
  %v2327 = vld [vmem:[%s2320 + $0x18] sm:$0xf]
  %v2328 = vld [vmem:[%s2320 + $0x1c] sm:$0xf]
  %v2329 = vld [vmem:[%s2320 + $0x20] sm:$0xf]
  %v2330 = vld [vmem:[%s2320 + $0x24] sm:$0xf]
  %v2331 = vld [vmem:[%s2320 + $0x28] sm:$0xf]
  %v2332 = vld [vmem:[%s2320 + $0x2c] sm:$0xf]
  %v2333 = vld [vmem:[%s2320 + $0x30] sm:$0xf]
  %v2334 = vld [vmem:[%s2320 + $0x34] sm:$0xf]
  %v2335 = vld [vmem:[%s2320 + $0x38] sm:$0xf]
  %v2336 = vld [vmem:[%s2320 + $0x3c] sm:$0xf]
  %v2337 = vld [vmem:[%s2320 + $0x40] sm:$0xf]
  %v2338 = vld [vmem:[%s2320 + $0x44] sm:$0xf]
  %v2339 = vld [vmem:[%s2320 + $0x48] sm:$0xf]
  %v2340 = vld [vmem:[%s2320 + $0x4c] sm:$0xf]
  %v2341 = vld [vmem:[%s2320 + $0x50] sm:$0xf]
  %v2342 = vld [vmem:[%s2320 + $0x54] sm:$0xf]
  %v2343 = vld [vmem:[%s2320 + $0x58] sm:$0xf]
  %v2344 = vld [vmem:[%s2320 + $0x5c] sm:$0xf]
  %v2345 = vld [vmem:[%s2320 + $0x60] sm:$0xf]
  %v2346 = vld [vmem:[%s2320 + $0x64] sm:$0xf]
  %v2347 = vld [vmem:[%s2320 + $0x68] sm:$0xf]
  %v2348 = vld [vmem:[%s2320 + $0x6c] sm:$0xf]
  %v2349 = vld [vmem:[%s2320 + $0x70] sm:$0xf]
  %v2350 = vld [vmem:[%s2320 + $0x74] sm:$0xf]
  %v2351 = vld [vmem:[%s2320 + $0x78] sm:$0xf]
  %v2352 = vld [vmem:[%s2320 + $0x7c] sm:$0xf]
  %v2385 = vunpack.c.l.b16 %v2321
  %v2386 = vunpack.c.l.b16 %v2322
  %v2387 = vunpack.c.l.b16 %v2323
  %v2388 = vunpack.c.l.b16 %v2324
  %v2389 = vunpack.c.l.b16 %v2325
  %v2390 = vunpack.c.l.b16 %v2326
  %v2391 = vunpack.c.l.b16 %v2327
  %v2392 = vunpack.c.l.b16 %v2328
  %v2393 = vunpack.c.l.b16 %v2329
  %v2394 = vunpack.c.l.b16 %v2330
  %v2395 = vunpack.c.l.b16 %v2331
  %v2396 = vunpack.c.l.b16 %v2332
  %v2397 = vunpack.c.l.b16 %v2333
  %v2398 = vunpack.c.l.b16 %v2334
  %v2399 = vunpack.c.l.b16 %v2335
  %v2400 = vunpack.c.l.b16 %v2336
  %v2401 = vunpack.c.l.b16 %v2337
  %v2402 = vunpack.c.l.b16 %v2338
  %v2403 = vunpack.c.l.b16 %v2339
  %v2404 = vunpack.c.l.b16 %v2340
  %v2405 = vunpack.c.l.b16 %v2341
  %v2406 = vunpack.c.l.b16 %v2342
  %v2407 = vunpack.c.l.b16 %v2343
  %v2408 = vunpack.c.l.b16 %v2344
  %v2409 = vunpack.c.l.b16 %v2345
  %v2410 = vunpack.c.l.b16 %v2346
  %v2411 = vunpack.c.l.b16 %v2347
  %v2412 = vunpack.c.l.b16 %v2348
  %v2413 = vunpack.c.l.b16 %v2349
  %v2414 = vunpack.c.l.b16 %v2350
  %v2415 = vunpack.c.l.b16 %v2351
  %v2416 = vunpack.c.l.b16 %v2352
  %v2417 = vpack.c.b16 %v2386, %v2385
  %v2418 = vpack.c.b16 %v2388, %v2387
  %v2419 = vpack.c.b16 %v2390, %v2389
  %v2420 = vpack.c.b16 %v2392, %v2391
  %v2421 = vpack.c.b16 %v2394, %v2393
  %v2422 = vpack.c.b16 %v2396, %v2395
  %v2423 = vpack.c.b16 %v2398, %v2397
  %v2424 = vpack.c.b16 %v2400, %v2399
  %v2425 = vpack.c.b16 %v2402, %v2401
  %v2426 = vpack.c.b16 %v2404, %v2403
  %v2427 = vpack.c.b16 %v2406, %v2405
  %v2428 = vpack.c.b16 %v2408, %v2407
  %v2429 = vpack.c.b16 %v2410, %v2409
  %v2430 = vpack.c.b16 %v2412, %v2411
  %v2431 = vpack.c.b16 %v2414, %v2413
  %v2432 = vpack.c.b16 %v2416, %v2415
  %2449 = vmatprep.subr.bf16.mxu0 0
  %2450 = vmatpush1.bf16.msra.mxu0 %v2424
  %2451 = vmatprep.subr.bf16.mxu0 0
  %2452 = vmatpush1.bf16.msra.mxu0 %v2423
  %2453 = vmatprep.subr.bf16.mxu0 0
  %2454 = vmatpush1.bf16.msra.mxu0 %v2422
  %2455 = vmatprep.subr.bf16.mxu0 0
  %2456 = vmatpush1.bf16.msra.mxu0 %v2421
  %2457 = vmatprep.subr.bf16.mxu0 0
  %2458 = vmatpush1.bf16.msra.mxu0 %v2420
  %2459 = vmatprep.subr.bf16.mxu0 0
  %2460 = vmatpush1.bf16.msra.mxu0 %v2419
  %2461 = vmatprep.subr.bf16.mxu0 0
  %2462 = vmatpush1.bf16.msra.mxu0 %v2418
  %2463 = vmatprep.subr.bf16.mxu0 0
  %2464 = vmatpush1.bf16.msra.mxu0 %v2417
  %2465 = vmatprep.subr.bf16.mxu0 0
  %2466 = vmatpush2.bf16.msra.mxu0 %v2432
  %2467 = vmatprep.subr.bf16.mxu0 0
  %2468 = vmatpush2.bf16.msra.mxu0 %v2431
  %2469 = vmatprep.subr.bf16.mxu0 0
  %2470 = vmatpush2.bf16.msra.mxu0 %v2430
  %2471 = vmatprep.subr.bf16.mxu0 0
  %2472 = vmatpush2.bf16.msra.mxu0 %v2429
  %2473 = vmatprep.subr.bf16.mxu0 0
  %2474 = vmatpush2.bf16.msra.mxu0 %v2428
  %2475 = vmatprep.subr.bf16.mxu0 0
  %2476 = vmatpush2.bf16.msra.mxu0 %v2427
  %2477 = vmatprep.subr.bf16.mxu0 0
  %2478 = vmatpush2.bf16.msra.mxu0 %v2426
  %2479 = vmatprep.subr.bf16.mxu0 0
  %2480 = vmatpush2.bf16.msra.mxu0 %v2425
  %2481 = vmatprep.mubr.bf16.mxu0 %v1450
  %2482 = vmatmul.mubr.bf16.gmra.mxu0 %v1449
  %v2483 = vpop.f32.mrf.mxu0
  %v2484 = vadd.f32 0.0, %v2483
  %v2485 = vpop.f32.mrf.mxu0
  %v2486 = vpop.f32.mrf.mxu0
  %v2487 = vadd.f32 0.0, %v2486
  %v2488 = vpop.f32.mrf.mxu0
  %2489 = vdwg.mxu0
  %v2490 = vadd.f32 %v2318, %v2484
  %v2491 = vadd.f32 %v2319, %v2487
  %s2492 = scalar_lea.vmem %s3, 768
  %v2493 = vld [vmem:[%s2492] sm:$0xf]
  %v2494 = vld [vmem:[%s2492 + $0x4] sm:$0xf]
  %v2495 = vld [vmem:[%s2492 + $0x8] sm:$0xf]
  %v2496 = vld [vmem:[%s2492 + $0xc] sm:$0xf]
  %v2497 = vld [vmem:[%s2492 + $0x10] sm:$0xf]
  %v2498 = vld [vmem:[%s2492 + $0x14] sm:$0xf]
  %v2499 = vld [vmem:[%s2492 + $0x18] sm:$0xf]
  %v2500 = vld [vmem:[%s2492 + $0x1c] sm:$0xf]
  %v2501 = vld [vmem:[%s2492 + $0x20] sm:$0xf]
  %v2502 = vld [vmem:[%s2492 + $0x24] sm:$0xf]
  %v2503 = vld [vmem:[%s2492 + $0x28] sm:$0xf]
  %v2504 = vld [vmem:[%s2492 + $0x2c] sm:$0xf]
  %v2505 = vld [vmem:[%s2492 + $0x30] sm:$0xf]
  %v2506 = vld [vmem:[%s2492 + $0x34] sm:$0xf]
  %v2507 = vld [vmem:[%s2492 + $0x38] sm:$0xf]
  %v2508 = vld [vmem:[%s2492 + $0x3c] sm:$0xf]
  %v2509 = vld [vmem:[%s2492 + $0x40] sm:$0xf]
  %v2510 = vld [vmem:[%s2492 + $0x44] sm:$0xf]
  %v2511 = vld [vmem:[%s2492 + $0x48] sm:$0xf]
  %v2512 = vld [vmem:[%s2492 + $0x4c] sm:$0xf]
  %v2513 = vld [vmem:[%s2492 + $0x50] sm:$0xf]
  %v2514 = vld [vmem:[%s2492 + $0x54] sm:$0xf]
  %v2515 = vld [vmem:[%s2492 + $0x58] sm:$0xf]
  %v2516 = vld [vmem:[%s2492 + $0x5c] sm:$0xf]
  %v2517 = vld [vmem:[%s2492 + $0x60] sm:$0xf]
  %v2518 = vld [vmem:[%s2492 + $0x64] sm:$0xf]
  %v2519 = vld [vmem:[%s2492 + $0x68] sm:$0xf]
  %v2520 = vld [vmem:[%s2492 + $0x6c] sm:$0xf]
  %v2521 = vld [vmem:[%s2492 + $0x70] sm:$0xf]
  %v2522 = vld [vmem:[%s2492 + $0x74] sm:$0xf]
  %v2523 = vld [vmem:[%s2492 + $0x78] sm:$0xf]
  %v2524 = vld [vmem:[%s2492 + $0x7c] sm:$0xf]
  %v2557 = vunpack.c.l.b16 %v2493
  %v2558 = vunpack.c.l.b16 %v2494
  %v2559 = vunpack.c.l.b16 %v2495
  %v2560 = vunpack.c.l.b16 %v2496
  %v2561 = vunpack.c.l.b16 %v2497
  %v2562 = vunpack.c.l.b16 %v2498
  %v2563 = vunpack.c.l.b16 %v2499
  %v2564 = vunpack.c.l.b16 %v2500
  %v2565 = vunpack.c.l.b16 %v2501
  %v2566 = vunpack.c.l.b16 %v2502
  %v2567 = vunpack.c.l.b16 %v2503
  %v2568 = vunpack.c.l.b16 %v2504
  %v2569 = vunpack.c.l.b16 %v2505
  %v2570 = vunpack.c.l.b16 %v2506
  %v2571 = vunpack.c.l.b16 %v2507
  %v2572 = vunpack.c.l.b16 %v2508
  %v2573 = vunpack.c.l.b16 %v2509
  %v2574 = vunpack.c.l.b16 %v2510
  %v2575 = vunpack.c.l.b16 %v2511
  %v2576 = vunpack.c.l.b16 %v2512
  %v2577 = vunpack.c.l.b16 %v2513
  %v2578 = vunpack.c.l.b16 %v2514
  %v2579 = vunpack.c.l.b16 %v2515
  %v2580 = vunpack.c.l.b16 %v2516
  %v2581 = vunpack.c.l.b16 %v2517
  %v2582 = vunpack.c.l.b16 %v2518
  %v2583 = vunpack.c.l.b16 %v2519
  %v2584 = vunpack.c.l.b16 %v2520
  %v2585 = vunpack.c.l.b16 %v2521
  %v2586 = vunpack.c.l.b16 %v2522
  %v2587 = vunpack.c.l.b16 %v2523
  %v2588 = vunpack.c.l.b16 %v2524
  %v2589 = vpack.c.b16 %v2558, %v2557
  %v2590 = vpack.c.b16 %v2560, %v2559
  %v2591 = vpack.c.b16 %v2562, %v2561
  %v2592 = vpack.c.b16 %v2564, %v2563
  %v2593 = vpack.c.b16 %v2566, %v2565
  %v2594 = vpack.c.b16 %v2568, %v2567
  %v2595 = vpack.c.b16 %v2570, %v2569
  %v2596 = vpack.c.b16 %v2572, %v2571
  %v2597 = vpack.c.b16 %v2574, %v2573
  %v2598 = vpack.c.b16 %v2576, %v2575
  %v2599 = vpack.c.b16 %v2578, %v2577
  %v2600 = vpack.c.b16 %v2580, %v2579
  %v2601 = vpack.c.b16 %v2582, %v2581
  %v2602 = vpack.c.b16 %v2584, %v2583
  %v2603 = vpack.c.b16 %v2586, %v2585
  %v2604 = vpack.c.b16 %v2588, %v2587
  %2621 = vmatprep.subr.bf16.mxu0 0
  %2622 = vmatpush1.bf16.msra.mxu0 %v2596
  %2623 = vmatprep.subr.bf16.mxu0 0
  %2624 = vmatpush1.bf16.msra.mxu0 %v2595
  %2625 = vmatprep.subr.bf16.mxu0 0
  %2626 = vmatpush1.bf16.msra.mxu0 %v2594
  %2627 = vmatprep.subr.bf16.mxu0 0
  %2628 = vmatpush1.bf16.msra.mxu0 %v2593
  %2629 = vmatprep.subr.bf16.mxu0 0
  %2630 = vmatpush1.bf16.msra.mxu0 %v2592
  %2631 = vmatprep.subr.bf16.mxu0 0
  %2632 = vmatpush1.bf16.msra.mxu0 %v2591
  %2633 = vmatprep.subr.bf16.mxu0 0
  %2634 = vmatpush1.bf16.msra.mxu0 %v2590
  %2635 = vmatprep.subr.bf16.mxu0 0
  %2636 = vmatpush1.bf16.msra.mxu0 %v2589
  %2637 = vmatprep.subr.bf16.mxu0 0
  %2638 = vmatpush2.bf16.msra.mxu0 %v2604
  %2639 = vmatprep.subr.bf16.mxu0 0
  %2640 = vmatpush2.bf16.msra.mxu0 %v2603
  %2641 = vmatprep.subr.bf16.mxu0 0
  %2642 = vmatpush2.bf16.msra.mxu0 %v2602
  %2643 = vmatprep.subr.bf16.mxu0 0
  %2644 = vmatpush2.bf16.msra.mxu0 %v2601
  %2645 = vmatprep.subr.bf16.mxu0 0
  %2646 = vmatpush2.bf16.msra.mxu0 %v2600
  %2647 = vmatprep.subr.bf16.mxu0 0
  %2648 = vmatpush2.bf16.msra.mxu0 %v2599
  %2649 = vmatprep.subr.bf16.mxu0 0
  %2650 = vmatpush2.bf16.msra.mxu0 %v2598
  %2651 = vmatprep.subr.bf16.mxu0 0
  %2652 = vmatpush2.bf16.msra.mxu0 %v2597
  %2653 = vmatprep.mubr.bf16.mxu0 %v1452
  %2654 = vmatmul.mubr.bf16.gmra.mxu0 %v1451
  %v2655 = vpop.f32.mrf.mxu0
  %v2656 = vadd.f32 0.0, %v2655
  %v2657 = vpop.f32.mrf.mxu0
  %v2658 = vpop.f32.mrf.mxu0
  %v2659 = vadd.f32 0.0, %v2658
  %v2660 = vpop.f32.mrf.mxu0
  %2661 = vdwg.mxu0
  %v2662 = vadd.f32 %v2490, %v2656
  %v2663 = vadd.f32 %v2491, %v2659
  %s2664 = scalar_lea.vmem %s3, 896
  %v2665 = vld [vmem:[%s2664] sm:$0xf]
  %v2666 = vld [vmem:[%s2664 + $0x4] sm:$0xf]
  %v2667 = vld [vmem:[%s2664 + $0x8] sm:$0xf]
  %v2668 = vld [vmem:[%s2664 + $0xc] sm:$0xf]
  %v2669 = vld [vmem:[%s2664 + $0x10] sm:$0xf]
  %v2670 = vld [vmem:[%s2664 + $0x14] sm:$0xf]
  %v2671 = vld [vmem:[%s2664 + $0x18] sm:$0xf]
  %v2672 = vld [vmem:[%s2664 + $0x1c] sm:$0xf]
  %v2673 = vld [vmem:[%s2664 + $0x20] sm:$0xf]
  %v2674 = vld [vmem:[%s2664 + $0x24] sm:$0xf]
  %v2675 = vld [vmem:[%s2664 + $0x28] sm:$0xf]
  %v2676 = vld [vmem:[%s2664 + $0x2c] sm:$0xf]
  %v2677 = vld [vmem:[%s2664 + $0x30] sm:$0xf]
  %v2678 = vld [vmem:[%s2664 + $0x34] sm:$0xf]
  %v2679 = vld [vmem:[%s2664 + $0x38] sm:$0xf]
  %v2680 = vld [vmem:[%s2664 + $0x3c] sm:$0xf]
  %v2681 = vld [vmem:[%s2664 + $0x40] sm:$0xf]
  %v2682 = vld [vmem:[%s2664 + $0x44] sm:$0xf]
  %v2683 = vld [vmem:[%s2664 + $0x48] sm:$0xf]
  %v2684 = vld [vmem:[%s2664 + $0x4c] sm:$0xf]
  %v2685 = vld [vmem:[%s2664 + $0x50] sm:$0xf]
  %v2686 = vld [vmem:[%s2664 + $0x54] sm:$0xf]
  %v2687 = vld [vmem:[%s2664 + $0x58] sm:$0xf]
  %v2688 = vld [vmem:[%s2664 + $0x5c] sm:$0xf]
  %v2689 = vld [vmem:[%s2664 + $0x60] sm:$0xf]
  %v2690 = vld [vmem:[%s2664 + $0x64] sm:$0xf]
  %v2691 = vld [vmem:[%s2664 + $0x68] sm:$0xf]
  %v2692 = vld [vmem:[%s2664 + $0x6c] sm:$0xf]
  %v2693 = vld [vmem:[%s2664 + $0x70] sm:$0xf]
  %v2694 = vld [vmem:[%s2664 + $0x74] sm:$0xf]
  %v2695 = vld [vmem:[%s2664 + $0x78] sm:$0xf]
  %v2696 = vld [vmem:[%s2664 + $0x7c] sm:$0xf]
  %v2729 = vunpack.c.l.b16 %v2665
  %v2730 = vunpack.c.l.b16 %v2666
  %v2731 = vunpack.c.l.b16 %v2667
  %v2732 = vunpack.c.l.b16 %v2668
  %v2733 = vunpack.c.l.b16 %v2669
  %v2734 = vunpack.c.l.b16 %v2670
  %v2735 = vunpack.c.l.b16 %v2671
  %v2736 = vunpack.c.l.b16 %v2672
  %v2737 = vunpack.c.l.b16 %v2673
  %v2738 = vunpack.c.l.b16 %v2674
  %v2739 = vunpack.c.l.b16 %v2675
  %v2740 = vunpack.c.l.b16 %v2676
  %v2741 = vunpack.c.l.b16 %v2677
  %v2742 = vunpack.c.l.b16 %v2678
  %v2743 = vunpack.c.l.b16 %v2679
  %v2744 = vunpack.c.l.b16 %v2680
  %v2745 = vunpack.c.l.b16 %v2681
  %v2746 = vunpack.c.l.b16 %v2682
  %v2747 = vunpack.c.l.b16 %v2683
  %v2748 = vunpack.c.l.b16 %v2684
  %v2749 = vunpack.c.l.b16 %v2685
  %v2750 = vunpack.c.l.b16 %v2686
  %v2751 = vunpack.c.l.b16 %v2687
  %v2752 = vunpack.c.l.b16 %v2688
  %v2753 = vunpack.c.l.b16 %v2689
  %v2754 = vunpack.c.l.b16 %v2690
  %v2755 = vunpack.c.l.b16 %v2691
  %v2756 = vunpack.c.l.b16 %v2692
  %v2757 = vunpack.c.l.b16 %v2693
  %v2758 = vunpack.c.l.b16 %v2694
  %v2759 = vunpack.c.l.b16 %v2695
  %v2760 = vunpack.c.l.b16 %v2696
  %v2761 = vpack.c.b16 %v2730, %v2729
  %v2762 = vpack.c.b16 %v2732, %v2731
  %v2763 = vpack.c.b16 %v2734, %v2733
  %v2764 = vpack.c.b16 %v2736, %v2735
  %v2765 = vpack.c.b16 %v2738, %v2737
  %v2766 = vpack.c.b16 %v2740, %v2739
  %v2767 = vpack.c.b16 %v2742, %v2741
  %v2768 = vpack.c.b16 %v2744, %v2743
  %v2769 = vpack.c.b16 %v2746, %v2745
  %v2770 = vpack.c.b16 %v2748, %v2747
  %v2771 = vpack.c.b16 %v2750, %v2749
  %v2772 = vpack.c.b16 %v2752, %v2751
  %v2773 = vpack.c.b16 %v2754, %v2753
  %v2774 = vpack.c.b16 %v2756, %v2755
  %v2775 = vpack.c.b16 %v2758, %v2757
  %v2776 = vpack.c.b16 %v2760, %v2759
  %2793 = vmatprep.subr.bf16.mxu0 0
  %2794 = vmatpush1.bf16.msra.mxu0 %v2768
  %2795 = vmatprep.subr.bf16.mxu0 0
  %2796 = vmatpush1.bf16.msra.mxu0 %v2767
  %2797 = vmatprep.subr.bf16.mxu0 0
  %2798 = vmatpush1.bf16.msra.mxu0 %v2766
  %2799 = vmatprep.subr.bf16.mxu0 0
  %2800 = vmatpush1.bf16.msra.mxu0 %v2765
  %2801 = vmatprep.subr.bf16.mxu0 0
  %2802 = vmatpush1.bf16.msra.mxu0 %v2764
  %2803 = vmatprep.subr.bf16.mxu0 0
  %2804 = vmatpush1.bf16.msra.mxu0 %v2763
  %2805 = vmatprep.subr.bf16.mxu0 0
  %2806 = vmatpush1.bf16.msra.mxu0 %v2762
  %2807 = vmatprep.subr.bf16.mxu0 0
  %2808 = vmatpush1.bf16.msra.mxu0 %v2761
  %2809 = vmatprep.subr.bf16.mxu0 0
  %2810 = vmatpush2.bf16.msra.mxu0 %v2776
  %2811 = vmatprep.subr.bf16.mxu0 0
  %2812 = vmatpush2.bf16.msra.mxu0 %v2775
  %2813 = vmatprep.subr.bf16.mxu0 0
  %2814 = vmatpush2.bf16.msra.mxu0 %v2774
  %2815 = vmatprep.subr.bf16.mxu0 0
  %2816 = vmatpush2.bf16.msra.mxu0 %v2773
  %2817 = vmatprep.subr.bf16.mxu0 0
  %2818 = vmatpush2.bf16.msra.mxu0 %v2772
  %2819 = vmatprep.subr.bf16.mxu0 0
  %2820 = vmatpush2.bf16.msra.mxu0 %v2771
  %2821 = vmatprep.subr.bf16.mxu0 0
  %2822 = vmatpush2.bf16.msra.mxu0 %v2770
  %2823 = vmatprep.subr.bf16.mxu0 0
  %2824 = vmatpush2.bf16.msra.mxu0 %v2769
  %2825 = vmatprep.mubr.bf16.mxu0 %v1454
  %2826 = vmatmul.mubr.bf16.gmra.mxu0 %v1453
  %v2827 = vpop.f32.mrf.mxu0
  %v2828 = vadd.f32 0.0, %v2827
  %v2829 = vpop.f32.mrf.mxu0
  %v2830 = vpop.f32.mrf.mxu0
  %v2831 = vadd.f32 0.0, %v2830
  %v2832 = vpop.f32.mrf.mxu0
  %2833 = vdwg.mxu0
  %v2834 = vadd.f32 %v2662, %v2828
  %v2835 = vadd.f32 %v2663, %v2831
  %s2836 = scalar_lea.vmem %s3, 1024
  %v2837 = vld [vmem:[%s2836] sm:$0xf]
  %v2838 = vld [vmem:[%s2836 + $0x4] sm:$0xf]
  %v2839 = vld [vmem:[%s2836 + $0x8] sm:$0xf]
  %v2840 = vld [vmem:[%s2836 + $0xc] sm:$0xf]
  %v2841 = vld [vmem:[%s2836 + $0x10] sm:$0xf]
  %v2842 = vld [vmem:[%s2836 + $0x14] sm:$0xf]
  %v2843 = vld [vmem:[%s2836 + $0x18] sm:$0xf]
  %v2844 = vld [vmem:[%s2836 + $0x1c] sm:$0xf]
  %v2845 = vld [vmem:[%s2836 + $0x20] sm:$0xf]
  %v2846 = vld [vmem:[%s2836 + $0x24] sm:$0xf]
  %v2847 = vld [vmem:[%s2836 + $0x28] sm:$0xf]
  %v2848 = vld [vmem:[%s2836 + $0x2c] sm:$0xf]
  %v2849 = vld [vmem:[%s2836 + $0x30] sm:$0xf]
  %v2850 = vld [vmem:[%s2836 + $0x34] sm:$0xf]
  %v2851 = vld [vmem:[%s2836 + $0x38] sm:$0xf]
  %v2852 = vld [vmem:[%s2836 + $0x3c] sm:$0xf]
  %v2853 = vld [vmem:[%s2836 + $0x40] sm:$0xf]
  %v2854 = vld [vmem:[%s2836 + $0x44] sm:$0xf]
  %v2855 = vld [vmem:[%s2836 + $0x48] sm:$0xf]
  %v2856 = vld [vmem:[%s2836 + $0x4c] sm:$0xf]
  %v2857 = vld [vmem:[%s2836 + $0x50] sm:$0xf]
  %v2858 = vld [vmem:[%s2836 + $0x54] sm:$0xf]
  %v2859 = vld [vmem:[%s2836 + $0x58] sm:$0xf]
  %v2860 = vld [vmem:[%s2836 + $0x5c] sm:$0xf]
  %v2861 = vld [vmem:[%s2836 + $0x60] sm:$0xf]
  %v2862 = vld [vmem:[%s2836 + $0x64] sm:$0xf]
  %v2863 = vld [vmem:[%s2836 + $0x68] sm:$0xf]
  %v2864 = vld [vmem:[%s2836 + $0x6c] sm:$0xf]
  %v2865 = vld [vmem:[%s2836 + $0x70] sm:$0xf]
  %v2866 = vld [vmem:[%s2836 + $0x74] sm:$0xf]
  %v2867 = vld [vmem:[%s2836 + $0x78] sm:$0xf]
  %v2868 = vld [vmem:[%s2836 + $0x7c] sm:$0xf]
  %v2901 = vunpack.c.l.b16 %v2837
  %v2902 = vunpack.c.l.b16 %v2838
  %v2903 = vunpack.c.l.b16 %v2839
  %v2904 = vunpack.c.l.b16 %v2840
  %v2905 = vunpack.c.l.b16 %v2841
  %v2906 = vunpack.c.l.b16 %v2842
  %v2907 = vunpack.c.l.b16 %v2843
  %v2908 = vunpack.c.l.b16 %v2844
  %v2909 = vunpack.c.l.b16 %v2845
  %v2910 = vunpack.c.l.b16 %v2846
  %v2911 = vunpack.c.l.b16 %v2847
  %v2912 = vunpack.c.l.b16 %v2848
  %v2913 = vunpack.c.l.b16 %v2849
  %v2914 = vunpack.c.l.b16 %v2850
  %v2915 = vunpack.c.l.b16 %v2851
  %v2916 = vunpack.c.l.b16 %v2852
  %v2917 = vunpack.c.l.b16 %v2853
  %v2918 = vunpack.c.l.b16 %v2854
  %v2919 = vunpack.c.l.b16 %v2855
  %v2920 = vunpack.c.l.b16 %v2856
  %v2921 = vunpack.c.l.b16 %v2857
  %v2922 = vunpack.c.l.b16 %v2858
  %v2923 = vunpack.c.l.b16 %v2859
  %v2924 = vunpack.c.l.b16 %v2860
  %v2925 = vunpack.c.l.b16 %v2861
  %v2926 = vunpack.c.l.b16 %v2862
  %v2927 = vunpack.c.l.b16 %v2863
  %v2928 = vunpack.c.l.b16 %v2864
  %v2929 = vunpack.c.l.b16 %v2865
  %v2930 = vunpack.c.l.b16 %v2866
  %v2931 = vunpack.c.l.b16 %v2867
  %v2932 = vunpack.c.l.b16 %v2868
  %v2933 = vpack.c.b16 %v2902, %v2901
  %v2934 = vpack.c.b16 %v2904, %v2903
  %v2935 = vpack.c.b16 %v2906, %v2905
  %v2936 = vpack.c.b16 %v2908, %v2907
  %v2937 = vpack.c.b16 %v2910, %v2909
  %v2938 = vpack.c.b16 %v2912, %v2911
  %v2939 = vpack.c.b16 %v2914, %v2913
  %v2940 = vpack.c.b16 %v2916, %v2915
  %v2941 = vpack.c.b16 %v2918, %v2917
  %v2942 = vpack.c.b16 %v2920, %v2919
  %v2943 = vpack.c.b16 %v2922, %v2921
  %v2944 = vpack.c.b16 %v2924, %v2923
  %v2945 = vpack.c.b16 %v2926, %v2925
  %v2946 = vpack.c.b16 %v2928, %v2927
  %v2947 = vpack.c.b16 %v2930, %v2929
  %v2948 = vpack.c.b16 %v2932, %v2931
  %2965 = vmatprep.subr.bf16.mxu0 0
  %2966 = vmatpush1.bf16.msra.mxu0 %v2940
  %2967 = vmatprep.subr.bf16.mxu0 0
  %2968 = vmatpush1.bf16.msra.mxu0 %v2939
  %2969 = vmatprep.subr.bf16.mxu0 0
  %2970 = vmatpush1.bf16.msra.mxu0 %v2938
  %2971 = vmatprep.subr.bf16.mxu0 0
  %2972 = vmatpush1.bf16.msra.mxu0 %v2937
  %2973 = vmatprep.subr.bf16.mxu0 0
  %2974 = vmatpush1.bf16.msra.mxu0 %v2936
  %2975 = vmatprep.subr.bf16.mxu0 0
  %2976 = vmatpush1.bf16.msra.mxu0 %v2935
  %2977 = vmatprep.subr.bf16.mxu0 0
  %2978 = vmatpush1.bf16.msra.mxu0 %v2934
  %2979 = vmatprep.subr.bf16.mxu0 0
  %2980 = vmatpush1.bf16.msra.mxu0 %v2933
  %2981 = vmatprep.subr.bf16.mxu0 0
  %2982 = vmatpush2.bf16.msra.mxu0 %v2948
  %2983 = vmatprep.subr.bf16.mxu0 0
  %2984 = vmatpush2.bf16.msra.mxu0 %v2947
  %2985 = vmatprep.subr.bf16.mxu0 0
  %2986 = vmatpush2.bf16.msra.mxu0 %v2946
  %2987 = vmatprep.subr.bf16.mxu0 0
  %2988 = vmatpush2.bf16.msra.mxu0 %v2945
  %2989 = vmatprep.subr.bf16.mxu0 0
  %2990 = vmatpush2.bf16.msra.mxu0 %v2944
  %2991 = vmatprep.subr.bf16.mxu0 0
  %2992 = vmatpush2.bf16.msra.mxu0 %v2943
  %2993 = vmatprep.subr.bf16.mxu0 0
  %2994 = vmatpush2.bf16.msra.mxu0 %v2942
  %2995 = vmatprep.subr.bf16.mxu0 0
  %2996 = vmatpush2.bf16.msra.mxu0 %v2941
  %2997 = vmatprep.mubr.bf16.mxu0 %v1456
  %2998 = vmatmul.mubr.bf16.gmra.mxu0 %v1455
  %v2999 = vpop.f32.mrf.mxu0
  %v3000 = vadd.f32 0.0, %v2999
  %v3001 = vpop.f32.mrf.mxu0
  %v3002 = vpop.f32.mrf.mxu0
  %v3003 = vadd.f32 0.0, %v3002
  %v3004 = vpop.f32.mrf.mxu0
  %3005 = vdwg.mxu0
  %v3006 = vadd.f32 %v2834, %v3000
  %v3007 = vadd.f32 %v2835, %v3003
  %s3008 = scalar_lea.vmem %s3, 1152
  %v3009 = vld [vmem:[%s3008] sm:$0xf]
  %v3010 = vld [vmem:[%s3008 + $0x4] sm:$0xf]
  %v3011 = vld [vmem:[%s3008 + $0x8] sm:$0xf]
  %v3012 = vld [vmem:[%s3008 + $0xc] sm:$0xf]
  %v3013 = vld [vmem:[%s3008 + $0x10] sm:$0xf]
  %v3014 = vld [vmem:[%s3008 + $0x14] sm:$0xf]
  %v3015 = vld [vmem:[%s3008 + $0x18] sm:$0xf]
  %v3016 = vld [vmem:[%s3008 + $0x1c] sm:$0xf]
  %v3017 = vld [vmem:[%s3008 + $0x20] sm:$0xf]
  %v3018 = vld [vmem:[%s3008 + $0x24] sm:$0xf]
  %v3019 = vld [vmem:[%s3008 + $0x28] sm:$0xf]
  %v3020 = vld [vmem:[%s3008 + $0x2c] sm:$0xf]
  %v3021 = vld [vmem:[%s3008 + $0x30] sm:$0xf]
  %v3022 = vld [vmem:[%s3008 + $0x34] sm:$0xf]
  %v3023 = vld [vmem:[%s3008 + $0x38] sm:$0xf]
  %v3024 = vld [vmem:[%s3008 + $0x3c] sm:$0xf]
  %v3025 = vld [vmem:[%s3008 + $0x40] sm:$0xf]
  %v3026 = vld [vmem:[%s3008 + $0x44] sm:$0xf]
  %v3027 = vld [vmem:[%s3008 + $0x48] sm:$0xf]
  %v3028 = vld [vmem:[%s3008 + $0x4c] sm:$0xf]
  %v3029 = vld [vmem:[%s3008 + $0x50] sm:$0xf]
  %v3030 = vld [vmem:[%s3008 + $0x54] sm:$0xf]
  %v3031 = vld [vmem:[%s3008 + $0x58] sm:$0xf]
  %v3032 = vld [vmem:[%s3008 + $0x5c] sm:$0xf]
  %v3033 = vld [vmem:[%s3008 + $0x60] sm:$0xf]
  %v3034 = vld [vmem:[%s3008 + $0x64] sm:$0xf]
  %v3035 = vld [vmem:[%s3008 + $0x68] sm:$0xf]
  %v3036 = vld [vmem:[%s3008 + $0x6c] sm:$0xf]
  %v3037 = vld [vmem:[%s3008 + $0x70] sm:$0xf]
  %v3038 = vld [vmem:[%s3008 + $0x74] sm:$0xf]
  %v3039 = vld [vmem:[%s3008 + $0x78] sm:$0xf]
  %v3040 = vld [vmem:[%s3008 + $0x7c] sm:$0xf]
  %v3073 = vunpack.c.l.b16 %v3009
  %v3074 = vunpack.c.l.b16 %v3010
  %v3075 = vunpack.c.l.b16 %v3011
  %v3076 = vunpack.c.l.b16 %v3012
  %v3077 = vunpack.c.l.b16 %v3013
  %v3078 = vunpack.c.l.b16 %v3014
  %v3079 = vunpack.c.l.b16 %v3015
  %v3080 = vunpack.c.l.b16 %v3016
  %v3081 = vunpack.c.l.b16 %v3017
  %v3082 = vunpack.c.l.b16 %v3018
  %v3083 = vunpack.c.l.b16 %v3019
  %v3084 = vunpack.c.l.b16 %v3020
  %v3085 = vunpack.c.l.b16 %v3021
  %v3086 = vunpack.c.l.b16 %v3022
  %v3087 = vunpack.c.l.b16 %v3023
  %v3088 = vunpack.c.l.b16 %v3024
  %v3089 = vunpack.c.l.b16 %v3025
  %v3090 = vunpack.c.l.b16 %v3026
  %v3091 = vunpack.c.l.b16 %v3027
  %v3092 = vunpack.c.l.b16 %v3028
  %v3093 = vunpack.c.l.b16 %v3029
  %v3094 = vunpack.c.l.b16 %v3030
  %v3095 = vunpack.c.l.b16 %v3031
  %v3096 = vunpack.c.l.b16 %v3032
  %v3097 = vunpack.c.l.b16 %v3033
  %v3098 = vunpack.c.l.b16 %v3034
  %v3099 = vunpack.c.l.b16 %v3035
  %v3100 = vunpack.c.l.b16 %v3036
  %v3101 = vunpack.c.l.b16 %v3037
  %v3102 = vunpack.c.l.b16 %v3038
  %v3103 = vunpack.c.l.b16 %v3039
  %v3104 = vunpack.c.l.b16 %v3040
  %v3105 = vpack.c.b16 %v3074, %v3073
  %v3106 = vpack.c.b16 %v3076, %v3075
  %v3107 = vpack.c.b16 %v3078, %v3077
  %v3108 = vpack.c.b16 %v3080, %v3079
  %v3109 = vpack.c.b16 %v3082, %v3081
  %v3110 = vpack.c.b16 %v3084, %v3083
  %v3111 = vpack.c.b16 %v3086, %v3085
  %v3112 = vpack.c.b16 %v3088, %v3087
  %v3113 = vpack.c.b16 %v3090, %v3089
  %v3114 = vpack.c.b16 %v3092, %v3091
  %v3115 = vpack.c.b16 %v3094, %v3093
  %v3116 = vpack.c.b16 %v3096, %v3095
  %v3117 = vpack.c.b16 %v3098, %v3097
  %v3118 = vpack.c.b16 %v3100, %v3099
  %v3119 = vpack.c.b16 %v3102, %v3101
  %v3120 = vpack.c.b16 %v3104, %v3103
  %3137 = vmatprep.subr.bf16.mxu0 0
  %3138 = vmatpush1.bf16.msra.mxu0 %v3112
  %3139 = vmatprep.subr.bf16.mxu0 0
  %3140 = vmatpush1.bf16.msra.mxu0 %v3111
  %3141 = vmatprep.subr.bf16.mxu0 0
  %3142 = vmatpush1.bf16.msra.mxu0 %v3110
  %3143 = vmatprep.subr.bf16.mxu0 0
  %3144 = vmatpush1.bf16.msra.mxu0 %v3109
  %3145 = vmatprep.subr.bf16.mxu0 0
  %3146 = vmatpush1.bf16.msra.mxu0 %v3108
  %3147 = vmatprep.subr.bf16.mxu0 0
  %3148 = vmatpush1.bf16.msra.mxu0 %v3107
  %3149 = vmatprep.subr.bf16.mxu0 0
  %3150 = vmatpush1.bf16.msra.mxu0 %v3106
  %3151 = vmatprep.subr.bf16.mxu0 0
  %3152 = vmatpush1.bf16.msra.mxu0 %v3105
  %3153 = vmatprep.subr.bf16.mxu0 0
  %3154 = vmatpush2.bf16.msra.mxu0 %v3120
  %3155 = vmatprep.subr.bf16.mxu0 0
  %3156 = vmatpush2.bf16.msra.mxu0 %v3119
  %3157 = vmatprep.subr.bf16.mxu0 0
  %3158 = vmatpush2.bf16.msra.mxu0 %v3118
  %3159 = vmatprep.subr.bf16.mxu0 0
  %3160 = vmatpush2.bf16.msra.mxu0 %v3117
  %3161 = vmatprep.subr.bf16.mxu0 0
  %3162 = vmatpush2.bf16.msra.mxu0 %v3116
  %3163 = vmatprep.subr.bf16.mxu0 0
  %3164 = vmatpush2.bf16.msra.mxu0 %v3115
  %3165 = vmatprep.subr.bf16.mxu0 0
  %3166 = vmatpush2.bf16.msra.mxu0 %v3114
  %3167 = vmatprep.subr.bf16.mxu0 0
  %3168 = vmatpush2.bf16.msra.mxu0 %v3113
  %3169 = vmatprep.mubr.bf16.mxu0 %v1458
  %3170 = vmatmul.mubr.bf16.gmra.mxu0 %v1457
  %v3171 = vpop.f32.mrf.mxu0
  %v3172 = vadd.f32 0.0, %v3171
  %v3173 = vpop.f32.mrf.mxu0
  %v3174 = vpop.f32.mrf.mxu0
  %v3175 = vadd.f32 0.0, %v3174
  %v3176 = vpop.f32.mrf.mxu0
  %3177 = vdwg.mxu0
  %v3178 = vadd.f32 %v3006, %v3172
  %v3179 = vadd.f32 %v3007, %v3175
  %s3180 = scalar_lea.vmem %s3, 1280
  %v3181 = vld [vmem:[%s3180] sm:$0xf]
  %v3182 = vld [vmem:[%s3180 + $0x4] sm:$0xf]
  %v3183 = vld [vmem:[%s3180 + $0x8] sm:$0xf]
  %v3184 = vld [vmem:[%s3180 + $0xc] sm:$0xf]
  %v3185 = vld [vmem:[%s3180 + $0x10] sm:$0xf]
  %v3186 = vld [vmem:[%s3180 + $0x14] sm:$0xf]
  %v3187 = vld [vmem:[%s3180 + $0x18] sm:$0xf]
  %v3188 = vld [vmem:[%s3180 + $0x1c] sm:$0xf]
  %v3189 = vld [vmem:[%s3180 + $0x20] sm:$0xf]
  %v3190 = vld [vmem:[%s3180 + $0x24] sm:$0xf]
  %v3191 = vld [vmem:[%s3180 + $0x28] sm:$0xf]
  %v3192 = vld [vmem:[%s3180 + $0x2c] sm:$0xf]
  %v3193 = vld [vmem:[%s3180 + $0x30] sm:$0xf]
  %v3194 = vld [vmem:[%s3180 + $0x34] sm:$0xf]
  %v3195 = vld [vmem:[%s3180 + $0x38] sm:$0xf]
  %v3196 = vld [vmem:[%s3180 + $0x3c] sm:$0xf]
  %v3197 = vld [vmem:[%s3180 + $0x40] sm:$0xf]
  %v3198 = vld [vmem:[%s3180 + $0x44] sm:$0xf]
  %v3199 = vld [vmem:[%s3180 + $0x48] sm:$0xf]
  %v3200 = vld [vmem:[%s3180 + $0x4c] sm:$0xf]
  %v3201 = vld [vmem:[%s3180 + $0x50] sm:$0xf]
  %v3202 = vld [vmem:[%s3180 + $0x54] sm:$0xf]
  %v3203 = vld [vmem:[%s3180 + $0x58] sm:$0xf]
  %v3204 = vld [vmem:[%s3180 + $0x5c] sm:$0xf]
  %v3205 = vld [vmem:[%s3180 + $0x60] sm:$0xf]
  %v3206 = vld [vmem:[%s3180 + $0x64] sm:$0xf]
  %v3207 = vld [vmem:[%s3180 + $0x68] sm:$0xf]
  %v3208 = vld [vmem:[%s3180 + $0x6c] sm:$0xf]
  %v3209 = vld [vmem:[%s3180 + $0x70] sm:$0xf]
  %v3210 = vld [vmem:[%s3180 + $0x74] sm:$0xf]
  %v3211 = vld [vmem:[%s3180 + $0x78] sm:$0xf]
  %v3212 = vld [vmem:[%s3180 + $0x7c] sm:$0xf]
  %v3245 = vunpack.c.l.b16 %v3181
  %v3246 = vunpack.c.l.b16 %v3182
  %v3247 = vunpack.c.l.b16 %v3183
  %v3248 = vunpack.c.l.b16 %v3184
  %v3249 = vunpack.c.l.b16 %v3185
  %v3250 = vunpack.c.l.b16 %v3186
  %v3251 = vunpack.c.l.b16 %v3187
  %v3252 = vunpack.c.l.b16 %v3188
  %v3253 = vunpack.c.l.b16 %v3189
  %v3254 = vunpack.c.l.b16 %v3190
  %v3255 = vunpack.c.l.b16 %v3191
  %v3256 = vunpack.c.l.b16 %v3192
  %v3257 = vunpack.c.l.b16 %v3193
  %v3258 = vunpack.c.l.b16 %v3194
  %v3259 = vunpack.c.l.b16 %v3195
  %v3260 = vunpack.c.l.b16 %v3196
  %v3261 = vunpack.c.l.b16 %v3197
  %v3262 = vunpack.c.l.b16 %v3198
  %v3263 = vunpack.c.l.b16 %v3199
  %v3264 = vunpack.c.l.b16 %v3200
  %v3265 = vunpack.c.l.b16 %v3201
  %v3266 = vunpack.c.l.b16 %v3202
  %v3267 = vunpack.c.l.b16 %v3203
  %v3268 = vunpack.c.l.b16 %v3204
  %v3269 = vunpack.c.l.b16 %v3205
  %v3270 = vunpack.c.l.b16 %v3206
  %v3271 = vunpack.c.l.b16 %v3207
  %v3272 = vunpack.c.l.b16 %v3208
  %v3273 = vunpack.c.l.b16 %v3209
  %v3274 = vunpack.c.l.b16 %v3210
  %v3275 = vunpack.c.l.b16 %v3211
  %v3276 = vunpack.c.l.b16 %v3212
  %v3277 = vpack.c.b16 %v3246, %v3245
  %v3278 = vpack.c.b16 %v3248, %v3247
  %v3279 = vpack.c.b16 %v3250, %v3249
  %v3280 = vpack.c.b16 %v3252, %v3251
  %v3281 = vpack.c.b16 %v3254, %v3253
  %v3282 = vpack.c.b16 %v3256, %v3255
  %v3283 = vpack.c.b16 %v3258, %v3257
  %v3284 = vpack.c.b16 %v3260, %v3259
  %v3285 = vpack.c.b16 %v3262, %v3261
  %v3286 = vpack.c.b16 %v3264, %v3263
  %v3287 = vpack.c.b16 %v3266, %v3265
  %v3288 = vpack.c.b16 %v3268, %v3267
  %v3289 = vpack.c.b16 %v3270, %v3269
  %v3290 = vpack.c.b16 %v3272, %v3271
  %v3291 = vpack.c.b16 %v3274, %v3273
  %v3292 = vpack.c.b16 %v3276, %v3275
  %3309 = vmatprep.subr.bf16.mxu0 0
  %3310 = vmatpush1.bf16.msra.mxu0 %v3284
  %3311 = vmatprep.subr.bf16.mxu0 0
  %3312 = vmatpush1.bf16.msra.mxu0 %v3283
  %3313 = vmatprep.subr.bf16.mxu0 0
  %3314 = vmatpush1.bf16.msra.mxu0 %v3282
  %3315 = vmatprep.subr.bf16.mxu0 0
  %3316 = vmatpush1.bf16.msra.mxu0 %v3281
  %3317 = vmatprep.subr.bf16.mxu0 0
  %3318 = vmatpush1.bf16.msra.mxu0 %v3280
  %3319 = vmatprep.subr.bf16.mxu0 0
  %3320 = vmatpush1.bf16.msra.mxu0 %v3279
  %3321 = vmatprep.subr.bf16.mxu0 0
  %3322 = vmatpush1.bf16.msra.mxu0 %v3278
  %3323 = vmatprep.subr.bf16.mxu0 0
  %3324 = vmatpush1.bf16.msra.mxu0 %v3277
  %3325 = vmatprep.subr.bf16.mxu0 0
  %3326 = vmatpush2.bf16.msra.mxu0 %v3292
  %3327 = vmatprep.subr.bf16.mxu0 0
  %3328 = vmatpush2.bf16.msra.mxu0 %v3291
  %3329 = vmatprep.subr.bf16.mxu0 0
  %3330 = vmatpush2.bf16.msra.mxu0 %v3290
  %3331 = vmatprep.subr.bf16.mxu0 0
  %3332 = vmatpush2.bf16.msra.mxu0 %v3289
  %3333 = vmatprep.subr.bf16.mxu0 0
  %3334 = vmatpush2.bf16.msra.mxu0 %v3288
  %3335 = vmatprep.subr.bf16.mxu0 0
  %3336 = vmatpush2.bf16.msra.mxu0 %v3287
  %3337 = vmatprep.subr.bf16.mxu0 0
  %3338 = vmatpush2.bf16.msra.mxu0 %v3286
  %3339 = vmatprep.subr.bf16.mxu0 0
  %3340 = vmatpush2.bf16.msra.mxu0 %v3285
  %3341 = vmatprep.mubr.bf16.mxu0 %v1460
  %3342 = vmatmul.mubr.bf16.gmra.mxu0 %v1459
  %v3343 = vpop.f32.mrf.mxu0
  %v3344 = vadd.f32 0.0, %v3343
  %v3345 = vpop.f32.mrf.mxu0
  %v3346 = vpop.f32.mrf.mxu0
  %v3347 = vadd.f32 0.0, %v3346
  %v3348 = vpop.f32.mrf.mxu0
  %3349 = vdwg.mxu0
  %v3350 = vadd.f32 %v3178, %v3344
  %v3351 = vadd.f32 %v3179, %v3347
  %s3352 = scalar_lea.vmem %s3, 1408
  %v3353 = vld [vmem:[%s3352] sm:$0xf]
  %v3354 = vld [vmem:[%s3352 + $0x4] sm:$0xf]
  %v3355 = vld [vmem:[%s3352 + $0x8] sm:$0xf]
  %v3356 = vld [vmem:[%s3352 + $0xc] sm:$0xf]
  %v3357 = vld [vmem:[%s3352 + $0x10] sm:$0xf]
  %v3358 = vld [vmem:[%s3352 + $0x14] sm:$0xf]
  %v3359 = vld [vmem:[%s3352 + $0x18] sm:$0xf]
  %v3360 = vld [vmem:[%s3352 + $0x1c] sm:$0xf]
  %v3361 = vld [vmem:[%s3352 + $0x20] sm:$0xf]
  %v3362 = vld [vmem:[%s3352 + $0x24] sm:$0xf]
  %v3363 = vld [vmem:[%s3352 + $0x28] sm:$0xf]
  %v3364 = vld [vmem:[%s3352 + $0x2c] sm:$0xf]
  %v3365 = vld [vmem:[%s3352 + $0x30] sm:$0xf]
  %v3366 = vld [vmem:[%s3352 + $0x34] sm:$0xf]
  %v3367 = vld [vmem:[%s3352 + $0x38] sm:$0xf]
  %v3368 = vld [vmem:[%s3352 + $0x3c] sm:$0xf]
  %v3369 = vld [vmem:[%s3352 + $0x40] sm:$0xf]
  %v3370 = vld [vmem:[%s3352 + $0x44] sm:$0xf]
  %v3371 = vld [vmem:[%s3352 + $0x48] sm:$0xf]
  %v3372 = vld [vmem:[%s3352 + $0x4c] sm:$0xf]
  %v3373 = vld [vmem:[%s3352 + $0x50] sm:$0xf]
  %v3374 = vld [vmem:[%s3352 + $0x54] sm:$0xf]
  %v3375 = vld [vmem:[%s3352 + $0x58] sm:$0xf]
  %v3376 = vld [vmem:[%s3352 + $0x5c] sm:$0xf]
  %v3377 = vld [vmem:[%s3352 + $0x60] sm:$0xf]
  %v3378 = vld [vmem:[%s3352 + $0x64] sm:$0xf]
  %v3379 = vld [vmem:[%s3352 + $0x68] sm:$0xf]
  %v3380 = vld [vmem:[%s3352 + $0x6c] sm:$0xf]
  %v3381 = vld [vmem:[%s3352 + $0x70] sm:$0xf]
  %v3382 = vld [vmem:[%s3352 + $0x74] sm:$0xf]
  %v3383 = vld [vmem:[%s3352 + $0x78] sm:$0xf]
  %v3384 = vld [vmem:[%s3352 + $0x7c] sm:$0xf]
  %v3417 = vunpack.c.l.b16 %v3353
  %v3418 = vunpack.c.l.b16 %v3354
  %v3419 = vunpack.c.l.b16 %v3355
  %v3420 = vunpack.c.l.b16 %v3356
  %v3421 = vunpack.c.l.b16 %v3357
  %v3422 = vunpack.c.l.b16 %v3358
  %v3423 = vunpack.c.l.b16 %v3359
  %v3424 = vunpack.c.l.b16 %v3360
  %v3425 = vunpack.c.l.b16 %v3361
  %v3426 = vunpack.c.l.b16 %v3362
  %v3427 = vunpack.c.l.b16 %v3363
  %v3428 = vunpack.c.l.b16 %v3364
  %v3429 = vunpack.c.l.b16 %v3365
  %v3430 = vunpack.c.l.b16 %v3366
  %v3431 = vunpack.c.l.b16 %v3367
  %v3432 = vunpack.c.l.b16 %v3368
  %v3433 = vunpack.c.l.b16 %v3369
  %v3434 = vunpack.c.l.b16 %v3370
  %v3435 = vunpack.c.l.b16 %v3371
  %v3436 = vunpack.c.l.b16 %v3372
  %v3437 = vunpack.c.l.b16 %v3373
  %v3438 = vunpack.c.l.b16 %v3374
  %v3439 = vunpack.c.l.b16 %v3375
  %v3440 = vunpack.c.l.b16 %v3376
  %v3441 = vunpack.c.l.b16 %v3377
  %v3442 = vunpack.c.l.b16 %v3378
  %v3443 = vunpack.c.l.b16 %v3379
  %v3444 = vunpack.c.l.b16 %v3380
  %v3445 = vunpack.c.l.b16 %v3381
  %v3446 = vunpack.c.l.b16 %v3382
  %v3447 = vunpack.c.l.b16 %v3383
  %v3448 = vunpack.c.l.b16 %v3384
  %v3449 = vpack.c.b16 %v3418, %v3417
  %v3450 = vpack.c.b16 %v3420, %v3419
  %v3451 = vpack.c.b16 %v3422, %v3421
  %v3452 = vpack.c.b16 %v3424, %v3423
  %v3453 = vpack.c.b16 %v3426, %v3425
  %v3454 = vpack.c.b16 %v3428, %v3427
  %v3455 = vpack.c.b16 %v3430, %v3429
  %v3456 = vpack.c.b16 %v3432, %v3431
  %v3457 = vpack.c.b16 %v3434, %v3433
  %v3458 = vpack.c.b16 %v3436, %v3435
  %v3459 = vpack.c.b16 %v3438, %v3437
  %v3460 = vpack.c.b16 %v3440, %v3439
  %v3461 = vpack.c.b16 %v3442, %v3441
  %v3462 = vpack.c.b16 %v3444, %v3443
  %v3463 = vpack.c.b16 %v3446, %v3445
  %v3464 = vpack.c.b16 %v3448, %v3447
  %3481 = vmatprep.subr.bf16.mxu0 0
  %3482 = vmatpush1.bf16.msra.mxu0 %v3456
  %3483 = vmatprep.subr.bf16.mxu0 0
  %3484 = vmatpush1.bf16.msra.mxu0 %v3455
  %3485 = vmatprep.subr.bf16.mxu0 0
  %3486 = vmatpush1.bf16.msra.mxu0 %v3454
  %3487 = vmatprep.subr.bf16.mxu0 0
  %3488 = vmatpush1.bf16.msra.mxu0 %v3453
  %3489 = vmatprep.subr.bf16.mxu0 0
  %3490 = vmatpush1.bf16.msra.mxu0 %v3452
  %3491 = vmatprep.subr.bf16.mxu0 0
  %3492 = vmatpush1.bf16.msra.mxu0 %v3451
  %3493 = vmatprep.subr.bf16.mxu0 0
  %3494 = vmatpush1.bf16.msra.mxu0 %v3450
  %3495 = vmatprep.subr.bf16.mxu0 0
  %3496 = vmatpush1.bf16.msra.mxu0 %v3449
  %3497 = vmatprep.subr.bf16.mxu0 0
  %3498 = vmatpush2.bf16.msra.mxu0 %v3464
  %3499 = vmatprep.subr.bf16.mxu0 0
  %3500 = vmatpush2.bf16.msra.mxu0 %v3463
  %3501 = vmatprep.subr.bf16.mxu0 0
  %3502 = vmatpush2.bf16.msra.mxu0 %v3462
  %3503 = vmatprep.subr.bf16.mxu0 0
  %3504 = vmatpush2.bf16.msra.mxu0 %v3461
  %3505 = vmatprep.subr.bf16.mxu0 0
  %3506 = vmatpush2.bf16.msra.mxu0 %v3460
  %3507 = vmatprep.subr.bf16.mxu0 0
  %3508 = vmatpush2.bf16.msra.mxu0 %v3459
  %3509 = vmatprep.subr.bf16.mxu0 0
  %3510 = vmatpush2.bf16.msra.mxu0 %v3458
  %3511 = vmatprep.subr.bf16.mxu0 0
  %3512 = vmatpush2.bf16.msra.mxu0 %v3457
  %3513 = vmatprep.mubr.bf16.mxu0 %v1462
  %3514 = vmatmul.mubr.bf16.gmra.mxu0 %v1461
  %v3515 = vpop.f32.mrf.mxu0
  %v3516 = vadd.f32 0.0, %v3515
  %v3517 = vpop.f32.mrf.mxu0
  %v3518 = vpop.f32.mrf.mxu0
  %v3519 = vadd.f32 0.0, %v3518
  %v3520 = vpop.f32.mrf.mxu0
  %3521 = vdwg.mxu0
  %v3522 = vadd.f32 %v3350, %v3516
  %v3523 = vadd.f32 %v3351, %v3519
  %s3524 = scalar_lea.vmem %s3, 1536
  %v3525 = vld [vmem:[%s3524] sm:$0xf]
  %v3526 = vld [vmem:[%s3524 + $0x4] sm:$0xf]
  %v3527 = vld [vmem:[%s3524 + $0x8] sm:$0xf]
  %v3528 = vld [vmem:[%s3524 + $0xc] sm:$0xf]
  %v3529 = vld [vmem:[%s3524 + $0x10] sm:$0xf]
  %v3530 = vld [vmem:[%s3524 + $0x14] sm:$0xf]
  %v3531 = vld [vmem:[%s3524 + $0x18] sm:$0xf]
  %v3532 = vld [vmem:[%s3524 + $0x1c] sm:$0xf]
  %v3533 = vld [vmem:[%s3524 + $0x20] sm:$0xf]
  %v3534 = vld [vmem:[%s3524 + $0x24] sm:$0xf]
  %v3535 = vld [vmem:[%s3524 + $0x28] sm:$0xf]
  %v3536 = vld [vmem:[%s3524 + $0x2c] sm:$0xf]
  %v3537 = vld [vmem:[%s3524 + $0x30] sm:$0xf]
  %v3538 = vld [vmem:[%s3524 + $0x34] sm:$0xf]
  %v3539 = vld [vmem:[%s3524 + $0x38] sm:$0xf]
  %v3540 = vld [vmem:[%s3524 + $0x3c] sm:$0xf]
  %v3541 = vld [vmem:[%s3524 + $0x40] sm:$0xf]
  %v3542 = vld [vmem:[%s3524 + $0x44] sm:$0xf]
  %v3543 = vld [vmem:[%s3524 + $0x48] sm:$0xf]
  %v3544 = vld [vmem:[%s3524 + $0x4c] sm:$0xf]
  %v3545 = vld [vmem:[%s3524 + $0x50] sm:$0xf]
  %v3546 = vld [vmem:[%s3524 + $0x54] sm:$0xf]
  %v3547 = vld [vmem:[%s3524 + $0x58] sm:$0xf]
  %v3548 = vld [vmem:[%s3524 + $0x5c] sm:$0xf]
  %v3549 = vld [vmem:[%s3524 + $0x60] sm:$0xf]
  %v3550 = vld [vmem:[%s3524 + $0x64] sm:$0xf]
  %v3551 = vld [vmem:[%s3524 + $0x68] sm:$0xf]
  %v3552 = vld [vmem:[%s3524 + $0x6c] sm:$0xf]
  %v3553 = vld [vmem:[%s3524 + $0x70] sm:$0xf]
  %v3554 = vld [vmem:[%s3524 + $0x74] sm:$0xf]
  %v3555 = vld [vmem:[%s3524 + $0x78] sm:$0xf]
  %v3556 = vld [vmem:[%s3524 + $0x7c] sm:$0xf]
  %v3589 = vunpack.c.l.b16 %v3525
  %v3590 = vunpack.c.l.b16 %v3526
  %v3591 = vunpack.c.l.b16 %v3527
  %v3592 = vunpack.c.l.b16 %v3528
  %v3593 = vunpack.c.l.b16 %v3529
  %v3594 = vunpack.c.l.b16 %v3530
  %v3595 = vunpack.c.l.b16 %v3531
  %v3596 = vunpack.c.l.b16 %v3532
  %v3597 = vunpack.c.l.b16 %v3533
  %v3598 = vunpack.c.l.b16 %v3534
  %v3599 = vunpack.c.l.b16 %v3535
  %v3600 = vunpack.c.l.b16 %v3536
  %v3601 = vunpack.c.l.b16 %v3537
  %v3602 = vunpack.c.l.b16 %v3538
  %v3603 = vunpack.c.l.b16 %v3539
  %v3604 = vunpack.c.l.b16 %v3540
  %v3605 = vunpack.c.l.b16 %v3541
  %v3606 = vunpack.c.l.b16 %v3542
  %v3607 = vunpack.c.l.b16 %v3543
  %v3608 = vunpack.c.l.b16 %v3544
  %v3609 = vunpack.c.l.b16 %v3545
  %v3610 = vunpack.c.l.b16 %v3546
  %v3611 = vunpack.c.l.b16 %v3547
  %v3612 = vunpack.c.l.b16 %v3548
  %v3613 = vunpack.c.l.b16 %v3549
  %v3614 = vunpack.c.l.b16 %v3550
  %v3615 = vunpack.c.l.b16 %v3551
  %v3616 = vunpack.c.l.b16 %v3552
  %v3617 = vunpack.c.l.b16 %v3553
  %v3618 = vunpack.c.l.b16 %v3554
  %v3619 = vunpack.c.l.b16 %v3555
  %v3620 = vunpack.c.l.b16 %v3556
  %v3621 = vpack.c.b16 %v3590, %v3589
  %v3622 = vpack.c.b16 %v3592, %v3591
  %v3623 = vpack.c.b16 %v3594, %v3593
  %v3624 = vpack.c.b16 %v3596, %v3595
  %v3625 = vpack.c.b16 %v3598, %v3597
  %v3626 = vpack.c.b16 %v3600, %v3599
  %v3627 = vpack.c.b16 %v3602, %v3601
  %v3628 = vpack.c.b16 %v3604, %v3603
  %v3629 = vpack.c.b16 %v3606, %v3605
  %v3630 = vpack.c.b16 %v3608, %v3607
  %v3631 = vpack.c.b16 %v3610, %v3609
  %v3632 = vpack.c.b16 %v3612, %v3611
  %v3633 = vpack.c.b16 %v3614, %v3613
  %v3634 = vpack.c.b16 %v3616, %v3615
  %v3635 = vpack.c.b16 %v3618, %v3617
  %v3636 = vpack.c.b16 %v3620, %v3619
  %3653 = vmatprep.subr.bf16.mxu0 0
  %3654 = vmatpush1.bf16.msra.mxu0 %v3628
  %3655 = vmatprep.subr.bf16.mxu0 0
  %3656 = vmatpush1.bf16.msra.mxu0 %v3627
  %3657 = vmatprep.subr.bf16.mxu0 0
  %3658 = vmatpush1.bf16.msra.mxu0 %v3626
  %3659 = vmatprep.subr.bf16.mxu0 0
  %3660 = vmatpush1.bf16.msra.mxu0 %v3625
  %3661 = vmatprep.subr.bf16.mxu0 0
  %3662 = vmatpush1.bf16.msra.mxu0 %v3624
  %3663 = vmatprep.subr.bf16.mxu0 0
  %3664 = vmatpush1.bf16.msra.mxu0 %v3623
  %3665 = vmatprep.subr.bf16.mxu0 0
  %3666 = vmatpush1.bf16.msra.mxu0 %v3622
  %3667 = vmatprep.subr.bf16.mxu0 0
  %3668 = vmatpush1.bf16.msra.mxu0 %v3621
  %3669 = vmatprep.subr.bf16.mxu0 0
  %3670 = vmatpush2.bf16.msra.mxu0 %v3636
  %3671 = vmatprep.subr.bf16.mxu0 0
  %3672 = vmatpush2.bf16.msra.mxu0 %v3635
  %3673 = vmatprep.subr.bf16.mxu0 0
  %3674 = vmatpush2.bf16.msra.mxu0 %v3634
  %3675 = vmatprep.subr.bf16.mxu0 0
  %3676 = vmatpush2.bf16.msra.mxu0 %v3633
  %3677 = vmatprep.subr.bf16.mxu0 0
  %3678 = vmatpush2.bf16.msra.mxu0 %v3632
  %3679 = vmatprep.subr.bf16.mxu0 0
  %3680 = vmatpush2.bf16.msra.mxu0 %v3631
  %3681 = vmatprep.subr.bf16.mxu0 0
  %3682 = vmatpush2.bf16.msra.mxu0 %v3630
  %3683 = vmatprep.subr.bf16.mxu0 0
  %3684 = vmatpush2.bf16.msra.mxu0 %v3629
  %3685 = vmatprep.mubr.bf16.mxu0 %v1464
  %3686 = vmatmul.mubr.bf16.gmra.mxu0 %v1463
  %v3687 = vpop.f32.mrf.mxu0
  %v3688 = vadd.f32 0.0, %v3687
  %v3689 = vpop.f32.mrf.mxu0
  %v3690 = vpop.f32.mrf.mxu0
  %v3691 = vadd.f32 0.0, %v3690
  %v3692 = vpop.f32.mrf.mxu0
  %3693 = vdwg.mxu0
  %v3694 = vadd.f32 %v3522, %v3688
  %v3695 = vadd.f32 %v3523, %v3691
  %v3696 = vld [vmem:[%s4] sm:$0x1]
  %v3698 = vlaneseq
  %v3699 = vshrl.u32 %v3698, 7
  %v3700 = vsub.s32 0, %v3699
  %v3701 = vrot.slane %v3696, %v3700
  %v3703 = vadd.f32 %v3694, %v3701
  %v3704 = vadd.f32 %v3695, %v3701
  %v3705 = vmax.f32 %v3703, 0.0
  %v3706 = vmax.f32 %v3704, 0.0
  %v3707 = vpack.c.bf16 %v3706, %v3705
  %v3708 = vld [vmem:[%s5] sm:$0xf]
  %v3709 = vld [vmem:[%s5 + $0x4] sm:$0xf]
  %v3710 = vld [vmem:[%s5 + $0x8] sm:$0xf]
  %v3711 = vld [vmem:[%s5 + $0xc] sm:$0xf]
  %v3712 = vld [vmem:[%s5 + $0x10] sm:$0xf]
  %v3713 = vld [vmem:[%s5 + $0x14] sm:$0xf]
  %v3714 = vld [vmem:[%s5 + $0x18] sm:$0xf]
  %v3715 = vld [vmem:[%s5 + $0x1c] sm:$0xf]
  %v3716 = vld [vmem:[%s6] sm:$0x1]
  %v3718 = vlaneseq
  %v3719 = vshrl.u32 %v3718, 7
  %v3720 = vsub.s32 0, %v3719
  %v3721 = vrot.slane %v3716, %v3720
  %v3731 = vunpack.c.l.b16 %v3708
  %v3732 = vunpack.c.l.b16 %v3709
  %v3733 = vunpack.c.l.b16 %v3710
  %v3734 = vunpack.c.l.b16 %v3711
  %v3735 = vunpack.c.l.b16 %v3712
  %v3736 = vunpack.c.l.b16 %v3713
  %v3737 = vunpack.c.l.b16 %v3714
  %v3738 = vunpack.c.l.b16 %v3715
  %v3739 = vpack.c.b16 %v3732, %v3731
  %v3740 = vpack.c.b16 %v3734, %v3733
  %v3741 = vpack.c.b16 %v3736, %v3735
  %v3742 = vpack.c.b16 %v3738, %v3737
  %vm3747 = vcmask 523264
  %v3749 = vsel %vm3747, %v3707, 0
  %3751 = vmatprep.subr.bf16.mxu0 0
  %3752 = vmatpush1.bf16.msra.mxu0 0
  %3753 = vmatprep.subr.bf16.mxu0 0
  %3754 = vmatpush1.bf16.msra.mxu0 0
  %3755 = vmatprep.subr.bf16.mxu0 0
  %3756 = vmatpush1.bf16.msra.mxu0 0
  %3757 = vmatprep.subr.bf16.mxu0 0
  %3758 = vmatpush1.bf16.msra.mxu0 0
  %3759 = vmatprep.subr.bf16.mxu0 0
  %3760 = vmatpush1.bf16.msra.mxu0 %v3742
  %3761 = vmatprep.subr.bf16.mxu0 0
  %3762 = vmatpush1.bf16.msra.mxu0 %v3741
  %3763 = vmatprep.subr.bf16.mxu0 0
  %3764 = vmatpush1.bf16.msra.mxu0 %v3740
  %3765 = vmatprep.subr.bf16.mxu0 0
  %3766 = vmatpush1.bf16.msra.mxu0 %v3739
  %3767 = vmatprep.subr.bf16.mxu0 0
  %3768 = vmatpush2.bf16.msra.mxu0 0
  %3769 = vmatprep.subr.bf16.mxu0 0
  %3770 = vmatpush2.bf16.msra.mxu0 0
  %3771 = vmatprep.subr.bf16.mxu0 0
  %3772 = vmatpush2.bf16.msra.mxu0 0
  %3773 = vmatprep.subr.bf16.mxu0 0
  %3774 = vmatpush2.bf16.msra.mxu0 0
  %3775 = vmatprep.subr.bf16.mxu0 0
  %3776 = vmatpush2.bf16.msra.mxu0 0
  %3777 = vmatprep.subr.bf16.mxu0 0
  %3778 = vmatpush2.bf16.msra.mxu0 0
  %3779 = vmatprep.subr.bf16.mxu0 0
  %3780 = vmatpush2.bf16.msra.mxu0 0
  %3781 = vmatprep.subr.bf16.mxu0 0
  %3782 = vmatpush2.bf16.msra.mxu0 0
  %3783 = vmatprep.mubr.bf16.mxu0 0
  %3784 = vmatmul.mubr.bf16.gmra.mxu0 %v3749
  %v3785 = vpop.f32.mrf.mxu0
  %v3786 = vadd.f32 %v3721, %v3785
  %v3787 = vpop.f32.mrf.mxu0
  %v3788 = vpop.f32.mrf.mxu0
  %v3789 = vadd.f32 %v3721, %v3788
  %v3790 = vpop.f32.mrf.mxu0
  %3791 = vdwg.mxu0
  %3792 = vst [vmem:[%s7] sm:$0xff] %v3786
  %3793 = vst [vmem:[%s7 + $0x8] sm:$0xff] %v3789
  // Predicated region
  $region30: #{cnn_forward.1} parent=0 // pred_check
    _
  $region31: #{cnn_forward.1} parent=0 // pred_check_branch
    %3795 = sbr.rel (0) target = $region33
  $region32: #{cnn_forward.1} parent=0 // pred_region
    _
  $region33: #{cnn_forward.1} parent=0 // pred_fallthru
    _
  // Predicated region
  $region34: #{cnn_forward.1} parent=0 // pred_check
    _
  $region35: #{cnn_forward.1} parent=0 // pred_check_branch
    %3797 = sbr.rel (0) target = $region37
  $region36: #{cnn_forward.1} parent=0 // pred_region
    _
  $region37: #{cnn_forward.1} parent=0 // pred_fallthru
    _

</llo_original>
